<compile_context>
chip_gen: v5e
topology: v5e:2x2
jax: 0.10.0
libtpu: 0.0.40
codegen_flags: <defaults>
</compile_context>

<pallas_src>
import jax
import jax.numpy as jnp
import numpy as np
from jax.experimental import pallas as pl
from jax.experimental.pallas import tpu as pltpu

C = 9  # per-vertex feature width fixed by the module (GCNConv(9, 9))


# ------------------------------------------------------------------ kernel ---

def _encoder_kernel(x_ref, a_ref, wt_ref, b_ref, wh_ref, bh_ref, o_ref):
    """Fused forward for one block of Bt batch elements.

    x_ref : (1, C*Bt, N)  channel-outer activation slab, row = c*Bt + b_local
    a_ref : (N, N)        symmetric normalized adjacency (grid-invariant)
    wt_ref: (3*C*C,)      SMEM scalars, wt[l*81 + c*9 + k] = W_l[k, c]
    b_ref : (3*C,)        SMEM scalars, b[l*9 + c] = bias_l[c]
    wh_ref: (C, N, F2p)   fused, lane-padded mu||logvar head weight
    bh_ref: (1, F2p)      fused, lane-padded head bias
    o_ref : (1, Bt, F2p)  fused (mu, logvar) output slab for this batch block
    """
    bt = o_ref.shape[1]
    a = a_ref[...]                                            # (N, N)
    x0 = x_ref[0]                                             # (C*Bt, N)
    hs = [x0[c * bt:(c + 1) * bt, :] for c in range(C)]       # C x (Bt, N)

    # Three (GCNConv -> InstanceNorm1d(9) -> relu) layers.
    for l in range(3):
        # 9x9 channel mix on the VPU (scalar-broadcast FMAs, weights in SMEM):
        #   g[c] = sum_k W_l[k, c] * h[k]
        gs = []
        base = l * C * C
        for c in range(C):
            acc = wt_ref[base + c * C] * hs[0]
            for k in range(1, C):
                acc = acc + wt_ref[base + c * C + k] * hs[k]
            gs.append(acc)

        # Big lane-dense MXU dot against A_norm for the whole batch block:
        #   (C*Bt, N) @ (N, N)   (A symmetric, so no transpose needed).
        slab = jnp.concatenate(gs, axis=0)                    # (C*Bt, N)
        slab = jnp.dot(slab, a, preferred_element_type=jnp.float32)

        # Bias (SMEM scalar per output channel), then InstanceNorm over the 9
        # channels per (batch, vertex) + relu, all on per-channel (Bt, N) tiles.
        hs = [slab[c * bt:(c + 1) * bt, :] + b_ref[l * C + c] for c in range(C)]
        s = hs[0]
        for c in range(1, C):
            s = s + hs[c]
        m = s * (1.0 / C)
        d = [hs[c] - m for c in range(C)]
        v = d[0] * d[0]
        for c in range(1, C):
            v = v + d[c] * d[c]
        inv = jax.lax.rsqrt(v * (1.0 / C) + 1e-5)
        hs = [jnp.maximum(d[c] * inv, 0.0) for c in range(C)]  # leaky_relu(0)

    # Fused mu||logvar head: 9 accumulating (Bt, N) @ (N, F2p) dots.
    out = jnp.dot(hs[0], wh_ref[0], preferred_element_type=jnp.float32)
    for c in range(1, C):
        out = out + jnp.dot(hs[c], wh_ref[c], preferred_element_type=jnp.float32)
    o_ref[0] = out + bh_ref[...]                               # lane-dense store


# --------------------------------------------------- one-time weight prep ---

def prepare_encoder_operands(params, num_point, feat_len):
    """Hoisted per-call relayouts: do once at weight-load time."""
    f2 = 2 * feat_len
    f2p = max(128, ((f2 + 127) // 128) * 128)                  # lane-dense pad

    # GCN channel-mix weights / biases as flat SMEM scalar tables.
    wt_flat = jnp.stack([params["w1"].T, params["w2"].T, params["w3"].T]
                        ).reshape(-1).astype(jnp.float32)       # (3*C*C,)
    b_flat = jnp.stack([params["b1"], params["b2"], params["b3"]]
                       ).reshape(-1).astype(jnp.float32)        # (3*C,)

    # Fused mu||logvar head, channel-major row order (row c, vertex n),
    # lane-padded to F2p columns.
    w_head = jnp.concatenate([params["wmu"], params["wvar"]], axis=1)  # (N*C, 2F)
    w_head = jnp.pad(w_head, ((0, 0), (0, f2p - f2)))
    w_head = w_head.reshape(num_point, C, f2p).transpose(1, 0, 2)      # (C, N, F2p)
    b_head = jnp.concatenate([params["bmu"], params["bvar"]])
    b_head = jnp.pad(b_head, (0, f2p - f2))[None, :]                   # (1, F2p)

    return {"wt": wt_flat, "b": b_flat, "wh": w_head, "bh": b_head,
            "feat_len": feat_len, "f2p": f2p}


# ----------------------------------------------------------------- wrapper ---

def part_deform_encoder_fwd(x, a_norm, prepped, *, block_b=None):
    """x: (B, N, 9) float32.  Returns (mu, logvar), each (B, feat_len)."""
    B, N, Cc = x.shape
    assert Cc == C
    F = prepped["feat_len"]
    F2p = prepped["f2p"]

    # Batch-block size: ~14 fills the 128-row MXU on v5e, ~28 the 256-row MXU
    # on v6e/v7x (9*Bt rows per A-dot).  Demo uses a small explicit value.
    Bt = block_b if block_b is not None else min(B, 28)
    nb = -(-B // Bt)
    B_pad = nb * Bt
    if B_pad != B:
        x = jnp.pad(x, ((0, B_pad - B), (0, 0), (0, 0)))

    # Channel-major, batch-block-stacked input slabs: (nb, C*Bt, N),
    # row index = c*Bt + b_local (vertices on the 128-lane axis).
    x_cm = (jnp.transpose(x, (2, 0, 1))
            .reshape(C, nb, Bt, N)
            .transpose(1, 0, 2, 3)
            .reshape(nb, C * Bt, N))

    out = pl.pallas_call(
        _encoder_kernel,
        out_shape=jax.ShapeDtypeStruct((nb, Bt, F2p), jnp.float32),
        grid=(nb,),
        in_specs=[
            pl.BlockSpec((1, C * Bt, N), lambda i: (i, 0, 0)),          # x block
            pl.BlockSpec((N, N), lambda i: (0, 0),                      # A_norm
                         pipeline_mode=pl.Buffered(1)),                 # single-buffer
            pl.BlockSpec(memory_space=pltpu.MemorySpace.SMEM),          # GCN weights (scalars)
            pl.BlockSpec(memory_space=pltpu.MemorySpace.SMEM),          # GCN biases (scalars)
            pl.BlockSpec((C, N, F2p), lambda i: (0, 0, 0),              # head weight
                         pipeline_mode=pl.Buffered(1)),
            pl.BlockSpec((1, F2p), lambda i: (0, 0),                    # head bias
                         pipeline_mode=pl.Buffered(1)),
        ],
        out_specs=pl.BlockSpec((1, Bt, F2p), lambda i: (i, 0, 0)),
        compiler_params=pltpu.CompilerParams(
            dimension_semantics=("parallel",),   # batch blocks -> v7x's 2 TCs
            # Safe on every generation at demo sizes; raise toward ~100 MiB on
            # v5e/v6e (or keep <=48 MiB on v7x) when A / head weight get large.
            vmem_limit_bytes=32 * 1024 * 1024,
        ),
    )(x_cm, a_norm, prepped["wt"], prepped["b"], prepped["wh"], prepped["bh"])

    out = out.reshape(B_pad, F2p)[:B]           # drop batch pad
    return out[:, :F], out[:, F:2 * F]          # mu, logvar (drop lane pad)


# --------------------------------------------------------------- reference ---

def _reference_fwd(x, a_norm, params):
    def layer(h, w, b):
        h = jnp.einsum("nm,bmc->bnc", a_norm, h @ w) + b
        m = jnp.mean(h, axis=-1, keepdims=True)
        v = jnp.mean(jnp.square(h - m), axis=-1, keepdims=True)
        h = (h - m) * jax.lax.rsqrt(v + 1e-5)
        return jnp.maximum(h, 0.0)

    h = layer(x, params["w1"], params["b1"])
    h = layer(h, params["w2"], params["b2"])
    h = layer(h, params["w3"], params["b3"])
    net = h.reshape(x.shape[0], -1)
    mu = net @ params["wmu"] + params["bmu"]
    lv = net @ params["wvar"] + params["bvar"]
    return mu, lv


# ------------------------------------------------------------------- setup ---

def ring_norm_adjacency(n):
    """Symmetric-normalized adjacency (with self loops) of a ring graph."""
    a = np.zeros((n, n), np.float32)
    for i in range(n):
        a[i, (i + 1) % n] = 1.0
        a[(i + 1) % n, i] = 1.0
    a += np.eye(n, dtype=np.float32)
    dinv = 1.0 / np.sqrt(a.sum(1))
    return jnp.asarray(dinv[:, None] * a * dinv[None, :], dtype=jnp.float32)


def init_params(key, num_point, feat_len):
    ks = jax.random.split(key, 10)
    f32 = jnp.float32
    hidden = num_point * C
    return {
        "w1": jax.random.normal(ks[0], (C, C), f32) / np.sqrt(C),
        "b1": jax.random.normal(ks[1], (C,), f32) * 0.05,
        "w2": jax.random.normal(ks[2], (C, C), f32) / np.sqrt(C),
        "b2": jax.random.normal(ks[3], (C,), f32) * 0.05,
        "w3": jax.random.normal(ks[4], (C, C), f32) / np.sqrt(C),
        "b3": jax.random.normal(ks[5], (C,), f32) * 0.05,
        "wmu": jax.random.normal(ks[6], (hidden, feat_len), f32) / np.sqrt(hidden),
        "bmu": jax.random.normal(ks[7], (feat_len,), f32) * 0.05,
        "wvar": jax.random.normal(ks[8], (hidden, feat_len), f32) / np.sqrt(hidden),
        "bvar": jax.random.normal(ks[9], (feat_len,), f32) * 0.05,
    }


if __name__ == "__main__":
    B, N, FEAT = 4, 16, 32          # batch, num_point, feat_len (small demo)
    BT = 2                          # batch-block size -> grid=(2,) here
    key = jax.random.PRNGKey(0)
    kx, kp = jax.random.split(key)

    x = jax.random.normal(kx, (B, N, C), jnp.float32)
    a_norm = ring_norm_adjacency(N)
    params = init_params(kp, N, FEAT)
    prepped = prepare_encoder_operands(params, N, FEAT)

    mu, logvar = part_deform_encoder_fwd(x, a_norm, prepped, block_b=BT)
    jax.block_until_ready((mu, logvar))

    mu_ref, lv_ref = _reference_fwd(x, a_norm, params)
    np.testing.assert_allclose(np.asarray(mu), np.asarray(mu_ref),
                               rtol=2e-2, atol=2e-2)
    np.testing.assert_allclose(np.asarray(logvar), np.asarray(lv_ref),
                               rtol=2e-2, atol=2e-2)
    assert mu.shape == (B, FEAT) and logvar.shape == (B, FEAT)
    print("KERNEL_OK")
</pallas_src>

<mosaic_0001>
module attributes {stable_mosaic.version = 11 : i64} {
  func.func @_encoder_kernel(%arg0: i32, %arg1: memref<1x18x16xf32, #tpu.memory_space<vmem>>, %arg2: memref<16x16xf32, #tpu.memory_space<vmem>>, %arg3: memref<243xf32, #tpu.memory_space<smem>>, %arg4: memref<27xf32, #tpu.memory_space<smem>>, %arg5: memref<9x16x128xf32, #tpu.memory_space<vmem>>, %arg6: memref<1x128xf32, #tpu.memory_space<vmem>>, %arg7: memref<1x2x128xf32, #tpu.memory_space<vmem>>) attributes {dimension_semantics = [#tpu.dimension_semantics<parallel>], iteration_bounds = array<i64: 2>, scalar_prefetch = 0 : i64, scratch_operands = 0 : i64, tpu.core_type = #tpu.core_type<tc>, window_params = [{transform_indices = @transform_0, window_bounds = array<i64: 1, 18, 16>}, {pipeline_mode = #tpu.pipeline_mode<synchronous>, transform_indices = @transform_1, window_bounds = array<i64: 16, 16>}, {transform_indices = @transform_2, window_bounds = array<i64: 243>}, {transform_indices = @transform_3, window_bounds = array<i64: 27>}, {pipeline_mode = #tpu.pipeline_mode<synchronous>, transform_indices = @transform_4, window_bounds = array<i64: 9, 16, 128>}, {pipeline_mode = #tpu.pipeline_mode<synchronous>, transform_indices = @transform_5, window_bounds = array<i64: 1, 128>}, {transform_indices = @transform_6, window_bounds = array<i64: 1, 2, 128>}]} {
    %c0 = arith.constant 0 : index
    %c0_0 = arith.constant 0 : index
    %0 = vector.load %arg2[%c0, %c0_0] : memref<16x16xf32, #tpu.memory_space<vmem>>, vector<16x16xf32>
    %c0_1 = arith.constant 0 : index
    %c0_2 = arith.constant 0 : index
    %c0_3 = arith.constant 0 : index
    %1 = vector.load %arg1[%c0_1, %c0_2, %c0_3] : memref<1x18x16xf32, #tpu.memory_space<vmem>>, vector<1x18x16xf32>
    %2 = vector.shape_cast %1 : vector<1x18x16xf32> to vector<18x16xf32>
    %3 = vector.extract_strided_slice %2 {offsets = [0, 0], sizes = [2, 16], strides = [1, 1]} : vector<18x16xf32> to vector<2x16xf32>
    %4 = vector.extract_strided_slice %2 {offsets = [2, 0], sizes = [2, 16], strides = [1, 1]} : vector<18x16xf32> to vector<2x16xf32>
    %5 = vector.extract_strided_slice %2 {offsets = [4, 0], sizes = [2, 16], strides = [1, 1]} : vector<18x16xf32> to vector<2x16xf32>
    %6 = vector.extract_strided_slice %2 {offsets = [6, 0], sizes = [2, 16], strides = [1, 1]} : vector<18x16xf32> to vector<2x16xf32>
    %7 = vector.extract_strided_slice %2 {offsets = [8, 0], sizes = [2, 16], strides = [1, 1]} : vector<18x16xf32> to vector<2x16xf32>
    %8 = vector.extract_strided_slice %2 {offsets = [10, 0], sizes = [2, 16], strides = [1, 1]} : vector<18x16xf32> to vector<2x16xf32>
    %9 = vector.extract_strided_slice %2 {offsets = [12, 0], sizes = [2, 16], strides = [1, 1]} : vector<18x16xf32> to vector<2x16xf32>
    %10 = vector.extract_strided_slice %2 {offsets = [14, 0], sizes = [2, 16], strides = [1, 1]} : vector<18x16xf32> to vector<2x16xf32>
    %11 = vector.extract_strided_slice %2 {offsets = [16, 0], sizes = [2, 16], strides = [1, 1]} : vector<18x16xf32> to vector<2x16xf32>
    %c0_4 = arith.constant 0 : index
    %12 = memref.load %arg3[%c0_4] : memref<243xf32, #tpu.memory_space<smem>>
    %13 = vector.broadcast %12 : f32 to vector<2x16xf32>
    %14 = arith.mulf %13, %3 : vector<2x16xf32>
    %c1 = arith.constant 1 : index
    %15 = memref.load %arg3[%c1] : memref<243xf32, #tpu.memory_space<smem>>
    %16 = vector.broadcast %15 : f32 to vector<2x16xf32>
    %17 = arith.mulf %16, %4 : vector<2x16xf32>
    %18 = arith.addf %14, %17 : vector<2x16xf32>
    %c2 = arith.constant 2 : index
    %19 = memref.load %arg3[%c2] : memref<243xf32, #tpu.memory_space<smem>>
    %20 = vector.broadcast %19 : f32 to vector<2x16xf32>
    %21 = arith.mulf %20, %5 : vector<2x16xf32>
    %22 = arith.addf %18, %21 : vector<2x16xf32>
    %c3 = arith.constant 3 : index
    %23 = memref.load %arg3[%c3] : memref<243xf32, #tpu.memory_space<smem>>
    %24 = vector.broadcast %23 : f32 to vector<2x16xf32>
    %25 = arith.mulf %24, %6 : vector<2x16xf32>
    %26 = arith.addf %22, %25 : vector<2x16xf32>
    %c4 = arith.constant 4 : index
    %27 = memref.load %arg3[%c4] : memref<243xf32, #tpu.memory_space<smem>>
    %28 = vector.broadcast %27 : f32 to vector<2x16xf32>
    %29 = arith.mulf %28, %7 : vector<2x16xf32>
    %30 = arith.addf %26, %29 : vector<2x16xf32>
    %c5 = arith.constant 5 : index
    %31 = memref.load %arg3[%c5] : memref<243xf32, #tpu.memory_space<smem>>
    %32 = vector.broadcast %31 : f32 to vector<2x16xf32>
    %33 = arith.mulf %32, %8 : vector<2x16xf32>
    %34 = arith.addf %30, %33 : vector<2x16xf32>
    %c6 = arith.constant 6 : index
    %35 = memref.load %arg3[%c6] : memref<243xf32, #tpu.memory_space<smem>>
    %36 = vector.broadcast %35 : f32 to vector<2x16xf32>
    %37 = arith.mulf %36, %9 : vector<2x16xf32>
    %38 = arith.addf %34, %37 : vector<2x16xf32>
    %c7 = arith.constant 7 : index
    %39 = memref.load %arg3[%c7] : memref<243xf32, #tpu.memory_space<smem>>
    %40 = vector.broadcast %39 : f32 to vector<2x16xf32>
    %41 = arith.mulf %40, %10 : vector<2x16xf32>
    %42 = arith.addf %38, %41 : vector<2x16xf32>
    %c8 = arith.constant 8 : index
    %43 = memref.load %arg3[%c8] : memref<243xf32, #tpu.memory_space<smem>>
    %44 = vector.broadcast %43 : f32 to vector<2x16xf32>
    %45 = arith.mulf %44, %11 : vector<2x16xf32>
    %46 = arith.addf %42, %45 : vector<2x16xf32>
    %c9 = arith.constant 9 : index
    %47 = memref.load %arg3[%c9] : memref<243xf32, #tpu.memory_space<smem>>
    %48 = vector.broadcast %47 : f32 to vector<2x16xf32>
    %49 = arith.mulf %48, %3 : vector<2x16xf32>
    %c10 = arith.constant 10 : index
    %50 = memref.load %arg3[%c10] : memref<243xf32, #tpu.memory_space<smem>>
    %51 = vector.broadcast %50 : f32 to vector<2x16xf32>
    %52 = arith.mulf %51, %4 : vector<2x16xf32>
    %53 = arith.addf %49, %52 : vector<2x16xf32>
    %c11 = arith.constant 11 : index
    %54 = memref.load %arg3[%c11] : memref<243xf32, #tpu.memory_space<smem>>
    %55 = vector.broadcast %54 : f32 to vector<2x16xf32>
    %56 = arith.mulf %55, %5 : vector<2x16xf32>
    %57 = arith.addf %53, %56 : vector<2x16xf32>
    %c12 = arith.constant 12 : index
    %58 = memref.load %arg3[%c12] : memref<243xf32, #tpu.memory_space<smem>>
    %59 = vector.broadcast %58 : f32 to vector<2x16xf32>
    %60 = arith.mulf %59, %6 : vector<2x16xf32>
    %61 = arith.addf %57, %60 : vector<2x16xf32>
    %c13 = arith.constant 13 : index
    %62 = memref.load %arg3[%c13] : memref<243xf32, #tpu.memory_space<smem>>
    %63 = vector.broadcast %62 : f32 to vector<2x16xf32>
    %64 = arith.mulf %63, %7 : vector<2x16xf32>
    %65 = arith.addf %61, %64 : vector<2x16xf32>
    %c14 = arith.constant 14 : index
    %66 = memref.load %arg3[%c14] : memref<243xf32, #tpu.memory_space<smem>>
    %67 = vector.broadcast %66 : f32 to vector<2x16xf32>
    %68 = arith.mulf %67, %8 : vector<2x16xf32>
    %69 = arith.addf %65, %68 : vector<2x16xf32>
    %c15 = arith.constant 15 : index
    %70 = memref.load %arg3[%c15] : memref<243xf32, #tpu.memory_space<smem>>
    %71 = vector.broadcast %70 : f32 to vector<2x16xf32>
    %72 = arith.mulf %71, %9 : vector<2x16xf32>
    %73 = arith.addf %69, %72 : vector<2x16xf32>
    %c16 = arith.constant 16 : index
    %74 = memref.load %arg3[%c16] : memref<243xf32, #tpu.memory_space<smem>>
    %75 = vector.broadcast %74 : f32 to vector<2x16xf32>
    %76 = arith.mulf %75, %10 : vector<2x16xf32>
    %77 = arith.addf %73, %76 : vector<2x16xf32>
    %c17 = arith.constant 17 : index
    %78 = memref.load %arg3[%c17] : memref<243xf32, #tpu.memory_space<smem>>
    %79 = vector.broadcast %78 : f32 to vector<2x16xf32>
    %80 = arith.mulf %79, %11 : vector<2x16xf32>
    %81 = arith.addf %77, %80 : vector<2x16xf32>
    %c18 = arith.constant 18 : index
    %82 = memref.load %arg3[%c18] : memref<243xf32, #tpu.memory_space<smem>>
    %83 = vector.broadcast %82 : f32 to vector<2x16xf32>
    %84 = arith.mulf %83, %3 : vector<2x16xf32>
    %c19 = arith.constant 19 : index
    %85 = memref.load %arg3[%c19] : memref<243xf32, #tpu.memory_space<smem>>
    %86 = vector.broadcast %85 : f32 to vector<2x16xf32>
    %87 = arith.mulf %86, %4 : vector<2x16xf32>
    %88 = arith.addf %84, %87 : vector<2x16xf32>
    %c20 = arith.constant 20 : index
    %89 = memref.load %arg3[%c20] : memref<243xf32, #tpu.memory_space<smem>>
    %90 = vector.broadcast %89 : f32 to vector<2x16xf32>
    %91 = arith.mulf %90, %5 : vector<2x16xf32>
    %92 = arith.addf %88, %91 : vector<2x16xf32>
    %c21 = arith.constant 21 : index
    %93 = memref.load %arg3[%c21] : memref<243xf32, #tpu.memory_space<smem>>
    %94 = vector.broadcast %93 : f32 to vector<2x16xf32>
    %95 = arith.mulf %94, %6 : vector<2x16xf32>
    %96 = arith.addf %92, %95 : vector<2x16xf32>
    %c22 = arith.constant 22 : index
    %97 = memref.load %arg3[%c22] : memref<243xf32, #tpu.memory_space<smem>>
    %98 = vector.broadcast %97 : f32 to vector<2x16xf32>
    %99 = arith.mulf %98, %7 : vector<2x16xf32>
    %100 = arith.addf %96, %99 : vector<2x16xf32>
    %c23 = arith.constant 23 : index
    %101 = memref.load %arg3[%c23] : memref<243xf32, #tpu.memory_space<smem>>
    %102 = vector.broadcast %101 : f32 to vector<2x16xf32>
    %103 = arith.mulf %102, %8 : vector<2x16xf32>
    %104 = arith.addf %100, %103 : vector<2x16xf32>
    %c24 = arith.constant 24 : index
    %105 = memref.load %arg3[%c24] : memref<243xf32, #tpu.memory_space<smem>>
    %106 = vector.broadcast %105 : f32 to vector<2x16xf32>
    %107 = arith.mulf %106, %9 : vector<2x16xf32>
    %108 = arith.addf %104, %107 : vector<2x16xf32>
    %c25 = arith.constant 25 : index
    %109 = memref.load %arg3[%c25] : memref<243xf32, #tpu.memory_space<smem>>
    %110 = vector.broadcast %109 : f32 to vector<2x16xf32>
    %111 = arith.mulf %110, %10 : vector<2x16xf32>
    %112 = arith.addf %108, %111 : vector<2x16xf32>
    %c26 = arith.constant 26 : index
    %113 = memref.load %arg3[%c26] : memref<243xf32, #tpu.memory_space<smem>>
    %114 = vector.broadcast %113 : f32 to vector<2x16xf32>
    %115 = arith.mulf %114, %11 : vector<2x16xf32>
    %116 = arith.addf %112, %115 : vector<2x16xf32>
    %c27 = arith.constant 27 : index
    %117 = memref.load %arg3[%c27] : memref<243xf32, #tpu.memory_space<smem>>
    %118 = vector.broadcast %117 : f32 to vector<2x16xf32>
    %119 = arith.mulf %118, %3 : vector<2x16xf32>
    %c28 = arith.constant 28 : index
    %120 = memref.load %arg3[%c28] : memref<243xf32, #tpu.memory_space<smem>>
    %121 = vector.broadcast %120 : f32 to vector<2x16xf32>
    %122 = arith.mulf %121, %4 : vector<2x16xf32>
    %123 = arith.addf %119, %122 : vector<2x16xf32>
    %c29 = arith.constant 29 : index
    %124 = memref.load %arg3[%c29] : memref<243xf32, #tpu.memory_space<smem>>
    %125 = vector.broadcast %124 : f32 to vector<2x16xf32>
    %126 = arith.mulf %125, %5 : vector<2x16xf32>
    %127 = arith.addf %123, %126 : vector<2x16xf32>
    %c30 = arith.constant 30 : index
    %128 = memref.load %arg3[%c30] : memref<243xf32, #tpu.memory_space<smem>>
    %129 = vector.broadcast %128 : f32 to vector<2x16xf32>
    %130 = arith.mulf %129, %6 : vector<2x16xf32>
    %131 = arith.addf %127, %130 : vector<2x16xf32>
    %c31 = arith.constant 31 : index
    %132 = memref.load %arg3[%c31] : memref<243xf32, #tpu.memory_space<smem>>
    %133 = vector.broadcast %132 : f32 to vector<2x16xf32>
    %134 = arith.mulf %133, %7 : vector<2x16xf32>
    %135 = arith.addf %131, %134 : vector<2x16xf32>
    %c32 = arith.constant 32 : index
    %136 = memref.load %arg3[%c32] : memref<243xf32, #tpu.memory_space<smem>>
    %137 = vector.broadcast %136 : f32 to vector<2x16xf32>
    %138 = arith.mulf %137, %8 : vector<2x16xf32>
    %139 = arith.addf %135, %138 : vector<2x16xf32>
    %c33 = arith.constant 33 : index
    %140 = memref.load %arg3[%c33] : memref<243xf32, #tpu.memory_space<smem>>
    %141 = vector.broadcast %140 : f32 to vector<2x16xf32>
    %142 = arith.mulf %141, %9 : vector<2x16xf32>
    %143 = arith.addf %139, %142 : vector<2x16xf32>
    %c34 = arith.constant 34 : index
    %144 = memref.load %arg3[%c34] : memref<243xf32, #tpu.memory_space<smem>>
    %145 = vector.broadcast %144 : f32 to vector<2x16xf32>
    %146 = arith.mulf %145, %10 : vector<2x16xf32>
    %147 = arith.addf %143, %146 : vector<2x16xf32>
    %c35 = arith.constant 35 : index
    %148 = memref.load %arg3[%c35] : memref<243xf32, #tpu.memory_space<smem>>
    %149 = vector.broadcast %148 : f32 to vector<2x16xf32>
    %150 = arith.mulf %149, %11 : vector<2x16xf32>
    %151 = arith.addf %147, %150 : vector<2x16xf32>
    %c36 = arith.constant 36 : index
    %152 = memref.load %arg3[%c36] : memref<243xf32, #tpu.memory_space<smem>>
    %153 = vector.broadcast %152 : f32 to vector<2x16xf32>
    %154 = arith.mulf %153, %3 : vector<2x16xf32>
    %c37 = arith.constant 37 : index
    %155 = memref.load %arg3[%c37] : memref<243xf32, #tpu.memory_space<smem>>
    %156 = vector.broadcast %155 : f32 to vector<2x16xf32>
    %157 = arith.mulf %156, %4 : vector<2x16xf32>
    %158 = arith.addf %154, %157 : vector<2x16xf32>
    %c38 = arith.constant 38 : index
    %159 = memref.load %arg3[%c38] : memref<243xf32, #tpu.memory_space<smem>>
    %160 = vector.broadcast %159 : f32 to vector<2x16xf32>
    %161 = arith.mulf %160, %5 : vector<2x16xf32>
    %162 = arith.addf %158, %161 : vector<2x16xf32>
    %c39 = arith.constant 39 : index
    %163 = memref.load %arg3[%c39] : memref<243xf32, #tpu.memory_space<smem>>
    %164 = vector.broadcast %163 : f32 to vector<2x16xf32>
    %165 = arith.mulf %164, %6 : vector<2x16xf32>
    %166 = arith.addf %162, %165 : vector<2x16xf32>
    %c40 = arith.constant 40 : index
    %167 = memref.load %arg3[%c40] : memref<243xf32, #tpu.memory_space<smem>>
    %168 = vector.broadcast %167 : f32 to vector<2x16xf32>
    %169 = arith.mulf %168, %7 : vector<2x16xf32>
    %170 = arith.addf %166, %169 : vector<2x16xf32>
    %c41 = arith.constant 41 : index
    %171 = memref.load %arg3[%c41] : memref<243xf32, #tpu.memory_space<smem>>
    %172 = vector.broadcast %171 : f32 to vector<2x16xf32>
    %173 = arith.mulf %172, %8 : vector<2x16xf32>
    %174 = arith.addf %170, %173 : vector<2x16xf32>
    %c42 = arith.constant 42 : index
    %175 = memref.load %arg3[%c42] : memref<243xf32, #tpu.memory_space<smem>>
    %176 = vector.broadcast %175 : f32 to vector<2x16xf32>
    %177 = arith.mulf %176, %9 : vector<2x16xf32>
    %178 = arith.addf %174, %177 : vector<2x16xf32>
    %c43 = arith.constant 43 : index
    %179 = memref.load %arg3[%c43] : memref<243xf32, #tpu.memory_space<smem>>
    %180 = vector.broadcast %179 : f32 to vector<2x16xf32>
    %181 = arith.mulf %180, %10 : vector<2x16xf32>
    %182 = arith.addf %178, %181 : vector<2x16xf32>
    %c44 = arith.constant 44 : index
    %183 = memref.load %arg3[%c44] : memref<243xf32, #tpu.memory_space<smem>>
    %184 = vector.broadcast %183 : f32 to vector<2x16xf32>
    %185 = arith.mulf %184, %11 : vector<2x16xf32>
    %186 = arith.addf %182, %185 : vector<2x16xf32>
    %c45 = arith.constant 45 : index
    %187 = memref.load %arg3[%c45] : memref<243xf32, #tpu.memory_space<smem>>
    %188 = vector.broadcast %187 : f32 to vector<2x16xf32>
    %189 = arith.mulf %188, %3 : vector<2x16xf32>
    %c46 = arith.constant 46 : index
    %190 = memref.load %arg3[%c46] : memref<243xf32, #tpu.memory_space<smem>>
    %191 = vector.broadcast %190 : f32 to vector<2x16xf32>
    %192 = arith.mulf %191, %4 : vector<2x16xf32>
    %193 = arith.addf %189, %192 : vector<2x16xf32>
    %c47 = arith.constant 47 : index
    %194 = memref.load %arg3[%c47] : memref<243xf32, #tpu.memory_space<smem>>
    %195 = vector.broadcast %194 : f32 to vector<2x16xf32>
    %196 = arith.mulf %195, %5 : vector<2x16xf32>
    %197 = arith.addf %193, %196 : vector<2x16xf32>
    %c48 = arith.constant 48 : index
    %198 = memref.load %arg3[%c48] : memref<243xf32, #tpu.memory_space<smem>>
    %199 = vector.broadcast %198 : f32 to vector<2x16xf32>
    %200 = arith.mulf %199, %6 : vector<2x16xf32>
    %201 = arith.addf %197, %200 : vector<2x16xf32>
    %c49 = arith.constant 49 : index
    %202 = memref.load %arg3[%c49] : memref<243xf32, #tpu.memory_space<smem>>
    %203 = vector.broadcast %202 : f32 to vector<2x16xf32>
    %204 = arith.mulf %203, %7 : vector<2x16xf32>
    %205 = arith.addf %201, %204 : vector<2x16xf32>
    %c50 = arith.constant 50 : index
    %206 = memref.load %arg3[%c50] : memref<243xf32, #tpu.memory_space<smem>>
    %207 = vector.broadcast %206 : f32 to vector<2x16xf32>
    %208 = arith.mulf %207, %8 : vector<2x16xf32>
    %209 = arith.addf %205, %208 : vector<2x16xf32>
    %c51 = arith.constant 51 : index
    %210 = memref.load %arg3[%c51] : memref<243xf32, #tpu.memory_space<smem>>
    %211 = vector.broadcast %210 : f32 to vector<2x16xf32>
    %212 = arith.mulf %211, %9 : vector<2x16xf32>
    %213 = arith.addf %209, %212 : vector<2x16xf32>
    %c52 = arith.constant 52 : index
    %214 = memref.load %arg3[%c52] : memref<243xf32, #tpu.memory_space<smem>>
    %215 = vector.broadcast %214 : f32 to vector<2x16xf32>
    %216 = arith.mulf %215, %10 : vector<2x16xf32>
    %217 = arith.addf %213, %216 : vector<2x16xf32>
    %c53 = arith.constant 53 : index
    %218 = memref.load %arg3[%c53] : memref<243xf32, #tpu.memory_space<smem>>
    %219 = vector.broadcast %218 : f32 to vector<2x16xf32>
    %220 = arith.mulf %219, %11 : vector<2x16xf32>
    %221 = arith.addf %217, %220 : vector<2x16xf32>
    %c54 = arith.constant 54 : index
    %222 = memref.load %arg3[%c54] : memref<243xf32, #tpu.memory_space<smem>>
    %223 = vector.broadcast %222 : f32 to vector<2x16xf32>
    %224 = arith.mulf %223, %3 : vector<2x16xf32>
    %c55 = arith.constant 55 : index
    %225 = memref.load %arg3[%c55] : memref<243xf32, #tpu.memory_space<smem>>
    %226 = vector.broadcast %225 : f32 to vector<2x16xf32>
    %227 = arith.mulf %226, %4 : vector<2x16xf32>
    %228 = arith.addf %224, %227 : vector<2x16xf32>
    %c56 = arith.constant 56 : index
    %229 = memref.load %arg3[%c56] : memref<243xf32, #tpu.memory_space<smem>>
    %230 = vector.broadcast %229 : f32 to vector<2x16xf32>
    %231 = arith.mulf %230, %5 : vector<2x16xf32>
    %232 = arith.addf %228, %231 : vector<2x16xf32>
    %c57 = arith.constant 57 : index
    %233 = memref.load %arg3[%c57] : memref<243xf32, #tpu.memory_space<smem>>
    %234 = vector.broadcast %233 : f32 to vector<2x16xf32>
    %235 = arith.mulf %234, %6 : vector<2x16xf32>
    %236 = arith.addf %232, %235 : vector<2x16xf32>
    %c58 = arith.constant 58 : index
    %237 = memref.load %arg3[%c58] : memref<243xf32, #tpu.memory_space<smem>>
    %238 = vector.broadcast %237 : f32 to vector<2x16xf32>
    %239 = arith.mulf %238, %7 : vector<2x16xf32>
    %240 = arith.addf %236, %239 : vector<2x16xf32>
    %c59 = arith.constant 59 : index
    %241 = memref.load %arg3[%c59] : memref<243xf32, #tpu.memory_space<smem>>
    %242 = vector.broadcast %241 : f32 to vector<2x16xf32>
    %243 = arith.mulf %242, %8 : vector<2x16xf32>
    %244 = arith.addf %240, %243 : vector<2x16xf32>
    %c60 = arith.constant 60 : index
    %245 = memref.load %arg3[%c60] : memref<243xf32, #tpu.memory_space<smem>>
    %246 = vector.broadcast %245 : f32 to vector<2x16xf32>
    %247 = arith.mulf %246, %9 : vector<2x16xf32>
    %248 = arith.addf %244, %247 : vector<2x16xf32>
    %c61 = arith.constant 61 : index
    %249 = memref.load %arg3[%c61] : memref<243xf32, #tpu.memory_space<smem>>
    %250 = vector.broadcast %249 : f32 to vector<2x16xf32>
    %251 = arith.mulf %250, %10 : vector<2x16xf32>
    %252 = arith.addf %248, %251 : vector<2x16xf32>
    %c62 = arith.constant 62 : index
    %253 = memref.load %arg3[%c62] : memref<243xf32, #tpu.memory_space<smem>>
    %254 = vector.broadcast %253 : f32 to vector<2x16xf32>
    %255 = arith.mulf %254, %11 : vector<2x16xf32>
    %256 = arith.addf %252, %255 : vector<2x16xf32>
    %c63 = arith.constant 63 : index
    %257 = memref.load %arg3[%c63] : memref<243xf32, #tpu.memory_space<smem>>
    %258 = vector.broadcast %257 : f32 to vector<2x16xf32>
    %259 = arith.mulf %258, %3 : vector<2x16xf32>
    %c64 = arith.constant 64 : index
    %260 = memref.load %arg3[%c64] : memref<243xf32, #tpu.memory_space<smem>>
    %261 = vector.broadcast %260 : f32 to vector<2x16xf32>
    %262 = arith.mulf %261, %4 : vector<2x16xf32>
    %263 = arith.addf %259, %262 : vector<2x16xf32>
    %c65 = arith.constant 65 : index
    %264 = memref.load %arg3[%c65] : memref<243xf32, #tpu.memory_space<smem>>
    %265 = vector.broadcast %264 : f32 to vector<2x16xf32>
    %266 = arith.mulf %265, %5 : vector<2x16xf32>
    %267 = arith.addf %263, %266 : vector<2x16xf32>
    %c66 = arith.constant 66 : index
    %268 = memref.load %arg3[%c66] : memref<243xf32, #tpu.memory_space<smem>>
    %269 = vector.broadcast %268 : f32 to vector<2x16xf32>
    %270 = arith.mulf %269, %6 : vector<2x16xf32>
    %271 = arith.addf %267, %270 : vector<2x16xf32>
    %c67 = arith.constant 67 : index
    %272 = memref.load %arg3[%c67] : memref<243xf32, #tpu.memory_space<smem>>
    %273 = vector.broadcast %272 : f32 to vector<2x16xf32>
    %274 = arith.mulf %273, %7 : vector<2x16xf32>
    %275 = arith.addf %271, %274 : vector<2x16xf32>
    %c68 = arith.constant 68 : index
    %276 = memref.load %arg3[%c68] : memref<243xf32, #tpu.memory_space<smem>>
    %277 = vector.broadcast %276 : f32 to vector<2x16xf32>
    %278 = arith.mulf %277, %8 : vector<2x16xf32>
    %279 = arith.addf %275, %278 : vector<2x16xf32>
    %c69 = arith.constant 69 : index
    %280 = memref.load %arg3[%c69] : memref<243xf32, #tpu.memory_space<smem>>
    %281 = vector.broadcast %280 : f32 to vector<2x16xf32>
    %282 = arith.mulf %281, %9 : vector<2x16xf32>
    %283 = arith.addf %279, %282 : vector<2x16xf32>
    %c70 = arith.constant 70 : index
    %284 = memref.load %arg3[%c70] : memref<243xf32, #tpu.memory_space<smem>>
    %285 = vector.broadcast %284 : f32 to vector<2x16xf32>
    %286 = arith.mulf %285, %10 : vector<2x16xf32>
    %287 = arith.addf %283, %286 : vector<2x16xf32>
    %c71 = arith.constant 71 : index
    %288 = memref.load %arg3[%c71] : memref<243xf32, #tpu.memory_space<smem>>
    %289 = vector.broadcast %288 : f32 to vector<2x16xf32>
    %290 = arith.mulf %289, %11 : vector<2x16xf32>
    %291 = arith.addf %287, %290 : vector<2x16xf32>
    %c72 = arith.constant 72 : index
    %292 = memref.load %arg3[%c72] : memref<243xf32, #tpu.memory_space<smem>>
    %293 = vector.broadcast %292 : f32 to vector<2x16xf32>
    %294 = arith.mulf %293, %3 : vector<2x16xf32>
    %c73 = arith.constant 73 : index
    %295 = memref.load %arg3[%c73] : memref<243xf32, #tpu.memory_space<smem>>
    %296 = vector.broadcast %295 : f32 to vector<2x16xf32>
    %297 = arith.mulf %296, %4 : vector<2x16xf32>
    %298 = arith.addf %294, %297 : vector<2x16xf32>
    %c74 = arith.constant 74 : index
    %299 = memref.load %arg3[%c74] : memref<243xf32, #tpu.memory_space<smem>>
    %300 = vector.broadcast %299 : f32 to vector<2x16xf32>
    %301 = arith.mulf %300, %5 : vector<2x16xf32>
    %302 = arith.addf %298, %301 : vector<2x16xf32>
    %c75 = arith.constant 75 : index
    %303 = memref.load %arg3[%c75] : memref<243xf32, #tpu.memory_space<smem>>
    %304 = vector.broadcast %303 : f32 to vector<2x16xf32>
    %305 = arith.mulf %304, %6 : vector<2x16xf32>
    %306 = arith.addf %302, %305 : vector<2x16xf32>
    %c76 = arith.constant 76 : index
    %307 = memref.load %arg3[%c76] : memref<243xf32, #tpu.memory_space<smem>>
    %308 = vector.broadcast %307 : f32 to vector<2x16xf32>
    %309 = arith.mulf %308, %7 : vector<2x16xf32>
    %310 = arith.addf %306, %309 : vector<2x16xf32>
    %c77 = arith.constant 77 : index
    %311 = memref.load %arg3[%c77] : memref<243xf32, #tpu.memory_space<smem>>
    %312 = vector.broadcast %311 : f32 to vector<2x16xf32>
    %313 = arith.mulf %312, %8 : vector<2x16xf32>
    %314 = arith.addf %310, %313 : vector<2x16xf32>
    %c78 = arith.constant 78 : index
    %315 = memref.load %arg3[%c78] : memref<243xf32, #tpu.memory_space<smem>>
    %316 = vector.broadcast %315 : f32 to vector<2x16xf32>
    %317 = arith.mulf %316, %9 : vector<2x16xf32>
    %318 = arith.addf %314, %317 : vector<2x16xf32>
    %c79 = arith.constant 79 : index
    %319 = memref.load %arg3[%c79] : memref<243xf32, #tpu.memory_space<smem>>
    %320 = vector.broadcast %319 : f32 to vector<2x16xf32>
    %321 = arith.mulf %320, %10 : vector<2x16xf32>
    %322 = arith.addf %318, %321 : vector<2x16xf32>
    %c80 = arith.constant 80 : index
    %323 = memref.load %arg3[%c80] : memref<243xf32, #tpu.memory_space<smem>>
    %324 = vector.broadcast %323 : f32 to vector<2x16xf32>
    %325 = arith.mulf %324, %11 : vector<2x16xf32>
    %326 = arith.addf %322, %325 : vector<2x16xf32>
    %327 = tpu.concatenate %46, %81, %116, %151, %186, %221, %256, %291, %326 in 0 : vector<2x16xf32>, vector<2x16xf32>, vector<2x16xf32>, vector<2x16xf32>, vector<2x16xf32>, vector<2x16xf32>, vector<2x16xf32>, vector<2x16xf32>, vector<2x16xf32> -> vector<18x16xf32>
    %cst = arith.constant dense<0.000000e+00> : vector<18x16xf32>
    %328 = tpu.matmul %327, %0, %cst {dimension_numbers = #tpu.dot_dimension_numbers<[1], [0], [0], [1], [0, 0, 1, 1], [], []>} : vector<18x16xf32>, vector<16x16xf32>, vector<18x16xf32> -> vector<18x16xf32>
    %329 = vector.extract_strided_slice %328 {offsets = [0, 0], sizes = [2, 16], strides = [1, 1]} : vector<18x16xf32> to vector<2x16xf32>
    %c0_5 = arith.constant 0 : index
    %330 = memref.load %arg4[%c0_5] : memref<27xf32, #tpu.memory_space<smem>>
    %331 = vector.broadcast %330 : f32 to vector<2x16xf32>
    %332 = arith.addf %329, %331 : vector<2x16xf32>
    %333 = vector.extract_strided_slice %328 {offsets = [2, 0], sizes = [2, 16], strides = [1, 1]} : vector<18x16xf32> to vector<2x16xf32>
    %c1_6 = arith.constant 1 : index
    %334 = memref.load %arg4[%c1_6] : memref<27xf32, #tpu.memory_space<smem>>
    %335 = vector.broadcast %334 : f32 to vector<2x16xf32>
    %336 = arith.addf %333, %335 : vector<2x16xf32>
    %337 = vector.extract_strided_slice %328 {offsets = [4, 0], sizes = [2, 16], strides = [1, 1]} : vector<18x16xf32> to vector<2x16xf32>
    %c2_7 = arith.constant 2 : index
    %338 = memref.load %arg4[%c2_7] : memref<27xf32, #tpu.memory_space<smem>>
    %339 = vector.broadcast %338 : f32 to vector<2x16xf32>
    %340 = arith.addf %337, %339 : vector<2x16xf32>
    %341 = vector.extract_strided_slice %328 {offsets = [6, 0], sizes = [2, 16], strides = [1, 1]} : vector<18x16xf32> to vector<2x16xf32>
    %c3_8 = arith.constant 3 : index
    %342 = memref.load %arg4[%c3_8] : memref<27xf32, #tpu.memory_space<smem>>
    %343 = vector.broadcast %342 : f32 to vector<2x16xf32>
    %344 = arith.addf %341, %343 : vector<2x16xf32>
    %345 = vector.extract_strided_slice %328 {offsets = [8, 0], sizes = [2, 16], strides = [1, 1]} : vector<18x16xf32> to vector<2x16xf32>
    %c4_9 = arith.constant 4 : index
    %346 = memref.load %arg4[%c4_9] : memref<27xf32, #tpu.memory_space<smem>>
    %347 = vector.broadcast %346 : f32 to vector<2x16xf32>
    %348 = arith.addf %345, %347 : vector<2x16xf32>
    %349 = vector.extract_strided_slice %328 {offsets = [10, 0], sizes = [2, 16], strides = [1, 1]} : vector<18x16xf32> to vector<2x16xf32>
    %c5_10 = arith.constant 5 : index
    %350 = memref.load %arg4[%c5_10] : memref<27xf32, #tpu.memory_space<smem>>
    %351 = vector.broadcast %350 : f32 to vector<2x16xf32>
    %352 = arith.addf %349, %351 : vector<2x16xf32>
    %353 = vector.extract_strided_slice %328 {offsets = [12, 0], sizes = [2, 16], strides = [1, 1]} : vector<18x16xf32> to vector<2x16xf32>
    %c6_11 = arith.constant 6 : index
    %354 = memref.load %arg4[%c6_11] : memref<27xf32, #tpu.memory_space<smem>>
    %355 = vector.broadcast %354 : f32 to vector<2x16xf32>
    %356 = arith.addf %353, %355 : vector<2x16xf32>
    %357 = vector.extract_strided_slice %328 {offsets = [14, 0], sizes = [2, 16], strides = [1, 1]} : vector<18x16xf32> to vector<2x16xf32>
    %c7_12 = arith.constant 7 : index
    %358 = memref.load %arg4[%c7_12] : memref<27xf32, #tpu.memory_space<smem>>
    %359 = vector.broadcast %358 : f32 to vector<2x16xf32>
    %360 = arith.addf %357, %359 : vector<2x16xf32>
    %361 = vector.extract_strided_slice %328 {offsets = [16, 0], sizes = [2, 16], strides = [1, 1]} : vector<18x16xf32> to vector<2x16xf32>
    %c8_13 = arith.constant 8 : index
    %362 = memref.load %arg4[%c8_13] : memref<27xf32, #tpu.memory_space<smem>>
    %363 = vector.broadcast %362 : f32 to vector<2x16xf32>
    %364 = arith.addf %361, %363 : vector<2x16xf32>
    %365 = arith.addf %332, %336 : vector<2x16xf32>
    %366 = arith.addf %365, %340 : vector<2x16xf32>
    %367 = arith.addf %366, %344 : vector<2x16xf32>
    %368 = arith.addf %367, %348 : vector<2x16xf32>
    %369 = arith.addf %368, %352 : vector<2x16xf32>
    %370 = arith.addf %369, %356 : vector<2x16xf32>
    %371 = arith.addf %370, %360 : vector<2x16xf32>
    %372 = arith.addf %371, %364 : vector<2x16xf32>
    %cst_14 = arith.constant 0.111111112 : f32
    %373 = vector.broadcast %cst_14 : f32 to vector<2x16xf32>
    %374 = arith.mulf %372, %373 : vector<2x16xf32>
    %375 = arith.subf %332, %374 : vector<2x16xf32>
    %376 = arith.subf %336, %374 : vector<2x16xf32>
    %377 = arith.subf %340, %374 : vector<2x16xf32>
    %378 = arith.subf %344, %374 : vector<2x16xf32>
    %379 = arith.subf %348, %374 : vector<2x16xf32>
    %380 = arith.subf %352, %374 : vector<2x16xf32>
    %381 = arith.subf %356, %374 : vector<2x16xf32>
    %382 = arith.subf %360, %374 : vector<2x16xf32>
    %383 = arith.subf %364, %374 : vector<2x16xf32>
    %384 = arith.mulf %375, %375 : vector<2x16xf32>
    %385 = arith.mulf %376, %376 : vector<2x16xf32>
    %386 = arith.addf %384, %385 : vector<2x16xf32>
    %387 = arith.mulf %377, %377 : vector<2x16xf32>
    %388 = arith.addf %386, %387 : vector<2x16xf32>
    %389 = arith.mulf %378, %378 : vector<2x16xf32>
    %390 = arith.addf %388, %389 : vector<2x16xf32>
    %391 = arith.mulf %379, %379 : vector<2x16xf32>
    %392 = arith.addf %390, %391 : vector<2x16xf32>
    %393 = arith.mulf %380, %380 : vector<2x16xf32>
    %394 = arith.addf %392, %393 : vector<2x16xf32>
    %395 = arith.mulf %381, %381 : vector<2x16xf32>
    %396 = arith.addf %394, %395 : vector<2x16xf32>
    %397 = arith.mulf %382, %382 : vector<2x16xf32>
    %398 = arith.addf %396, %397 : vector<2x16xf32>
    %399 = arith.mulf %383, %383 : vector<2x16xf32>
    %400 = arith.addf %398, %399 : vector<2x16xf32>
    %cst_15 = arith.constant 0.111111112 : f32
    %401 = vector.broadcast %cst_15 : f32 to vector<2x16xf32>
    %402 = arith.mulf %400, %401 : vector<2x16xf32>
    %cst_16 = arith.constant 9.99999974E-6 : f32
    %403 = vector.broadcast %cst_16 : f32 to vector<2x16xf32>
    %404 = arith.addf %402, %403 : vector<2x16xf32>
    %405 = math.rsqrt %404 : vector<2x16xf32>
    %406 = arith.mulf %375, %405 : vector<2x16xf32>
    %cst_17 = arith.constant 0.000000e+00 : f32
    %407 = vector.broadcast %cst_17 : f32 to vector<2x16xf32>
    %408 = arith.maximumf %406, %407 : vector<2x16xf32>
    %409 = arith.mulf %376, %405 : vector<2x16xf32>
    %cst_18 = arith.constant 0.000000e+00 : f32
    %410 = vector.broadcast %cst_18 : f32 to vector<2x16xf32>
    %411 = arith.maximumf %409, %410 : vector<2x16xf32>
    %412 = arith.mulf %377, %405 : vector<2x16xf32>
    %cst_19 = arith.constant 0.000000e+00 : f32
    %413 = vector.broadcast %cst_19 : f32 to vector<2x16xf32>
    %414 = arith.maximumf %412, %413 : vector<2x16xf32>
    %415 = arith.mulf %378, %405 : vector<2x16xf32>
    %cst_20 = arith.constant 0.000000e+00 : f32
    %416 = vector.broadcast %cst_20 : f32 to vector<2x16xf32>
    %417 = arith.maximumf %415, %416 : vector<2x16xf32>
    %418 = arith.mulf %379, %405 : vector<2x16xf32>
    %cst_21 = arith.constant 0.000000e+00 : f32
    %419 = vector.broadcast %cst_21 : f32 to vector<2x16xf32>
    %420 = arith.maximumf %418, %419 : vector<2x16xf32>
    %421 = arith.mulf %380, %405 : vector<2x16xf32>
    %cst_22 = arith.constant 0.000000e+00 : f32
    %422 = vector.broadcast %cst_22 : f32 to vector<2x16xf32>
    %423 = arith.maximumf %421, %422 : vector<2x16xf32>
    %424 = arith.mulf %381, %405 : vector<2x16xf32>
    %cst_23 = arith.constant 0.000000e+00 : f32
    %425 = vector.broadcast %cst_23 : f32 to vector<2x16xf32>
    %426 = arith.maximumf %424, %425 : vector<2x16xf32>
    %427 = arith.mulf %382, %405 : vector<2x16xf32>
    %cst_24 = arith.constant 0.000000e+00 : f32
    %428 = vector.broadcast %cst_24 : f32 to vector<2x16xf32>
    %429 = arith.maximumf %427, %428 : vector<2x16xf32>
    %430 = arith.mulf %383, %405 : vector<2x16xf32>
    %cst_25 = arith.constant 0.000000e+00 : f32
    %431 = vector.broadcast %cst_25 : f32 to vector<2x16xf32>
    %432 = arith.maximumf %430, %431 : vector<2x16xf32>
    %c81 = arith.constant 81 : index
    %433 = memref.load %arg3[%c81] : memref<243xf32, #tpu.memory_space<smem>>
    %434 = vector.broadcast %433 : f32 to vector<2x16xf32>
    %435 = arith.mulf %434, %408 : vector<2x16xf32>
    %c82 = arith.constant 82 : index
    %436 = memref.load %arg3[%c82] : memref<243xf32, #tpu.memory_space<smem>>
    %437 = vector.broadcast %436 : f32 to vector<2x16xf32>
    %438 = arith.mulf %437, %411 : vector<2x16xf32>
    %439 = arith.addf %435, %438 : vector<2x16xf32>
    %c83 = arith.constant 83 : index
    %440 = memref.load %arg3[%c83] : memref<243xf32, #tpu.memory_space<smem>>
    %441 = vector.broadcast %440 : f32 to vector<2x16xf32>
    %442 = arith.mulf %441, %414 : vector<2x16xf32>
    %443 = arith.addf %439, %442 : vector<2x16xf32>
    %c84 = arith.constant 84 : index
    %444 = memref.load %arg3[%c84] : memref<243xf32, #tpu.memory_space<smem>>
    %445 = vector.broadcast %444 : f32 to vector<2x16xf32>
    %446 = arith.mulf %445, %417 : vector<2x16xf32>
    %447 = arith.addf %443, %446 : vector<2x16xf32>
    %c85 = arith.constant 85 : index
    %448 = memref.load %arg3[%c85] : memref<243xf32, #tpu.memory_space<smem>>
    %449 = vector.broadcast %448 : f32 to vector<2x16xf32>
    %450 = arith.mulf %449, %420 : vector<2x16xf32>
    %451 = arith.addf %447, %450 : vector<2x16xf32>
    %c86 = arith.constant 86 : index
    %452 = memref.load %arg3[%c86] : memref<243xf32, #tpu.memory_space<smem>>
    %453 = vector.broadcast %452 : f32 to vector<2x16xf32>
    %454 = arith.mulf %453, %423 : vector<2x16xf32>
    %455 = arith.addf %451, %454 : vector<2x16xf32>
    %c87 = arith.constant 87 : index
    %456 = memref.load %arg3[%c87] : memref<243xf32, #tpu.memory_space<smem>>
    %457 = vector.broadcast %456 : f32 to vector<2x16xf32>
    %458 = arith.mulf %457, %426 : vector<2x16xf32>
    %459 = arith.addf %455, %458 : vector<2x16xf32>
    %c88 = arith.constant 88 : index
    %460 = memref.load %arg3[%c88] : memref<243xf32, #tpu.memory_space<smem>>
    %461 = vector.broadcast %460 : f32 to vector<2x16xf32>
    %462 = arith.mulf %461, %429 : vector<2x16xf32>
    %463 = arith.addf %459, %462 : vector<2x16xf32>
    %c89 = arith.constant 89 : index
    %464 = memref.load %arg3[%c89] : memref<243xf32, #tpu.memory_space<smem>>
    %465 = vector.broadcast %464 : f32 to vector<2x16xf32>
    %466 = arith.mulf %465, %432 : vector<2x16xf32>
    %467 = arith.addf %463, %466 : vector<2x16xf32>
    %c90 = arith.constant 90 : index
    %468 = memref.load %arg3[%c90] : memref<243xf32, #tpu.memory_space<smem>>
    %469 = vector.broadcast %468 : f32 to vector<2x16xf32>
    %470 = arith.mulf %469, %408 : vector<2x16xf32>
    %c91 = arith.constant 91 : index
    %471 = memref.load %arg3[%c91] : memref<243xf32, #tpu.memory_space<smem>>
    %472 = vector.broadcast %471 : f32 to vector<2x16xf32>
    %473 = arith.mulf %472, %411 : vector<2x16xf32>
    %474 = arith.addf %470, %473 : vector<2x16xf32>
    %c92 = arith.constant 92 : index
    %475 = memref.load %arg3[%c92] : memref<243xf32, #tpu.memory_space<smem>>
    %476 = vector.broadcast %475 : f32 to vector<2x16xf32>
    %477 = arith.mulf %476, %414 : vector<2x16xf32>
    %478 = arith.addf %474, %477 : vector<2x16xf32>
    %c93 = arith.constant 93 : index
    %479 = memref.load %arg3[%c93] : memref<243xf32, #tpu.memory_space<smem>>
    %480 = vector.broadcast %479 : f32 to vector<2x16xf32>
    %481 = arith.mulf %480, %417 : vector<2x16xf32>
    %482 = arith.addf %478, %481 : vector<2x16xf32>
    %c94 = arith.constant 94 : index
    %483 = memref.load %arg3[%c94] : memref<243xf32, #tpu.memory_space<smem>>
    %484 = vector.broadcast %483 : f32 to vector<2x16xf32>
    %485 = arith.mulf %484, %420 : vector<2x16xf32>
    %486 = arith.addf %482, %485 : vector<2x16xf32>
    %c95 = arith.constant 95 : index
    %487 = memref.load %arg3[%c95] : memref<243xf32, #tpu.memory_space<smem>>
    %488 = vector.broadcast %487 : f32 to vector<2x16xf32>
    %489 = arith.mulf %488, %423 : vector<2x16xf32>
    %490 = arith.addf %486, %489 : vector<2x16xf32>
    %c96 = arith.constant 96 : index
    %491 = memref.load %arg3[%c96] : memref<243xf32, #tpu.memory_space<smem>>
    %492 = vector.broadcast %491 : f32 to vector<2x16xf32>
    %493 = arith.mulf %492, %426 : vector<2x16xf32>
    %494 = arith.addf %490, %493 : vector<2x16xf32>
    %c97 = arith.constant 97 : index
    %495 = memref.load %arg3[%c97] : memref<243xf32, #tpu.memory_space<smem>>
    %496 = vector.broadcast %495 : f32 to vector<2x16xf32>
    %497 = arith.mulf %496, %429 : vector<2x16xf32>
    %498 = arith.addf %494, %497 : vector<2x16xf32>
    %c98 = arith.constant 98 : index
    %499 = memref.load %arg3[%c98] : memref<243xf32, #tpu.memory_space<smem>>
    %500 = vector.broadcast %499 : f32 to vector<2x16xf32>
    %501 = arith.mulf %500, %432 : vector<2x16xf32>
    %502 = arith.addf %498, %501 : vector<2x16xf32>
    %c99 = arith.constant 99 : index
    %503 = memref.load %arg3[%c99] : memref<243xf32, #tpu.memory_space<smem>>
    %504 = vector.broadcast %503 : f32 to vector<2x16xf32>
    %505 = arith.mulf %504, %408 : vector<2x16xf32>
    %c100 = arith.constant 100 : index
    %506 = memref.load %arg3[%c100] : memref<243xf32, #tpu.memory_space<smem>>
    %507 = vector.broadcast %506 : f32 to vector<2x16xf32>
    %508 = arith.mulf %507, %411 : vector<2x16xf32>
    %509 = arith.addf %505, %508 : vector<2x16xf32>
    %c101 = arith.constant 101 : index
    %510 = memref.load %arg3[%c101] : memref<243xf32, #tpu.memory_space<smem>>
    %511 = vector.broadcast %510 : f32 to vector<2x16xf32>
    %512 = arith.mulf %511, %414 : vector<2x16xf32>
    %513 = arith.addf %509, %512 : vector<2x16xf32>
    %c102 = arith.constant 102 : index
    %514 = memref.load %arg3[%c102] : memref<243xf32, #tpu.memory_space<smem>>
    %515 = vector.broadcast %514 : f32 to vector<2x16xf32>
    %516 = arith.mulf %515, %417 : vector<2x16xf32>
    %517 = arith.addf %513, %516 : vector<2x16xf32>
    %c103 = arith.constant 103 : index
    %518 = memref.load %arg3[%c103] : memref<243xf32, #tpu.memory_space<smem>>
    %519 = vector.broadcast %518 : f32 to vector<2x16xf32>
    %520 = arith.mulf %519, %420 : vector<2x16xf32>
    %521 = arith.addf %517, %520 : vector<2x16xf32>
    %c104 = arith.constant 104 : index
    %522 = memref.load %arg3[%c104] : memref<243xf32, #tpu.memory_space<smem>>
    %523 = vector.broadcast %522 : f32 to vector<2x16xf32>
    %524 = arith.mulf %523, %423 : vector<2x16xf32>
    %525 = arith.addf %521, %524 : vector<2x16xf32>
    %c105 = arith.constant 105 : index
    %526 = memref.load %arg3[%c105] : memref<243xf32, #tpu.memory_space<smem>>
    %527 = vector.broadcast %526 : f32 to vector<2x16xf32>
    %528 = arith.mulf %527, %426 : vector<2x16xf32>
    %529 = arith.addf %525, %528 : vector<2x16xf32>
    %c106 = arith.constant 106 : index
    %530 = memref.load %arg3[%c106] : memref<243xf32, #tpu.memory_space<smem>>
    %531 = vector.broadcast %530 : f32 to vector<2x16xf32>
    %532 = arith.mulf %531, %429 : vector<2x16xf32>
    %533 = arith.addf %529, %532 : vector<2x16xf32>
    %c107 = arith.constant 107 : index
    %534 = memref.load %arg3[%c107] : memref<243xf32, #tpu.memory_space<smem>>
    %535 = vector.broadcast %534 : f32 to vector<2x16xf32>
    %536 = arith.mulf %535, %432 : vector<2x16xf32>
    %537 = arith.addf %533, %536 : vector<2x16xf32>
    %c108 = arith.constant 108 : index
    %538 = memref.load %arg3[%c108] : memref<243xf32, #tpu.memory_space<smem>>
    %539 = vector.broadcast %538 : f32 to vector<2x16xf32>
    %540 = arith.mulf %539, %408 : vector<2x16xf32>
    %c109 = arith.constant 109 : index
    %541 = memref.load %arg3[%c109] : memref<243xf32, #tpu.memory_space<smem>>
    %542 = vector.broadcast %541 : f32 to vector<2x16xf32>
    %543 = arith.mulf %542, %411 : vector<2x16xf32>
    %544 = arith.addf %540, %543 : vector<2x16xf32>
    %c110 = arith.constant 110 : index
    %545 = memref.load %arg3[%c110] : memref<243xf32, #tpu.memory_space<smem>>
    %546 = vector.broadcast %545 : f32 to vector<2x16xf32>
    %547 = arith.mulf %546, %414 : vector<2x16xf32>
    %548 = arith.addf %544, %547 : vector<2x16xf32>
    %c111 = arith.constant 111 : index
    %549 = memref.load %arg3[%c111] : memref<243xf32, #tpu.memory_space<smem>>
    %550 = vector.broadcast %549 : f32 to vector<2x16xf32>
    %551 = arith.mulf %550, %417 : vector<2x16xf32>
    %552 = arith.addf %548, %551 : vector<2x16xf32>
    %c112 = arith.constant 112 : index
    %553 = memref.load %arg3[%c112] : memref<243xf32, #tpu.memory_space<smem>>
    %554 = vector.broadcast %553 : f32 to vector<2x16xf32>
    %555 = arith.mulf %554, %420 : vector<2x16xf32>
    %556 = arith.addf %552, %555 : vector<2x16xf32>
    %c113 = arith.constant 113 : index
    %557 = memref.load %arg3[%c113] : memref<243xf32, #tpu.memory_space<smem>>
    %558 = vector.broadcast %557 : f32 to vector<2x16xf32>
    %559 = arith.mulf %558, %423 : vector<2x16xf32>
    %560 = arith.addf %556, %559 : vector<2x16xf32>
    %c114 = arith.constant 114 : index
    %561 = memref.load %arg3[%c114] : memref<243xf32, #tpu.memory_space<smem>>
    %562 = vector.broadcast %561 : f32 to vector<2x16xf32>
    %563 = arith.mulf %562, %426 : vector<2x16xf32>
    %564 = arith.addf %560, %563 : vector<2x16xf32>
    %c115 = arith.constant 115 : index
    %565 = memref.load %arg3[%c115] : memref<243xf32, #tpu.memory_space<smem>>
    %566 = vector.broadcast %565 : f32 to vector<2x16xf32>
    %567 = arith.mulf %566, %429 : vector<2x16xf32>
    %568 = arith.addf %564, %567 : vector<2x16xf32>
    %c116 = arith.constant 116 : index
    %569 = memref.load %arg3[%c116] : memref<243xf32, #tpu.memory_space<smem>>
    %570 = vector.broadcast %569 : f32 to vector<2x16xf32>
    %571 = arith.mulf %570, %432 : vector<2x16xf32>
    %572 = arith.addf %568, %571 : vector<2x16xf32>
    %c117 = arith.constant 117 : index
    %573 = memref.load %arg3[%c117] : memref<243xf32, #tpu.memory_space<smem>>
    %574 = vector.broadcast %573 : f32 to vector<2x16xf32>
    %575 = arith.mulf %574, %408 : vector<2x16xf32>
    %c118 = arith.constant 118 : index
    %576 = memref.load %arg3[%c118] : memref<243xf32, #tpu.memory_space<smem>>
    %577 = vector.broadcast %576 : f32 to vector<2x16xf32>
    %578 = arith.mulf %577, %411 : vector<2x16xf32>
    %579 = arith.addf %575, %578 : vector<2x16xf32>
    %c119 = arith.constant 119 : index
    %580 = memref.load %arg3[%c119] : memref<243xf32, #tpu.memory_space<smem>>
    %581 = vector.broadcast %580 : f32 to vector<2x16xf32>
    %582 = arith.mulf %581, %414 : vector<2x16xf32>
    %583 = arith.addf %579, %582 : vector<2x16xf32>
    %c120 = arith.constant 120 : index
    %584 = memref.load %arg3[%c120] : memref<243xf32, #tpu.memory_space<smem>>
    %585 = vector.broadcast %584 : f32 to vector<2x16xf32>
    %586 = arith.mulf %585, %417 : vector<2x16xf32>
    %587 = arith.addf %583, %586 : vector<2x16xf32>
    %c121 = arith.constant 121 : index
    %588 = memref.load %arg3[%c121] : memref<243xf32, #tpu.memory_space<smem>>
    %589 = vector.broadcast %588 : f32 to vector<2x16xf32>
    %590 = arith.mulf %589, %420 : vector<2x16xf32>
    %591 = arith.addf %587, %590 : vector<2x16xf32>
    %c122 = arith.constant 122 : index
    %592 = memref.load %arg3[%c122] : memref<243xf32, #tpu.memory_space<smem>>
    %593 = vector.broadcast %592 : f32 to vector<2x16xf32>
    %594 = arith.mulf %593, %423 : vector<2x16xf32>
    %595 = arith.addf %591, %594 : vector<2x16xf32>
    %c123 = arith.constant 123 : index
    %596 = memref.load %arg3[%c123] : memref<243xf32, #tpu.memory_space<smem>>
    %597 = vector.broadcast %596 : f32 to vector<2x16xf32>
    %598 = arith.mulf %597, %426 : vector<2x16xf32>
    %599 = arith.addf %595, %598 : vector<2x16xf32>
    %c124 = arith.constant 124 : index
    %600 = memref.load %arg3[%c124] : memref<243xf32, #tpu.memory_space<smem>>
    %601 = vector.broadcast %600 : f32 to vector<2x16xf32>
    %602 = arith.mulf %601, %429 : vector<2x16xf32>
    %603 = arith.addf %599, %602 : vector<2x16xf32>
    %c125 = arith.constant 125 : index
    %604 = memref.load %arg3[%c125] : memref<243xf32, #tpu.memory_space<smem>>
    %605 = vector.broadcast %604 : f32 to vector<2x16xf32>
    %606 = arith.mulf %605, %432 : vector<2x16xf32>
    %607 = arith.addf %603, %606 : vector<2x16xf32>
    %c126 = arith.constant 126 : index
    %608 = memref.load %arg3[%c126] : memref<243xf32, #tpu.memory_space<smem>>
    %609 = vector.broadcast %608 : f32 to vector<2x16xf32>
    %610 = arith.mulf %609, %408 : vector<2x16xf32>
    %c127 = arith.constant 127 : index
    %611 = memref.load %arg3[%c127] : memref<243xf32, #tpu.memory_space<smem>>
    %612 = vector.broadcast %611 : f32 to vector<2x16xf32>
    %613 = arith.mulf %612, %411 : vector<2x16xf32>
    %614 = arith.addf %610, %613 : vector<2x16xf32>
    %c128 = arith.constant 128 : index
    %615 = memref.load %arg3[%c128] : memref<243xf32, #tpu.memory_space<smem>>
    %616 = vector.broadcast %615 : f32 to vector<2x16xf32>
    %617 = arith.mulf %616, %414 : vector<2x16xf32>
    %618 = arith.addf %614, %617 : vector<2x16xf32>
    %c129 = arith.constant 129 : index
    %619 = memref.load %arg3[%c129] : memref<243xf32, #tpu.memory_space<smem>>
    %620 = vector.broadcast %619 : f32 to vector<2x16xf32>
    %621 = arith.mulf %620, %417 : vector<2x16xf32>
    %622 = arith.addf %618, %621 : vector<2x16xf32>
    %c130 = arith.constant 130 : index
    %623 = memref.load %arg3[%c130] : memref<243xf32, #tpu.memory_space<smem>>
    %624 = vector.broadcast %623 : f32 to vector<2x16xf32>
    %625 = arith.mulf %624, %420 : vector<2x16xf32>
    %626 = arith.addf %622, %625 : vector<2x16xf32>
    %c131 = arith.constant 131 : index
    %627 = memref.load %arg3[%c131] : memref<243xf32, #tpu.memory_space<smem>>
    %628 = vector.broadcast %627 : f32 to vector<2x16xf32>
    %629 = arith.mulf %628, %423 : vector<2x16xf32>
    %630 = arith.addf %626, %629 : vector<2x16xf32>
    %c132 = arith.constant 132 : index
    %631 = memref.load %arg3[%c132] : memref<243xf32, #tpu.memory_space<smem>>
    %632 = vector.broadcast %631 : f32 to vector<2x16xf32>
    %633 = arith.mulf %632, %426 : vector<2x16xf32>
    %634 = arith.addf %630, %633 : vector<2x16xf32>
    %c133 = arith.constant 133 : index
    %635 = memref.load %arg3[%c133] : memref<243xf32, #tpu.memory_space<smem>>
    %636 = vector.broadcast %635 : f32 to vector<2x16xf32>
    %637 = arith.mulf %636, %429 : vector<2x16xf32>
    %638 = arith.addf %634, %637 : vector<2x16xf32>
    %c134 = arith.constant 134 : index
    %639 = memref.load %arg3[%c134] : memref<243xf32, #tpu.memory_space<smem>>
    %640 = vector.broadcast %639 : f32 to vector<2x16xf32>
    %641 = arith.mulf %640, %432 : vector<2x16xf32>
    %642 = arith.addf %638, %641 : vector<2x16xf32>
    %c135 = arith.constant 135 : index
    %643 = memref.load %arg3[%c135] : memref<243xf32, #tpu.memory_space<smem>>
    %644 = vector.broadcast %643 : f32 to vector<2x16xf32>
    %645 = arith.mulf %644, %408 : vector<2x16xf32>
    %c136 = arith.constant 136 : index
    %646 = memref.load %arg3[%c136] : memref<243xf32, #tpu.memory_space<smem>>
    %647 = vector.broadcast %646 : f32 to vector<2x16xf32>
    %648 = arith.mulf %647, %411 : vector<2x16xf32>
    %649 = arith.addf %645, %648 : vector<2x16xf32>
    %c137 = arith.constant 137 : index
    %650 = memref.load %arg3[%c137] : memref<243xf32, #tpu.memory_space<smem>>
    %651 = vector.broadcast %650 : f32 to vector<2x16xf32>
    %652 = arith.mulf %651, %414 : vector<2x16xf32>
    %653 = arith.addf %649, %652 : vector<2x16xf32>
    %c138 = arith.constant 138 : index
    %654 = memref.load %arg3[%c138] : memref<243xf32, #tpu.memory_space<smem>>
    %655 = vector.broadcast %654 : f32 to vector<2x16xf32>
    %656 = arith.mulf %655, %417 : vector<2x16xf32>
    %657 = arith.addf %653, %656 : vector<2x16xf32>
    %c139 = arith.constant 139 : index
    %658 = memref.load %arg3[%c139] : memref<243xf32, #tpu.memory_space<smem>>
    %659 = vector.broadcast %658 : f32 to vector<2x16xf32>
    %660 = arith.mulf %659, %420 : vector<2x16xf32>
    %661 = arith.addf %657, %660 : vector<2x16xf32>
    %c140 = arith.constant 140 : index
    %662 = memref.load %arg3[%c140] : memref<243xf32, #tpu.memory_space<smem>>
    %663 = vector.broadcast %662 : f32 to vector<2x16xf32>
    %664 = arith.mulf %663, %423 : vector<2x16xf32>
    %665 = arith.addf %661, %664 : vector<2x16xf32>
    %c141 = arith.constant 141 : index
    %666 = memref.load %arg3[%c141] : memref<243xf32, #tpu.memory_space<smem>>
    %667 = vector.broadcast %666 : f32 to vector<2x16xf32>
    %668 = arith.mulf %667, %426 : vector<2x16xf32>
    %669 = arith.addf %665, %668 : vector<2x16xf32>
    %c142 = arith.constant 142 : index
    %670 = memref.load %arg3[%c142] : memref<243xf32, #tpu.memory_space<smem>>
    %671 = vector.broadcast %670 : f32 to vector<2x16xf32>
    %672 = arith.mulf %671, %429 : vector<2x16xf32>
    %673 = arith.addf %669, %672 : vector<2x16xf32>
    %c143 = arith.constant 143 : index
    %674 = memref.load %arg3[%c143] : memref<243xf32, #tpu.memory_space<smem>>
    %675 = vector.broadcast %674 : f32 to vector<2x16xf32>
    %676 = arith.mulf %675, %432 : vector<2x16xf32>
    %677 = arith.addf %673, %676 : vector<2x16xf32>
    %c144 = arith.constant 144 : index
    %678 = memref.load %arg3[%c144] : memref<243xf32, #tpu.memory_space<smem>>
    %679 = vector.broadcast %678 : f32 to vector<2x16xf32>
    %680 = arith.mulf %679, %408 : vector<2x16xf32>
    %c145 = arith.constant 145 : index
    %681 = memref.load %arg3[%c145] : memref<243xf32, #tpu.memory_space<smem>>
    %682 = vector.broadcast %681 : f32 to vector<2x16xf32>
    %683 = arith.mulf %682, %411 : vector<2x16xf32>
    %684 = arith.addf %680, %683 : vector<2x16xf32>
    %c146 = arith.constant 146 : index
    %685 = memref.load %arg3[%c146] : memref<243xf32, #tpu.memory_space<smem>>
    %686 = vector.broadcast %685 : f32 to vector<2x16xf32>
    %687 = arith.mulf %686, %414 : vector<2x16xf32>
    %688 = arith.addf %684, %687 : vector<2x16xf32>
    %c147 = arith.constant 147 : index
    %689 = memref.load %arg3[%c147] : memref<243xf32, #tpu.memory_space<smem>>
    %690 = vector.broadcast %689 : f32 to vector<2x16xf32>
    %691 = arith.mulf %690, %417 : vector<2x16xf32>
    %692 = arith.addf %688, %691 : vector<2x16xf32>
    %c148 = arith.constant 148 : index
    %693 = memref.load %arg3[%c148] : memref<243xf32, #tpu.memory_space<smem>>
    %694 = vector.broadcast %693 : f32 to vector<2x16xf32>
    %695 = arith.mulf %694, %420 : vector<2x16xf32>
    %696 = arith.addf %692, %695 : vector<2x16xf32>
    %c149 = arith.constant 149 : index
    %697 = memref.load %arg3[%c149] : memref<243xf32, #tpu.memory_space<smem>>
    %698 = vector.broadcast %697 : f32 to vector<2x16xf32>
    %699 = arith.mulf %698, %423 : vector<2x16xf32>
    %700 = arith.addf %696, %699 : vector<2x16xf32>
    %c150 = arith.constant 150 : index
    %701 = memref.load %arg3[%c150] : memref<243xf32, #tpu.memory_space<smem>>
    %702 = vector.broadcast %701 : f32 to vector<2x16xf32>
    %703 = arith.mulf %702, %426 : vector<2x16xf32>
    %704 = arith.addf %700, %703 : vector<2x16xf32>
    %c151 = arith.constant 151 : index
    %705 = memref.load %arg3[%c151] : memref<243xf32, #tpu.memory_space<smem>>
    %706 = vector.broadcast %705 : f32 to vector<2x16xf32>
    %707 = arith.mulf %706, %429 : vector<2x16xf32>
    %708 = arith.addf %704, %707 : vector<2x16xf32>
    %c152 = arith.constant 152 : index
    %709 = memref.load %arg3[%c152] : memref<243xf32, #tpu.memory_space<smem>>
    %710 = vector.broadcast %709 : f32 to vector<2x16xf32>
    %711 = arith.mulf %710, %432 : vector<2x16xf32>
    %712 = arith.addf %708, %711 : vector<2x16xf32>
    %c153 = arith.constant 153 : index
    %713 = memref.load %arg3[%c153] : memref<243xf32, #tpu.memory_space<smem>>
    %714 = vector.broadcast %713 : f32 to vector<2x16xf32>
    %715 = arith.mulf %714, %408 : vector<2x16xf32>
    %c154 = arith.constant 154 : index
    %716 = memref.load %arg3[%c154] : memref<243xf32, #tpu.memory_space<smem>>
    %717 = vector.broadcast %716 : f32 to vector<2x16xf32>
    %718 = arith.mulf %717, %411 : vector<2x16xf32>
    %719 = arith.addf %715, %718 : vector<2x16xf32>
    %c155 = arith.constant 155 : index
    %720 = memref.load %arg3[%c155] : memref<243xf32, #tpu.memory_space<smem>>
    %721 = vector.broadcast %720 : f32 to vector<2x16xf32>
    %722 = arith.mulf %721, %414 : vector<2x16xf32>
    %723 = arith.addf %719, %722 : vector<2x16xf32>
    %c156 = arith.constant 156 : index
    %724 = memref.load %arg3[%c156] : memref<243xf32, #tpu.memory_space<smem>>
    %725 = vector.broadcast %724 : f32 to vector<2x16xf32>
    %726 = arith.mulf %725, %417 : vector<2x16xf32>
    %727 = arith.addf %723, %726 : vector<2x16xf32>
    %c157 = arith.constant 157 : index
    %728 = memref.load %arg3[%c157] : memref<243xf32, #tpu.memory_space<smem>>
    %729 = vector.broadcast %728 : f32 to vector<2x16xf32>
    %730 = arith.mulf %729, %420 : vector<2x16xf32>
    %731 = arith.addf %727, %730 : vector<2x16xf32>
    %c158 = arith.constant 158 : index
    %732 = memref.load %arg3[%c158] : memref<243xf32, #tpu.memory_space<smem>>
    %733 = vector.broadcast %732 : f32 to vector<2x16xf32>
    %734 = arith.mulf %733, %423 : vector<2x16xf32>
    %735 = arith.addf %731, %734 : vector<2x16xf32>
    %c159 = arith.constant 159 : index
    %736 = memref.load %arg3[%c159] : memref<243xf32, #tpu.memory_space<smem>>
    %737 = vector.broadcast %736 : f32 to vector<2x16xf32>
    %738 = arith.mulf %737, %426 : vector<2x16xf32>
    %739 = arith.addf %735, %738 : vector<2x16xf32>
    %c160 = arith.constant 160 : index
    %740 = memref.load %arg3[%c160] : memref<243xf32, #tpu.memory_space<smem>>
    %741 = vector.broadcast %740 : f32 to vector<2x16xf32>
    %742 = arith.mulf %741, %429 : vector<2x16xf32>
    %743 = arith.addf %739, %742 : vector<2x16xf32>
    %c161 = arith.constant 161 : index
    %744 = memref.load %arg3[%c161] : memref<243xf32, #tpu.memory_space<smem>>
    %745 = vector.broadcast %744 : f32 to vector<2x16xf32>
    %746 = arith.mulf %745, %432 : vector<2x16xf32>
    %747 = arith.addf %743, %746 : vector<2x16xf32>
    %748 = tpu.concatenate %467, %502, %537, %572, %607, %642, %677, %712, %747 in 0 : vector<2x16xf32>, vector<2x16xf32>, vector<2x16xf32>, vector<2x16xf32>, vector<2x16xf32>, vector<2x16xf32>, vector<2x16xf32>, vector<2x16xf32>, vector<2x16xf32> -> vector<18x16xf32>
    %cst_26 = arith.constant dense<0.000000e+00> : vector<18x16xf32>
    %749 = tpu.matmul %748, %0, %cst_26 {dimension_numbers = #tpu.dot_dimension_numbers<[1], [0], [0], [1], [0, 0, 1, 1], [], []>} : vector<18x16xf32>, vector<16x16xf32>, vector<18x16xf32> -> vector<18x16xf32>
    %750 = vector.extract_strided_slice %749 {offsets = [0, 0], sizes = [2, 16], strides = [1, 1]} : vector<18x16xf32> to vector<2x16xf32>
    %c9_27 = arith.constant 9 : index
    %751 = memref.load %arg4[%c9_27] : memref<27xf32, #tpu.memory_space<smem>>
    %752 = vector.broadcast %751 : f32 to vector<2x16xf32>
    %753 = arith.addf %750, %752 : vector<2x16xf32>
    %754 = vector.extract_strided_slice %749 {offsets = [2, 0], sizes = [2, 16], strides = [1, 1]} : vector<18x16xf32> to vector<2x16xf32>
    %c10_28 = arith.constant 10 : index
    %755 = memref.load %arg4[%c10_28] : memref<27xf32, #tpu.memory_space<smem>>
    %756 = vector.broadcast %755 : f32 to vector<2x16xf32>
    %757 = arith.addf %754, %756 : vector<2x16xf32>
    %758 = vector.extract_strided_slice %749 {offsets = [4, 0], sizes = [2, 16], strides = [1, 1]} : vector<18x16xf32> to vector<2x16xf32>
    %c11_29 = arith.constant 11 : index
    %759 = memref.load %arg4[%c11_29] : memref<27xf32, #tpu.memory_space<smem>>
    %760 = vector.broadcast %759 : f32 to vector<2x16xf32>
    %761 = arith.addf %758, %760 : vector<2x16xf32>
    %762 = vector.extract_strided_slice %749 {offsets = [6, 0], sizes = [2, 16], strides = [1, 1]} : vector<18x16xf32> to vector<2x16xf32>
    %c12_30 = arith.constant 12 : index
    %763 = memref.load %arg4[%c12_30] : memref<27xf32, #tpu.memory_space<smem>>
    %764 = vector.broadcast %763 : f32 to vector<2x16xf32>
    %765 = arith.addf %762, %764 : vector<2x16xf32>
    %766 = vector.extract_strided_slice %749 {offsets = [8, 0], sizes = [2, 16], strides = [1, 1]} : vector<18x16xf32> to vector<2x16xf32>
    %c13_31 = arith.constant 13 : index
    %767 = memref.load %arg4[%c13_31] : memref<27xf32, #tpu.memory_space<smem>>
    %768 = vector.broadcast %767 : f32 to vector<2x16xf32>
    %769 = arith.addf %766, %768 : vector<2x16xf32>
    %770 = vector.extract_strided_slice %749 {offsets = [10, 0], sizes = [2, 16], strides = [1, 1]} : vector<18x16xf32> to vector<2x16xf32>
    %c14_32 = arith.constant 14 : index
    %771 = memref.load %arg4[%c14_32] : memref<27xf32, #tpu.memory_space<smem>>
    %772 = vector.broadcast %771 : f32 to vector<2x16xf32>
    %773 = arith.addf %770, %772 : vector<2x16xf32>
    %774 = vector.extract_strided_slice %749 {offsets = [12, 0], sizes = [2, 16], strides = [1, 1]} : vector<18x16xf32> to vector<2x16xf32>
    %c15_33 = arith.constant 15 : index
    %775 = memref.load %arg4[%c15_33] : memref<27xf32, #tpu.memory_space<smem>>
    %776 = vector.broadcast %775 : f32 to vector<2x16xf32>
    %777 = arith.addf %774, %776 : vector<2x16xf32>
    %778 = vector.extract_strided_slice %749 {offsets = [14, 0], sizes = [2, 16], strides = [1, 1]} : vector<18x16xf32> to vector<2x16xf32>
    %c16_34 = arith.constant 16 : index
    %779 = memref.load %arg4[%c16_34] : memref<27xf32, #tpu.memory_space<smem>>
    %780 = vector.broadcast %779 : f32 to vector<2x16xf32>
    %781 = arith.addf %778, %780 : vector<2x16xf32>
    %782 = vector.extract_strided_slice %749 {offsets = [16, 0], sizes = [2, 16], strides = [1, 1]} : vector<18x16xf32> to vector<2x16xf32>
    %c17_35 = arith.constant 17 : index
    %783 = memref.load %arg4[%c17_35] : memref<27xf32, #tpu.memory_space<smem>>
    %784 = vector.broadcast %783 : f32 to vector<2x16xf32>
    %785 = arith.addf %782, %784 : vector<2x16xf32>
    %786 = arith.addf %753, %757 : vector<2x16xf32>
    %787 = arith.addf %786, %761 : vector<2x16xf32>
    %788 = arith.addf %787, %765 : vector<2x16xf32>
    %789 = arith.addf %788, %769 : vector<2x16xf32>
    %790 = arith.addf %789, %773 : vector<2x16xf32>
    %791 = arith.addf %790, %777 : vector<2x16xf32>
    %792 = arith.addf %791, %781 : vector<2x16xf32>
    %793 = arith.addf %792, %785 : vector<2x16xf32>
    %cst_36 = arith.constant 0.111111112 : f32
    %794 = vector.broadcast %cst_36 : f32 to vector<2x16xf32>
    %795 = arith.mulf %793, %794 : vector<2x16xf32>
    %796 = arith.subf %753, %795 : vector<2x16xf32>
    %797 = arith.subf %757, %795 : vector<2x16xf32>
    %798 = arith.subf %761, %795 : vector<2x16xf32>
    %799 = arith.subf %765, %795 : vector<2x16xf32>
    %800 = arith.subf %769, %795 : vector<2x16xf32>
    %801 = arith.subf %773, %795 : vector<2x16xf32>
    %802 = arith.subf %777, %795 : vector<2x16xf32>
    %803 = arith.subf %781, %795 : vector<2x16xf32>
    %804 = arith.subf %785, %795 : vector<2x16xf32>
    %805 = arith.mulf %796, %796 : vector<2x16xf32>
    %806 = arith.mulf %797, %797 : vector<2x16xf32>
    %807 = arith.addf %805, %806 : vector<2x16xf32>
    %808 = arith.mulf %798, %798 : vector<2x16xf32>
    %809 = arith.addf %807, %808 : vector<2x16xf32>
    %810 = arith.mulf %799, %799 : vector<2x16xf32>
    %811 = arith.addf %809, %810 : vector<2x16xf32>
    %812 = arith.mulf %800, %800 : vector<2x16xf32>
    %813 = arith.addf %811, %812 : vector<2x16xf32>
    %814 = arith.mulf %801, %801 : vector<2x16xf32>
    %815 = arith.addf %813, %814 : vector<2x16xf32>
    %816 = arith.mulf %802, %802 : vector<2x16xf32>
    %817 = arith.addf %815, %816 : vector<2x16xf32>
    %818 = arith.mulf %803, %803 : vector<2x16xf32>
    %819 = arith.addf %817, %818 : vector<2x16xf32>
    %820 = arith.mulf %804, %804 : vector<2x16xf32>
    %821 = arith.addf %819, %820 : vector<2x16xf32>
    %cst_37 = arith.constant 0.111111112 : f32
    %822 = vector.broadcast %cst_37 : f32 to vector<2x16xf32>
    %823 = arith.mulf %821, %822 : vector<2x16xf32>
    %cst_38 = arith.constant 9.99999974E-6 : f32
    %824 = vector.broadcast %cst_38 : f32 to vector<2x16xf32>
    %825 = arith.addf %823, %824 : vector<2x16xf32>
    %826 = math.rsqrt %825 : vector<2x16xf32>
    %827 = arith.mulf %796, %826 : vector<2x16xf32>
    %cst_39 = arith.constant 0.000000e+00 : f32
    %828 = vector.broadcast %cst_39 : f32 to vector<2x16xf32>
    %829 = arith.maximumf %827, %828 : vector<2x16xf32>
    %830 = arith.mulf %797, %826 : vector<2x16xf32>
    %cst_40 = arith.constant 0.000000e+00 : f32
    %831 = vector.broadcast %cst_40 : f32 to vector<2x16xf32>
    %832 = arith.maximumf %830, %831 : vector<2x16xf32>
    %833 = arith.mulf %798, %826 : vector<2x16xf32>
    %cst_41 = arith.constant 0.000000e+00 : f32
    %834 = vector.broadcast %cst_41 : f32 to vector<2x16xf32>
    %835 = arith.maximumf %833, %834 : vector<2x16xf32>
    %836 = arith.mulf %799, %826 : vector<2x16xf32>
    %cst_42 = arith.constant 0.000000e+00 : f32
    %837 = vector.broadcast %cst_42 : f32 to vector<2x16xf32>
    %838 = arith.maximumf %836, %837 : vector<2x16xf32>
    %839 = arith.mulf %800, %826 : vector<2x16xf32>
    %cst_43 = arith.constant 0.000000e+00 : f32
    %840 = vector.broadcast %cst_43 : f32 to vector<2x16xf32>
    %841 = arith.maximumf %839, %840 : vector<2x16xf32>
    %842 = arith.mulf %801, %826 : vector<2x16xf32>
    %cst_44 = arith.constant 0.000000e+00 : f32
    %843 = vector.broadcast %cst_44 : f32 to vector<2x16xf32>
    %844 = arith.maximumf %842, %843 : vector<2x16xf32>
    %845 = arith.mulf %802, %826 : vector<2x16xf32>
    %cst_45 = arith.constant 0.000000e+00 : f32
    %846 = vector.broadcast %cst_45 : f32 to vector<2x16xf32>
    %847 = arith.maximumf %845, %846 : vector<2x16xf32>
    %848 = arith.mulf %803, %826 : vector<2x16xf32>
    %cst_46 = arith.constant 0.000000e+00 : f32
    %849 = vector.broadcast %cst_46 : f32 to vector<2x16xf32>
    %850 = arith.maximumf %848, %849 : vector<2x16xf32>
    %851 = arith.mulf %804, %826 : vector<2x16xf32>
    %cst_47 = arith.constant 0.000000e+00 : f32
    %852 = vector.broadcast %cst_47 : f32 to vector<2x16xf32>
    %853 = arith.maximumf %851, %852 : vector<2x16xf32>
    %c162 = arith.constant 162 : index
    %854 = memref.load %arg3[%c162] : memref<243xf32, #tpu.memory_space<smem>>
    %855 = vector.broadcast %854 : f32 to vector<2x16xf32>
    %856 = arith.mulf %855, %829 : vector<2x16xf32>
    %c163 = arith.constant 163 : index
    %857 = memref.load %arg3[%c163] : memref<243xf32, #tpu.memory_space<smem>>
    %858 = vector.broadcast %857 : f32 to vector<2x16xf32>
    %859 = arith.mulf %858, %832 : vector<2x16xf32>
    %860 = arith.addf %856, %859 : vector<2x16xf32>
    %c164 = arith.constant 164 : index
    %861 = memref.load %arg3[%c164] : memref<243xf32, #tpu.memory_space<smem>>
    %862 = vector.broadcast %861 : f32 to vector<2x16xf32>
    %863 = arith.mulf %862, %835 : vector<2x16xf32>
    %864 = arith.addf %860, %863 : vector<2x16xf32>
    %c165 = arith.constant 165 : index
    %865 = memref.load %arg3[%c165] : memref<243xf32, #tpu.memory_space<smem>>
    %866 = vector.broadcast %865 : f32 to vector<2x16xf32>
    %867 = arith.mulf %866, %838 : vector<2x16xf32>
    %868 = arith.addf %864, %867 : vector<2x16xf32>
    %c166 = arith.constant 166 : index
    %869 = memref.load %arg3[%c166] : memref<243xf32, #tpu.memory_space<smem>>
    %870 = vector.broadcast %869 : f32 to vector<2x16xf32>
    %871 = arith.mulf %870, %841 : vector<2x16xf32>
    %872 = arith.addf %868, %871 : vector<2x16xf32>
    %c167 = arith.constant 167 : index
    %873 = memref.load %arg3[%c167] : memref<243xf32, #tpu.memory_space<smem>>
    %874 = vector.broadcast %873 : f32 to vector<2x16xf32>
    %875 = arith.mulf %874, %844 : vector<2x16xf32>
    %876 = arith.addf %872, %875 : vector<2x16xf32>
    %c168 = arith.constant 168 : index
    %877 = memref.load %arg3[%c168] : memref<243xf32, #tpu.memory_space<smem>>
    %878 = vector.broadcast %877 : f32 to vector<2x16xf32>
    %879 = arith.mulf %878, %847 : vector<2x16xf32>
    %880 = arith.addf %876, %879 : vector<2x16xf32>
    %c169 = arith.constant 169 : index
    %881 = memref.load %arg3[%c169] : memref<243xf32, #tpu.memory_space<smem>>
    %882 = vector.broadcast %881 : f32 to vector<2x16xf32>
    %883 = arith.mulf %882, %850 : vector<2x16xf32>
    %884 = arith.addf %880, %883 : vector<2x16xf32>
    %c170 = arith.constant 170 : index
    %885 = memref.load %arg3[%c170] : memref<243xf32, #tpu.memory_space<smem>>
    %886 = vector.broadcast %885 : f32 to vector<2x16xf32>
    %887 = arith.mulf %886, %853 : vector<2x16xf32>
    %888 = arith.addf %884, %887 : vector<2x16xf32>
    %c171 = arith.constant 171 : index
    %889 = memref.load %arg3[%c171] : memref<243xf32, #tpu.memory_space<smem>>
    %890 = vector.broadcast %889 : f32 to vector<2x16xf32>
    %891 = arith.mulf %890, %829 : vector<2x16xf32>
    %c172 = arith.constant 172 : index
    %892 = memref.load %arg3[%c172] : memref<243xf32, #tpu.memory_space<smem>>
    %893 = vector.broadcast %892 : f32 to vector<2x16xf32>
    %894 = arith.mulf %893, %832 : vector<2x16xf32>
    %895 = arith.addf %891, %894 : vector<2x16xf32>
    %c173 = arith.constant 173 : index
    %896 = memref.load %arg3[%c173] : memref<243xf32, #tpu.memory_space<smem>>
    %897 = vector.broadcast %896 : f32 to vector<2x16xf32>
    %898 = arith.mulf %897, %835 : vector<2x16xf32>
    %899 = arith.addf %895, %898 : vector<2x16xf32>
    %c174 = arith.constant 174 : index
    %900 = memref.load %arg3[%c174] : memref<243xf32, #tpu.memory_space<smem>>
    %901 = vector.broadcast %900 : f32 to vector<2x16xf32>
    %902 = arith.mulf %901, %838 : vector<2x16xf32>
    %903 = arith.addf %899, %902 : vector<2x16xf32>
    %c175 = arith.constant 175 : index
    %904 = memref.load %arg3[%c175] : memref<243xf32, #tpu.memory_space<smem>>
    %905 = vector.broadcast %904 : f32 to vector<2x16xf32>
    %906 = arith.mulf %905, %841 : vector<2x16xf32>
    %907 = arith.addf %903, %906 : vector<2x16xf32>
    %c176 = arith.constant 176 : index
    %908 = memref.load %arg3[%c176] : memref<243xf32, #tpu.memory_space<smem>>
    %909 = vector.broadcast %908 : f32 to vector<2x16xf32>
    %910 = arith.mulf %909, %844 : vector<2x16xf32>
    %911 = arith.addf %907, %910 : vector<2x16xf32>
    %c177 = arith.constant 177 : index
    %912 = memref.load %arg3[%c177] : memref<243xf32, #tpu.memory_space<smem>>
    %913 = vector.broadcast %912 : f32 to vector<2x16xf32>
    %914 = arith.mulf %913, %847 : vector<2x16xf32>
    %915 = arith.addf %911, %914 : vector<2x16xf32>
    %c178 = arith.constant 178 : index
    %916 = memref.load %arg3[%c178] : memref<243xf32, #tpu.memory_space<smem>>
    %917 = vector.broadcast %916 : f32 to vector<2x16xf32>
    %918 = arith.mulf %917, %850 : vector<2x16xf32>
    %919 = arith.addf %915, %918 : vector<2x16xf32>
    %c179 = arith.constant 179 : index
    %920 = memref.load %arg3[%c179] : memref<243xf32, #tpu.memory_space<smem>>
    %921 = vector.broadcast %920 : f32 to vector<2x16xf32>
    %922 = arith.mulf %921, %853 : vector<2x16xf32>
    %923 = arith.addf %919, %922 : vector<2x16xf32>
    %c180 = arith.constant 180 : index
    %924 = memref.load %arg3[%c180] : memref<243xf32, #tpu.memory_space<smem>>
    %925 = vector.broadcast %924 : f32 to vector<2x16xf32>
    %926 = arith.mulf %925, %829 : vector<2x16xf32>
    %c181 = arith.constant 181 : index
    %927 = memref.load %arg3[%c181] : memref<243xf32, #tpu.memory_space<smem>>
    %928 = vector.broadcast %927 : f32 to vector<2x16xf32>
    %929 = arith.mulf %928, %832 : vector<2x16xf32>
    %930 = arith.addf %926, %929 : vector<2x16xf32>
    %c182 = arith.constant 182 : index
    %931 = memref.load %arg3[%c182] : memref<243xf32, #tpu.memory_space<smem>>
    %932 = vector.broadcast %931 : f32 to vector<2x16xf32>
    %933 = arith.mulf %932, %835 : vector<2x16xf32>
    %934 = arith.addf %930, %933 : vector<2x16xf32>
    %c183 = arith.constant 183 : index
    %935 = memref.load %arg3[%c183] : memref<243xf32, #tpu.memory_space<smem>>
    %936 = vector.broadcast %935 : f32 to vector<2x16xf32>
    %937 = arith.mulf %936, %838 : vector<2x16xf32>
    %938 = arith.addf %934, %937 : vector<2x16xf32>
    %c184 = arith.constant 184 : index
    %939 = memref.load %arg3[%c184] : memref<243xf32, #tpu.memory_space<smem>>
    %940 = vector.broadcast %939 : f32 to vector<2x16xf32>
    %941 = arith.mulf %940, %841 : vector<2x16xf32>
    %942 = arith.addf %938, %941 : vector<2x16xf32>
    %c185 = arith.constant 185 : index
    %943 = memref.load %arg3[%c185] : memref<243xf32, #tpu.memory_space<smem>>
    %944 = vector.broadcast %943 : f32 to vector<2x16xf32>
    %945 = arith.mulf %944, %844 : vector<2x16xf32>
    %946 = arith.addf %942, %945 : vector<2x16xf32>
    %c186 = arith.constant 186 : index
    %947 = memref.load %arg3[%c186] : memref<243xf32, #tpu.memory_space<smem>>
    %948 = vector.broadcast %947 : f32 to vector<2x16xf32>
    %949 = arith.mulf %948, %847 : vector<2x16xf32>
    %950 = arith.addf %946, %949 : vector<2x16xf32>
    %c187 = arith.constant 187 : index
    %951 = memref.load %arg3[%c187] : memref<243xf32, #tpu.memory_space<smem>>
    %952 = vector.broadcast %951 : f32 to vector<2x16xf32>
    %953 = arith.mulf %952, %850 : vector<2x16xf32>
    %954 = arith.addf %950, %953 : vector<2x16xf32>
    %c188 = arith.constant 188 : index
    %955 = memref.load %arg3[%c188] : memref<243xf32, #tpu.memory_space<smem>>
    %956 = vector.broadcast %955 : f32 to vector<2x16xf32>
    %957 = arith.mulf %956, %853 : vector<2x16xf32>
    %958 = arith.addf %954, %957 : vector<2x16xf32>
    %c189 = arith.constant 189 : index
    %959 = memref.load %arg3[%c189] : memref<243xf32, #tpu.memory_space<smem>>
    %960 = vector.broadcast %959 : f32 to vector<2x16xf32>
    %961 = arith.mulf %960, %829 : vector<2x16xf32>
    %c190 = arith.constant 190 : index
    %962 = memref.load %arg3[%c190] : memref<243xf32, #tpu.memory_space<smem>>
    %963 = vector.broadcast %962 : f32 to vector<2x16xf32>
    %964 = arith.mulf %963, %832 : vector<2x16xf32>
    %965 = arith.addf %961, %964 : vector<2x16xf32>
    %c191 = arith.constant 191 : index
    %966 = memref.load %arg3[%c191] : memref<243xf32, #tpu.memory_space<smem>>
    %967 = vector.broadcast %966 : f32 to vector<2x16xf32>
    %968 = arith.mulf %967, %835 : vector<2x16xf32>
    %969 = arith.addf %965, %968 : vector<2x16xf32>
    %c192 = arith.constant 192 : index
    %970 = memref.load %arg3[%c192] : memref<243xf32, #tpu.memory_space<smem>>
    %971 = vector.broadcast %970 : f32 to vector<2x16xf32>
    %972 = arith.mulf %971, %838 : vector<2x16xf32>
    %973 = arith.addf %969, %972 : vector<2x16xf32>
    %c193 = arith.constant 193 : index
    %974 = memref.load %arg3[%c193] : memref<243xf32, #tpu.memory_space<smem>>
    %975 = vector.broadcast %974 : f32 to vector<2x16xf32>
    %976 = arith.mulf %975, %841 : vector<2x16xf32>
    %977 = arith.addf %973, %976 : vector<2x16xf32>
    %c194 = arith.constant 194 : index
    %978 = memref.load %arg3[%c194] : memref<243xf32, #tpu.memory_space<smem>>
    %979 = vector.broadcast %978 : f32 to vector<2x16xf32>
    %980 = arith.mulf %979, %844 : vector<2x16xf32>
    %981 = arith.addf %977, %980 : vector<2x16xf32>
    %c195 = arith.constant 195 : index
    %982 = memref.load %arg3[%c195] : memref<243xf32, #tpu.memory_space<smem>>
    %983 = vector.broadcast %982 : f32 to vector<2x16xf32>
    %984 = arith.mulf %983, %847 : vector<2x16xf32>
    %985 = arith.addf %981, %984 : vector<2x16xf32>
    %c196 = arith.constant 196 : index
    %986 = memref.load %arg3[%c196] : memref<243xf32, #tpu.memory_space<smem>>
    %987 = vector.broadcast %986 : f32 to vector<2x16xf32>
    %988 = arith.mulf %987, %850 : vector<2x16xf32>
    %989 = arith.addf %985, %988 : vector<2x16xf32>
    %c197 = arith.constant 197 : index
    %990 = memref.load %arg3[%c197] : memref<243xf32, #tpu.memory_space<smem>>
    %991 = vector.broadcast %990 : f32 to vector<2x16xf32>
    %992 = arith.mulf %991, %853 : vector<2x16xf32>
    %993 = arith.addf %989, %992 : vector<2x16xf32>
    %c198 = arith.constant 198 : index
    %994 = memref.load %arg3[%c198] : memref<243xf32, #tpu.memory_space<smem>>
    %995 = vector.broadcast %994 : f32 to vector<2x16xf32>
    %996 = arith.mulf %995, %829 : vector<2x16xf32>
    %c199 = arith.constant 199 : index
    %997 = memref.load %arg3[%c199] : memref<243xf32, #tpu.memory_space<smem>>
    %998 = vector.broadcast %997 : f32 to vector<2x16xf32>
    %999 = arith.mulf %998, %832 : vector<2x16xf32>
    %1000 = arith.addf %996, %999 : vector<2x16xf32>
    %c200 = arith.constant 200 : index
    %1001 = memref.load %arg3[%c200] : memref<243xf32, #tpu.memory_space<smem>>
    %1002 = vector.broadcast %1001 : f32 to vector<2x16xf32>
    %1003 = arith.mulf %1002, %835 : vector<2x16xf32>
    %1004 = arith.addf %1000, %1003 : vector<2x16xf32>
    %c201 = arith.constant 201 : index
    %1005 = memref.load %arg3[%c201] : memref<243xf32, #tpu.memory_space<smem>>
    %1006 = vector.broadcast %1005 : f32 to vector<2x16xf32>
    %1007 = arith.mulf %1006, %838 : vector<2x16xf32>
    %1008 = arith.addf %1004, %1007 : vector<2x16xf32>
    %c202 = arith.constant 202 : index
    %1009 = memref.load %arg3[%c202] : memref<243xf32, #tpu.memory_space<smem>>
    %1010 = vector.broadcast %1009 : f32 to vector<2x16xf32>
    %1011 = arith.mulf %1010, %841 : vector<2x16xf32>
    %1012 = arith.addf %1008, %1011 : vector<2x16xf32>
    %c203 = arith.constant 203 : index
    %1013 = memref.load %arg3[%c203] : memref<243xf32, #tpu.memory_space<smem>>
    %1014 = vector.broadcast %1013 : f32 to vector<2x16xf32>
    %1015 = arith.mulf %1014, %844 : vector<2x16xf32>
    %1016 = arith.addf %1012, %1015 : vector<2x16xf32>
    %c204 = arith.constant 204 : index
    %1017 = memref.load %arg3[%c204] : memref<243xf32, #tpu.memory_space<smem>>
    %1018 = vector.broadcast %1017 : f32 to vector<2x16xf32>
    %1019 = arith.mulf %1018, %847 : vector<2x16xf32>
    %1020 = arith.addf %1016, %1019 : vector<2x16xf32>
    %c205 = arith.constant 205 : index
    %1021 = memref.load %arg3[%c205] : memref<243xf32, #tpu.memory_space<smem>>
    %1022 = vector.broadcast %1021 : f32 to vector<2x16xf32>
    %1023 = arith.mulf %1022, %850 : vector<2x16xf32>
    %1024 = arith.addf %1020, %1023 : vector<2x16xf32>
    %c206 = arith.constant 206 : index
    %1025 = memref.load %arg3[%c206] : memref<243xf32, #tpu.memory_space<smem>>
    %1026 = vector.broadcast %1025 : f32 to vector<2x16xf32>
    %1027 = arith.mulf %1026, %853 : vector<2x16xf32>
    %1028 = arith.addf %1024, %1027 : vector<2x16xf32>
    %c207 = arith.constant 207 : index
    %1029 = memref.load %arg3[%c207] : memref<243xf32, #tpu.memory_space<smem>>
    %1030 = vector.broadcast %1029 : f32 to vector<2x16xf32>
    %1031 = arith.mulf %1030, %829 : vector<2x16xf32>
    %c208 = arith.constant 208 : index
    %1032 = memref.load %arg3[%c208] : memref<243xf32, #tpu.memory_space<smem>>
    %1033 = vector.broadcast %1032 : f32 to vector<2x16xf32>
    %1034 = arith.mulf %1033, %832 : vector<2x16xf32>
    %1035 = arith.addf %1031, %1034 : vector<2x16xf32>
    %c209 = arith.constant 209 : index
    %1036 = memref.load %arg3[%c209] : memref<243xf32, #tpu.memory_space<smem>>
    %1037 = vector.broadcast %1036 : f32 to vector<2x16xf32>
    %1038 = arith.mulf %1037, %835 : vector<2x16xf32>
    %1039 = arith.addf %1035, %1038 : vector<2x16xf32>
    %c210 = arith.constant 210 : index
    %1040 = memref.load %arg3[%c210] : memref<243xf32, #tpu.memory_space<smem>>
    %1041 = vector.broadcast %1040 : f32 to vector<2x16xf32>
    %1042 = arith.mulf %1041, %838 : vector<2x16xf32>
    %1043 = arith.addf %1039, %1042 : vector<2x16xf32>
    %c211 = arith.constant 211 : index
    %1044 = memref.load %arg3[%c211] : memref<243xf32, #tpu.memory_space<smem>>
    %1045 = vector.broadcast %1044 : f32 to vector<2x16xf32>
    %1046 = arith.mulf %1045, %841 : vector<2x16xf32>
    %1047 = arith.addf %1043, %1046 : vector<2x16xf32>
    %c212 = arith.constant 212 : index
    %1048 = memref.load %arg3[%c212] : memref<243xf32, #tpu.memory_space<smem>>
    %1049 = vector.broadcast %1048 : f32 to vector<2x16xf32>
    %1050 = arith.mulf %1049, %844 : vector<2x16xf32>
    %1051 = arith.addf %1047, %1050 : vector<2x16xf32>
    %c213 = arith.constant 213 : index
    %1052 = memref.load %arg3[%c213] : memref<243xf32, #tpu.memory_space<smem>>
    %1053 = vector.broadcast %1052 : f32 to vector<2x16xf32>
    %1054 = arith.mulf %1053, %847 : vector<2x16xf32>
    %1055 = arith.addf %1051, %1054 : vector<2x16xf32>
    %c214 = arith.constant 214 : index
    %1056 = memref.load %arg3[%c214] : memref<243xf32, #tpu.memory_space<smem>>
    %1057 = vector.broadcast %1056 : f32 to vector<2x16xf32>
    %1058 = arith.mulf %1057, %850 : vector<2x16xf32>
    %1059 = arith.addf %1055, %1058 : vector<2x16xf32>
    %c215 = arith.constant 215 : index
    %1060 = memref.load %arg3[%c215] : memref<243xf32, #tpu.memory_space<smem>>
    %1061 = vector.broadcast %1060 : f32 to vector<2x16xf32>
    %1062 = arith.mulf %1061, %853 : vector<2x16xf32>
    %1063 = arith.addf %1059, %1062 : vector<2x16xf32>
    %c216 = arith.constant 216 : index
    %1064 = memref.load %arg3[%c216] : memref<243xf32, #tpu.memory_space<smem>>
    %1065 = vector.broadcast %1064 : f32 to vector<2x16xf32>
    %1066 = arith.mulf %1065, %829 : vector<2x16xf32>
    %c217 = arith.constant 217 : index
    %1067 = memref.load %arg3[%c217] : memref<243xf32, #tpu.memory_space<smem>>
    %1068 = vector.broadcast %1067 : f32 to vector<2x16xf32>
    %1069 = arith.mulf %1068, %832 : vector<2x16xf32>
    %1070 = arith.addf %1066, %1069 : vector<2x16xf32>
    %c218 = arith.constant 218 : index
    %1071 = memref.load %arg3[%c218] : memref<243xf32, #tpu.memory_space<smem>>
    %1072 = vector.broadcast %1071 : f32 to vector<2x16xf32>
    %1073 = arith.mulf %1072, %835 : vector<2x16xf32>
    %1074 = arith.addf %1070, %1073 : vector<2x16xf32>
    %c219 = arith.constant 219 : index
    %1075 = memref.load %arg3[%c219] : memref<243xf32, #tpu.memory_space<smem>>
    %1076 = vector.broadcast %1075 : f32 to vector<2x16xf32>
    %1077 = arith.mulf %1076, %838 : vector<2x16xf32>
    %1078 = arith.addf %1074, %1077 : vector<2x16xf32>
    %c220 = arith.constant 220 : index
    %1079 = memref.load %arg3[%c220] : memref<243xf32, #tpu.memory_space<smem>>
    %1080 = vector.broadcast %1079 : f32 to vector<2x16xf32>
    %1081 = arith.mulf %1080, %841 : vector<2x16xf32>
    %1082 = arith.addf %1078, %1081 : vector<2x16xf32>
    %c221 = arith.constant 221 : index
    %1083 = memref.load %arg3[%c221] : memref<243xf32, #tpu.memory_space<smem>>
    %1084 = vector.broadcast %1083 : f32 to vector<2x16xf32>
    %1085 = arith.mulf %1084, %844 : vector<2x16xf32>
    %1086 = arith.addf %1082, %1085 : vector<2x16xf32>
    %c222 = arith.constant 222 : index
    %1087 = memref.load %arg3[%c222] : memref<243xf32, #tpu.memory_space<smem>>
    %1088 = vector.broadcast %1087 : f32 to vector<2x16xf32>
    %1089 = arith.mulf %1088, %847 : vector<2x16xf32>
    %1090 = arith.addf %1086, %1089 : vector<2x16xf32>
    %c223 = arith.constant 223 : index
    %1091 = memref.load %arg3[%c223] : memref<243xf32, #tpu.memory_space<smem>>
    %1092 = vector.broadcast %1091 : f32 to vector<2x16xf32>
    %1093 = arith.mulf %1092, %850 : vector<2x16xf32>
    %1094 = arith.addf %1090, %1093 : vector<2x16xf32>
    %c224 = arith.constant 224 : index
    %1095 = memref.load %arg3[%c224] : memref<243xf32, #tpu.memory_space<smem>>
    %1096 = vector.broadcast %1095 : f32 to vector<2x16xf32>
    %1097 = arith.mulf %1096, %853 : vector<2x16xf32>
    %1098 = arith.addf %1094, %1097 : vector<2x16xf32>
    %c225 = arith.constant 225 : index
    %1099 = memref.load %arg3[%c225] : memref<243xf32, #tpu.memory_space<smem>>
    %1100 = vector.broadcast %1099 : f32 to vector<2x16xf32>
    %1101 = arith.mulf %1100, %829 : vector<2x16xf32>
    %c226 = arith.constant 226 : index
    %1102 = memref.load %arg3[%c226] : memref<243xf32, #tpu.memory_space<smem>>
    %1103 = vector.broadcast %1102 : f32 to vector<2x16xf32>
    %1104 = arith.mulf %1103, %832 : vector<2x16xf32>
    %1105 = arith.addf %1101, %1104 : vector<2x16xf32>
    %c227 = arith.constant 227 : index
    %1106 = memref.load %arg3[%c227] : memref<243xf32, #tpu.memory_space<smem>>
    %1107 = vector.broadcast %1106 : f32 to vector<2x16xf32>
    %1108 = arith.mulf %1107, %835 : vector<2x16xf32>
    %1109 = arith.addf %1105, %1108 : vector<2x16xf32>
    %c228 = arith.constant 228 : index
    %1110 = memref.load %arg3[%c228] : memref<243xf32, #tpu.memory_space<smem>>
    %1111 = vector.broadcast %1110 : f32 to vector<2x16xf32>
    %1112 = arith.mulf %1111, %838 : vector<2x16xf32>
    %1113 = arith.addf %1109, %1112 : vector<2x16xf32>
    %c229 = arith.constant 229 : index
    %1114 = memref.load %arg3[%c229] : memref<243xf32, #tpu.memory_space<smem>>
    %1115 = vector.broadcast %1114 : f32 to vector<2x16xf32>
    %1116 = arith.mulf %1115, %841 : vector<2x16xf32>
    %1117 = arith.addf %1113, %1116 : vector<2x16xf32>
    %c230 = arith.constant 230 : index
    %1118 = memref.load %arg3[%c230] : memref<243xf32, #tpu.memory_space<smem>>
    %1119 = vector.broadcast %1118 : f32 to vector<2x16xf32>
    %1120 = arith.mulf %1119, %844 : vector<2x16xf32>
    %1121 = arith.addf %1117, %1120 : vector<2x16xf32>
    %c231 = arith.constant 231 : index
    %1122 = memref.load %arg3[%c231] : memref<243xf32, #tpu.memory_space<smem>>
    %1123 = vector.broadcast %1122 : f32 to vector<2x16xf32>
    %1124 = arith.mulf %1123, %847 : vector<2x16xf32>
    %1125 = arith.addf %1121, %1124 : vector<2x16xf32>
    %c232 = arith.constant 232 : index
    %1126 = memref.load %arg3[%c232] : memref<243xf32, #tpu.memory_space<smem>>
    %1127 = vector.broadcast %1126 : f32 to vector<2x16xf32>
    %1128 = arith.mulf %1127, %850 : vector<2x16xf32>
    %1129 = arith.addf %1125, %1128 : vector<2x16xf32>
    %c233 = arith.constant 233 : index
    %1130 = memref.load %arg3[%c233] : memref<243xf32, #tpu.memory_space<smem>>
    %1131 = vector.broadcast %1130 : f32 to vector<2x16xf32>
    %1132 = arith.mulf %1131, %853 : vector<2x16xf32>
    %1133 = arith.addf %1129, %1132 : vector<2x16xf32>
    %c234 = arith.constant 234 : index
    %1134 = memref.load %arg3[%c234] : memref<243xf32, #tpu.memory_space<smem>>
    %1135 = vector.broadcast %1134 : f32 to vector<2x16xf32>
    %1136 = arith.mulf %1135, %829 : vector<2x16xf32>
    %c235 = arith.constant 235 : index
    %1137 = memref.load %arg3[%c235] : memref<243xf32, #tpu.memory_space<smem>>
    %1138 = vector.broadcast %1137 : f32 to vector<2x16xf32>
    %1139 = arith.mulf %1138, %832 : vector<2x16xf32>
    %1140 = arith.addf %1136, %1139 : vector<2x16xf32>
    %c236 = arith.constant 236 : index
    %1141 = memref.load %arg3[%c236] : memref<243xf32, #tpu.memory_space<smem>>
    %1142 = vector.broadcast %1141 : f32 to vector<2x16xf32>
    %1143 = arith.mulf %1142, %835 : vector<2x16xf32>
    %1144 = arith.addf %1140, %1143 : vector<2x16xf32>
    %c237 = arith.constant 237 : index
    %1145 = memref.load %arg3[%c237] : memref<243xf32, #tpu.memory_space<smem>>
    %1146 = vector.broadcast %1145 : f32 to vector<2x16xf32>
    %1147 = arith.mulf %1146, %838 : vector<2x16xf32>
    %1148 = arith.addf %1144, %1147 : vector<2x16xf32>
    %c238 = arith.constant 238 : index
    %1149 = memref.load %arg3[%c238] : memref<243xf32, #tpu.memory_space<smem>>
    %1150 = vector.broadcast %1149 : f32 to vector<2x16xf32>
    %1151 = arith.mulf %1150, %841 : vector<2x16xf32>
    %1152 = arith.addf %1148, %1151 : vector<2x16xf32>
    %c239 = arith.constant 239 : index
    %1153 = memref.load %arg3[%c239] : memref<243xf32, #tpu.memory_space<smem>>
    %1154 = vector.broadcast %1153 : f32 to vector<2x16xf32>
    %1155 = arith.mulf %1154, %844 : vector<2x16xf32>
    %1156 = arith.addf %1152, %1155 : vector<2x16xf32>
    %c240 = arith.constant 240 : index
    %1157 = memref.load %arg3[%c240] : memref<243xf32, #tpu.memory_space<smem>>
    %1158 = vector.broadcast %1157 : f32 to vector<2x16xf32>
    %1159 = arith.mulf %1158, %847 : vector<2x16xf32>
    %1160 = arith.addf %1156, %1159 : vector<2x16xf32>
    %c241 = arith.constant 241 : index
    %1161 = memref.load %arg3[%c241] : memref<243xf32, #tpu.memory_space<smem>>
    %1162 = vector.broadcast %1161 : f32 to vector<2x16xf32>
    %1163 = arith.mulf %1162, %850 : vector<2x16xf32>
    %1164 = arith.addf %1160, %1163 : vector<2x16xf32>
    %c242 = arith.constant 242 : index
    %1165 = memref.load %arg3[%c242] : memref<243xf32, #tpu.memory_space<smem>>
    %1166 = vector.broadcast %1165 : f32 to vector<2x16xf32>
    %1167 = arith.mulf %1166, %853 : vector<2x16xf32>
    %1168 = arith.addf %1164, %1167 : vector<2x16xf32>
    %1169 = tpu.concatenate %888, %923, %958, %993, %1028, %1063, %1098, %1133, %1168 in 0 : vector<2x16xf32>, vector<2x16xf32>, vector<2x16xf32>, vector<2x16xf32>, vector<2x16xf32>, vector<2x16xf32>, vector<2x16xf32>, vector<2x16xf32>, vector<2x16xf32> -> vector<18x16xf32>
    %cst_48 = arith.constant dense<0.000000e+00> : vector<18x16xf32>
    %1170 = tpu.matmul %1169, %0, %cst_48 {dimension_numbers = #tpu.dot_dimension_numbers<[1], [0], [0], [1], [0, 0, 1, 1], [], []>} : vector<18x16xf32>, vector<16x16xf32>, vector<18x16xf32> -> vector<18x16xf32>
    %1171 = vector.extract_strided_slice %1170 {offsets = [0, 0], sizes = [2, 16], strides = [1, 1]} : vector<18x16xf32> to vector<2x16xf32>
    %c18_49 = arith.constant 18 : index
    %1172 = memref.load %arg4[%c18_49] : memref<27xf32, #tpu.memory_space<smem>>
    %1173 = vector.broadcast %1172 : f32 to vector<2x16xf32>
    %1174 = arith.addf %1171, %1173 : vector<2x16xf32>
    %1175 = vector.extract_strided_slice %1170 {offsets = [2, 0], sizes = [2, 16], strides = [1, 1]} : vector<18x16xf32> to vector<2x16xf32>
    %c19_50 = arith.constant 19 : index
    %1176 = memref.load %arg4[%c19_50] : memref<27xf32, #tpu.memory_space<smem>>
    %1177 = vector.broadcast %1176 : f32 to vector<2x16xf32>
    %1178 = arith.addf %1175, %1177 : vector<2x16xf32>
    %1179 = vector.extract_strided_slice %1170 {offsets = [4, 0], sizes = [2, 16], strides = [1, 1]} : vector<18x16xf32> to vector<2x16xf32>
    %c20_51 = arith.constant 20 : index
    %1180 = memref.load %arg4[%c20_51] : memref<27xf32, #tpu.memory_space<smem>>
    %1181 = vector.broadcast %1180 : f32 to vector<2x16xf32>
    %1182 = arith.addf %1179, %1181 : vector<2x16xf32>
    %1183 = vector.extract_strided_slice %1170 {offsets = [6, 0], sizes = [2, 16], strides = [1, 1]} : vector<18x16xf32> to vector<2x16xf32>
    %c21_52 = arith.constant 21 : index
    %1184 = memref.load %arg4[%c21_52] : memref<27xf32, #tpu.memory_space<smem>>
    %1185 = vector.broadcast %1184 : f32 to vector<2x16xf32>
    %1186 = arith.addf %1183, %1185 : vector<2x16xf32>
    %1187 = vector.extract_strided_slice %1170 {offsets = [8, 0], sizes = [2, 16], strides = [1, 1]} : vector<18x16xf32> to vector<2x16xf32>
    %c22_53 = arith.constant 22 : index
    %1188 = memref.load %arg4[%c22_53] : memref<27xf32, #tpu.memory_space<smem>>
    %1189 = vector.broadcast %1188 : f32 to vector<2x16xf32>
    %1190 = arith.addf %1187, %1189 : vector<2x16xf32>
    %1191 = vector.extract_strided_slice %1170 {offsets = [10, 0], sizes = [2, 16], strides = [1, 1]} : vector<18x16xf32> to vector<2x16xf32>
    %c23_54 = arith.constant 23 : index
    %1192 = memref.load %arg4[%c23_54] : memref<27xf32, #tpu.memory_space<smem>>
    %1193 = vector.broadcast %1192 : f32 to vector<2x16xf32>
    %1194 = arith.addf %1191, %1193 : vector<2x16xf32>
    %1195 = vector.extract_strided_slice %1170 {offsets = [12, 0], sizes = [2, 16], strides = [1, 1]} : vector<18x16xf32> to vector<2x16xf32>
    %c24_55 = arith.constant 24 : index
    %1196 = memref.load %arg4[%c24_55] : memref<27xf32, #tpu.memory_space<smem>>
    %1197 = vector.broadcast %1196 : f32 to vector<2x16xf32>
    %1198 = arith.addf %1195, %1197 : vector<2x16xf32>
    %1199 = vector.extract_strided_slice %1170 {offsets = [14, 0], sizes = [2, 16], strides = [1, 1]} : vector<18x16xf32> to vector<2x16xf32>
    %c25_56 = arith.constant 25 : index
    %1200 = memref.load %arg4[%c25_56] : memref<27xf32, #tpu.memory_space<smem>>
    %1201 = vector.broadcast %1200 : f32 to vector<2x16xf32>
    %1202 = arith.addf %1199, %1201 : vector<2x16xf32>
    %1203 = vector.extract_strided_slice %1170 {offsets = [16, 0], sizes = [2, 16], strides = [1, 1]} : vector<18x16xf32> to vector<2x16xf32>
    %c26_57 = arith.constant 26 : index
    %1204 = memref.load %arg4[%c26_57] : memref<27xf32, #tpu.memory_space<smem>>
    %1205 = vector.broadcast %1204 : f32 to vector<2x16xf32>
    %1206 = arith.addf %1203, %1205 : vector<2x16xf32>
    %1207 = arith.addf %1174, %1178 : vector<2x16xf32>
    %1208 = arith.addf %1207, %1182 : vector<2x16xf32>
    %1209 = arith.addf %1208, %1186 : vector<2x16xf32>
    %1210 = arith.addf %1209, %1190 : vector<2x16xf32>
    %1211 = arith.addf %1210, %1194 : vector<2x16xf32>
    %1212 = arith.addf %1211, %1198 : vector<2x16xf32>
    %1213 = arith.addf %1212, %1202 : vector<2x16xf32>
    %1214 = arith.addf %1213, %1206 : vector<2x16xf32>
    %cst_58 = arith.constant 0.111111112 : f32
    %1215 = vector.broadcast %cst_58 : f32 to vector<2x16xf32>
    %1216 = arith.mulf %1214, %1215 : vector<2x16xf32>
    %1217 = arith.subf %1174, %1216 : vector<2x16xf32>
    %1218 = arith.subf %1178, %1216 : vector<2x16xf32>
    %1219 = arith.subf %1182, %1216 : vector<2x16xf32>
    %1220 = arith.subf %1186, %1216 : vector<2x16xf32>
    %1221 = arith.subf %1190, %1216 : vector<2x16xf32>
    %1222 = arith.subf %1194, %1216 : vector<2x16xf32>
    %1223 = arith.subf %1198, %1216 : vector<2x16xf32>
    %1224 = arith.subf %1202, %1216 : vector<2x16xf32>
    %1225 = arith.subf %1206, %1216 : vector<2x16xf32>
    %1226 = arith.mulf %1217, %1217 : vector<2x16xf32>
    %1227 = arith.mulf %1218, %1218 : vector<2x16xf32>
    %1228 = arith.addf %1226, %1227 : vector<2x16xf32>
    %1229 = arith.mulf %1219, %1219 : vector<2x16xf32>
    %1230 = arith.addf %1228, %1229 : vector<2x16xf32>
    %1231 = arith.mulf %1220, %1220 : vector<2x16xf32>
    %1232 = arith.addf %1230, %1231 : vector<2x16xf32>
    %1233 = arith.mulf %1221, %1221 : vector<2x16xf32>
    %1234 = arith.addf %1232, %1233 : vector<2x16xf32>
    %1235 = arith.mulf %1222, %1222 : vector<2x16xf32>
    %1236 = arith.addf %1234, %1235 : vector<2x16xf32>
    %1237 = arith.mulf %1223, %1223 : vector<2x16xf32>
    %1238 = arith.addf %1236, %1237 : vector<2x16xf32>
    %1239 = arith.mulf %1224, %1224 : vector<2x16xf32>
    %1240 = arith.addf %1238, %1239 : vector<2x16xf32>
    %1241 = arith.mulf %1225, %1225 : vector<2x16xf32>
    %1242 = arith.addf %1240, %1241 : vector<2x16xf32>
    %cst_59 = arith.constant 0.111111112 : f32
    %1243 = vector.broadcast %cst_59 : f32 to vector<2x16xf32>
    %1244 = arith.mulf %1242, %1243 : vector<2x16xf32>
    %cst_60 = arith.constant 9.99999974E-6 : f32
    %1245 = vector.broadcast %cst_60 : f32 to vector<2x16xf32>
    %1246 = arith.addf %1244, %1245 : vector<2x16xf32>
    %1247 = math.rsqrt %1246 : vector<2x16xf32>
    %1248 = arith.mulf %1217, %1247 : vector<2x16xf32>
    %cst_61 = arith.constant 0.000000e+00 : f32
    %1249 = vector.broadcast %cst_61 : f32 to vector<2x16xf32>
    %1250 = arith.maximumf %1248, %1249 : vector<2x16xf32>
    %1251 = arith.mulf %1218, %1247 : vector<2x16xf32>
    %cst_62 = arith.constant 0.000000e+00 : f32
    %1252 = vector.broadcast %cst_62 : f32 to vector<2x16xf32>
    %1253 = arith.maximumf %1251, %1252 : vector<2x16xf32>
    %1254 = arith.mulf %1219, %1247 : vector<2x16xf32>
    %cst_63 = arith.constant 0.000000e+00 : f32
    %1255 = vector.broadcast %cst_63 : f32 to vector<2x16xf32>
    %1256 = arith.maximumf %1254, %1255 : vector<2x16xf32>
    %1257 = arith.mulf %1220, %1247 : vector<2x16xf32>
    %cst_64 = arith.constant 0.000000e+00 : f32
    %1258 = vector.broadcast %cst_64 : f32 to vector<2x16xf32>
    %1259 = arith.maximumf %1257, %1258 : vector<2x16xf32>
    %1260 = arith.mulf %1221, %1247 : vector<2x16xf32>
    %cst_65 = arith.constant 0.000000e+00 : f32
    %1261 = vector.broadcast %cst_65 : f32 to vector<2x16xf32>
    %1262 = arith.maximumf %1260, %1261 : vector<2x16xf32>
    %1263 = arith.mulf %1222, %1247 : vector<2x16xf32>
    %cst_66 = arith.constant 0.000000e+00 : f32
    %1264 = vector.broadcast %cst_66 : f32 to vector<2x16xf32>
    %1265 = arith.maximumf %1263, %1264 : vector<2x16xf32>
    %1266 = arith.mulf %1223, %1247 : vector<2x16xf32>
    %cst_67 = arith.constant 0.000000e+00 : f32
    %1267 = vector.broadcast %cst_67 : f32 to vector<2x16xf32>
    %1268 = arith.maximumf %1266, %1267 : vector<2x16xf32>
    %1269 = arith.mulf %1224, %1247 : vector<2x16xf32>
    %cst_68 = arith.constant 0.000000e+00 : f32
    %1270 = vector.broadcast %cst_68 : f32 to vector<2x16xf32>
    %1271 = arith.maximumf %1269, %1270 : vector<2x16xf32>
    %1272 = arith.mulf %1225, %1247 : vector<2x16xf32>
    %cst_69 = arith.constant 0.000000e+00 : f32
    %1273 = vector.broadcast %cst_69 : f32 to vector<2x16xf32>
    %1274 = arith.maximumf %1272, %1273 : vector<2x16xf32>
    %c0_70 = arith.constant 0 : index
    %c0_71 = arith.constant 0 : index
    %c0_72 = arith.constant 0 : index
    %1275 = vector.load %arg5[%c0_70, %c0_71, %c0_72] : memref<9x16x128xf32, #tpu.memory_space<vmem>>, vector<1x16x128xf32>
    %1276 = vector.shape_cast %1275 : vector<1x16x128xf32> to vector<16x128xf32>
    %cst_73 = arith.constant dense<0.000000e+00> : vector<2x128xf32>
    %1277 = tpu.matmul %1250, %1276, %cst_73 {dimension_numbers = #tpu.dot_dimension_numbers<[1], [0], [0], [1], [0, 0, 1, 1], [], []>} : vector<2x16xf32>, vector<16x128xf32>, vector<2x128xf32> -> vector<2x128xf32>
    %c1_74 = arith.constant 1 : index
    %c0_75 = arith.constant 0 : index
    %c0_76 = arith.constant 0 : index
    %1278 = vector.load %arg5[%c1_74, %c0_75, %c0_76] : memref<9x16x128xf32, #tpu.memory_space<vmem>>, vector<1x16x128xf32>
    %1279 = vector.shape_cast %1278 : vector<1x16x128xf32> to vector<16x128xf32>
    %cst_77 = arith.constant dense<0.000000e+00> : vector<2x128xf32>
    %1280 = tpu.matmul %1253, %1279, %cst_77 {dimension_numbers = #tpu.dot_dimension_numbers<[1], [0], [0], [1], [0, 0, 1, 1], [], []>} : vector<2x16xf32>, vector<16x128xf32>, vector<2x128xf32> -> vector<2x128xf32>
    %1281 = arith.addf %1277, %1280 : vector<2x128xf32>
    %c2_78 = arith.constant 2 : index
    %c0_79 = arith.constant 0 : index
    %c0_80 = arith.constant 0 : index
    %1282 = vector.load %arg5[%c2_78, %c0_79, %c0_80] : memref<9x16x128xf32, #tpu.memory_space<vmem>>, vector<1x16x128xf32>
    %1283 = vector.shape_cast %1282 : vector<1x16x128xf32> to vector<16x128xf32>
    %cst_81 = arith.constant dense<0.000000e+00> : vector<2x128xf32>
    %1284 = tpu.matmul %1256, %1283, %cst_81 {dimension_numbers = #tpu.dot_dimension_numbers<[1], [0], [0], [1], [0, 0, 1, 1], [], []>} : vector<2x16xf32>, vector<16x128xf32>, vector<2x128xf32> -> vector<2x128xf32>
    %1285 = arith.addf %1281, %1284 : vector<2x128xf32>
    %c3_82 = arith.constant 3 : index
    %c0_83 = arith.constant 0 : index
    %c0_84 = arith.constant 0 : index
    %1286 = vector.load %arg5[%c3_82, %c0_83, %c0_84] : memref<9x16x128xf32, #tpu.memory_space<vmem>>, vector<1x16x128xf32>
    %1287 = vector.shape_cast %1286 : vector<1x16x128xf32> to vector<16x128xf32>
    %cst_85 = arith.constant dense<0.000000e+00> : vector<2x128xf32>
    %1288 = tpu.matmul %1259, %1287, %cst_85 {dimension_numbers = #tpu.dot_dimension_numbers<[1], [0], [0], [1], [0, 0, 1, 1], [], []>} : vector<2x16xf32>, vector<16x128xf32>, vector<2x128xf32> -> vector<2x128xf32>
    %1289 = arith.addf %1285, %1288 : vector<2x128xf32>
    %c4_86 = arith.constant 4 : index
    %c0_87 = arith.constant 0 : index
    %c0_88 = arith.constant 0 : index
    %1290 = vector.load %arg5[%c4_86, %c0_87, %c0_88] : memref<9x16x128xf32, #tpu.memory_space<vmem>>, vector<1x16x128xf32>
    %1291 = vector.shape_cast %1290 : vector<1x16x128xf32> to vector<16x128xf32>
    %cst_89 = arith.constant dense<0.000000e+00> : vector<2x128xf32>
    %1292 = tpu.matmul %1262, %1291, %cst_89 {dimension_numbers = #tpu.dot_dimension_numbers<[1], [0], [0], [1], [0, 0, 1, 1], [], []>} : vector<2x16xf32>, vector<16x128xf32>, vector<2x128xf32> -> vector<2x128xf32>
    %1293 = arith.addf %1289, %1292 : vector<2x128xf32>
    %c5_90 = arith.constant 5 : index
    %c0_91 = arith.constant 0 : index
    %c0_92 = arith.constant 0 : index
    %1294 = vector.load %arg5[%c5_90, %c0_91, %c0_92] : memref<9x16x128xf32, #tpu.memory_space<vmem>>, vector<1x16x128xf32>
    %1295 = vector.shape_cast %1294 : vector<1x16x128xf32> to vector<16x128xf32>
    %cst_93 = arith.constant dense<0.000000e+00> : vector<2x128xf32>
    %1296 = tpu.matmul %1265, %1295, %cst_93 {dimension_numbers = #tpu.dot_dimension_numbers<[1], [0], [0], [1], [0, 0, 1, 1], [], []>} : vector<2x16xf32>, vector<16x128xf32>, vector<2x128xf32> -> vector<2x128xf32>
    %1297 = arith.addf %1293, %1296 : vector<2x128xf32>
    %c6_94 = arith.constant 6 : index
    %c0_95 = arith.constant 0 : index
    %c0_96 = arith.constant 0 : index
    %1298 = vector.load %arg5[%c6_94, %c0_95, %c0_96] : memref<9x16x128xf32, #tpu.memory_space<vmem>>, vector<1x16x128xf32>
    %1299 = vector.shape_cast %1298 : vector<1x16x128xf32> to vector<16x128xf32>
    %cst_97 = arith.constant dense<0.000000e+00> : vector<2x128xf32>
    %1300 = tpu.matmul %1268, %1299, %cst_97 {dimension_numbers = #tpu.dot_dimension_numbers<[1], [0], [0], [1], [0, 0, 1, 1], [], []>} : vector<2x16xf32>, vector<16x128xf32>, vector<2x128xf32> -> vector<2x128xf32>
    %1301 = arith.addf %1297, %1300 : vector<2x128xf32>
    %c7_98 = arith.constant 7 : index
    %c0_99 = arith.constant 0 : index
    %c0_100 = arith.constant 0 : index
    %1302 = vector.load %arg5[%c7_98, %c0_99, %c0_100] : memref<9x16x128xf32, #tpu.memory_space<vmem>>, vector<1x16x128xf32>
    %1303 = vector.shape_cast %1302 : vector<1x16x128xf32> to vector<16x128xf32>
    %cst_101 = arith.constant dense<0.000000e+00> : vector<2x128xf32>
    %1304 = tpu.matmul %1271, %1303, %cst_101 {dimension_numbers = #tpu.dot_dimension_numbers<[1], [0], [0], [1], [0, 0, 1, 1], [], []>} : vector<2x16xf32>, vector<16x128xf32>, vector<2x128xf32> -> vector<2x128xf32>
    %1305 = arith.addf %1301, %1304 : vector<2x128xf32>
    %c8_102 = arith.constant 8 : index
    %c0_103 = arith.constant 0 : index
    %c0_104 = arith.constant 0 : index
    %1306 = vector.load %arg5[%c8_102, %c0_103, %c0_104] : memref<9x16x128xf32, #tpu.memory_space<vmem>>, vector<1x16x128xf32>
    %1307 = vector.shape_cast %1306 : vector<1x16x128xf32> to vector<16x128xf32>
    %cst_105 = arith.constant dense<0.000000e+00> : vector<2x128xf32>
    %1308 = tpu.matmul %1274, %1307, %cst_105 {dimension_numbers = #tpu.dot_dimension_numbers<[1], [0], [0], [1], [0, 0, 1, 1], [], []>} : vector<2x16xf32>, vector<16x128xf32>, vector<2x128xf32> -> vector<2x128xf32>
    %1309 = arith.addf %1305, %1308 : vector<2x128xf32>
    %c0_106 = arith.constant 0 : index
    %c0_107 = arith.constant 0 : index
    %1310 = vector.load %arg6[%c0_106, %c0_107] : memref<1x128xf32, #tpu.memory_space<vmem>>, vector<1x128xf32>
    %1311 = vector.broadcast %1310 : vector<1x128xf32> to vector<2x128xf32>
    %1312 = arith.addf %1309, %1311 : vector<2x128xf32>
    %c0_108 = arith.constant 0 : index
    %c0_109 = arith.constant 0 : index
    %c0_110 = arith.constant 0 : index
    %1313 = vector.load %arg7[%c0_108, %c0_109, %c0_110] : memref<1x2x128xf32, #tpu.memory_space<vmem>>, vector<1x2x128xf32>
    %1314 = vector.shape_cast %1313 : vector<1x2x128xf32> to vector<2x128xf32>
    %1315 = vector.shape_cast %1312 : vector<2x128xf32> to vector<1x2x128xf32>
    tpu.vector_store %arg7[%c0_108, %c0_109, %c0_110], %1315 {strides = array<i32>} : memref<1x2x128xf32, #tpu.memory_space<vmem>>, vector<1x2x128xf32>,
    return
  }
  func.func @transform_0(%arg0: i32) -> (i32, i32, i32) {
    %c0_i32 = arith.constant 0 : i32
    %c0_i32_0 = arith.constant 0 : i32
    %c0_i32_1 = arith.constant 0 : i32
    return %arg0, %c0_i32, %c0_i32_0 : i32, i32, i32
  }
  func.func @transform_1(%arg0: i32) -> (i32, i32) {
    %c0_i32 = arith.constant 0 : i32
    %c0_i32_0 = arith.constant 0 : i32
    %c0_i32_1 = arith.constant 0 : i32
    return %c0_i32, %c0_i32_0 : i32, i32
  }
  func.func @transform_2(%arg0: i32) -> i32 {
    %c0_i32 = arith.constant 0 : i32
    %c0_i32_0 = arith.constant 0 : i32
    return %c0_i32 : i32
  }
  func.func @transform_3(%arg0: i32) -> i32 {
    %c0_i32 = arith.constant 0 : i32
    %c0_i32_0 = arith.constant 0 : i32
    return %c0_i32 : i32
  }
  func.func @transform_4(%arg0: i32) -> (i32, i32, i32) {
    %c0_i32 = arith.constant 0 : i32
    %c0_i32_0 = arith.constant 0 : i32
    %c0_i32_1 = arith.constant 0 : i32
    %c0_i32_2 = arith.constant 0 : i32
    return %c0_i32, %c0_i32_0, %c0_i32_1 : i32, i32, i32
  }
  func.func @transform_5(%arg0: i32) -> (i32, i32) {
    %c0_i32 = arith.constant 0 : i32
    %c0_i32_0 = arith.constant 0 : i32
    %c0_i32_1 = arith.constant 0 : i32
    return %c0_i32, %c0_i32_0 : i32, i32
  }
  func.func @transform_6(%arg0: i32) -> (i32, i32, i32) {
    %c0_i32 = arith.constant 0 : i32
    %c0_i32_0 = arith.constant 0 : i32
    %c0_i32_1 = arith.constant 0 : i32
    return %arg0, %c0_i32, %c0_i32_0 : i32, i32, i32
  }
}

</mosaic_0001>

<llo_original>
// kernel: tpu_custom_call.1
$region0: #{tpu_custom_call.1}
  #allocation0 [shape = 'u32[]', space=smem, size = 0x4, offset = 0x4, fixed_abs, tag = 'smem constant byte address 0x4 - core index']
  #allocation1 [shape = 'u32[72,128]{1,0:T(1,128)}', space=vmem, size = 0x9000, scoped, tag = 'internal scratch']
  %s0 = inlined_call_operand.vmem [shape: f32[2,18,16], index: 0, kind: input, shape index: {}]
  %s1 = inlined_call_operand.vmem [shape: f32[16,16], index: 1, kind: input, shape index: {}]
  %s2 = inlined_call_operand.vmem [shape: f32[243], index: 2, kind: input, shape index: {}]
  %s3 = inlined_call_operand.vmem [shape: f32[27], index: 3, kind: input, shape index: {}]
  %s4 = inlined_call_operand.hbm [shape: f32[9,16,128], index: 4, kind: input, shape index: {}]
  %s5 = inlined_call_operand.vmem [shape: f32[1,128], index: 5, kind: input, shape index: {}]
  %s6 = inlined_call_operand.hbm [shape: f32[2,2,128], index: 6, kind: output, shape index: {}]
  %s7 = sld [smem:[#allocation0]]
  $region69: #{tpu_custom_call.1} parent=0
    _
  %s9 = ssub.s32 1, %s7
  %s10 = scalar_select 0, %s9, %s7
  $region1: #{tpu_custom_call.1} parent=0
    #allocation2 [shape = 'u8[1024]{0}', space=smem, size = 0x400, scoped, tag = 'input window, operand 2, single buffered']
    #allocation3 [shape = 's32[2]{0}', space=sflag, size = 0x8, scoped, tag = 'scoped memory for tpu_custom_call.1']
    #allocation4 [shape = 's32[2]{0}', space=sflag, size = 0x8, scoped, tag = 'scoped memory for tpu_custom_call.1']
    #allocation5 [shape = 's32[2]{0}', space=sflag, size = 0x8, scoped, tag = 'scoped memory for tpu_custom_call.1']
    #allocation6 [shape = 'u8[512]{0}', space=smem, size = 0x200, scoped, tag = 'input window, operand 3, single buffered']
    #allocation7 [shape = 's32[1]{0}', space=sflag, size = 0x4, scoped, tag = 'scoped memory for tpu_custom_call.1']
    #allocation8 [shape = 'u8[73728]{0}', space=vmem, size = 0x12000, scoped, tag = 'input window, operand 4, single buffered']
    #allocation9 [shape = 'u8[2048]{0}', space=vmem, size = 0x800, scoped, tag = 'output window, operand 0']
    %11 = vsyncpa [#allocation5], 0
    %12 = vsyncpa [#allocation7], 0
    %13 = vsyncpa [#allocation3], 0
    %14 = vsyncpa [#allocation4], 0
    %s15 = scalar_lea.sflag [#allocation4], 1
    %16 = vsyncpa %s15, 0
    loop: start=0, step=1, limit=4
    $region2: #{tpu_custom_call.1} parent=1 // loop_pre_header
      _
    $region3: #{tpu_custom_call.1} parent=1 // loop_header
      %s18 = sphi 0, %s22
      %p19 = scmp.ge.s32.totalorder %s18, 4
      %s28 = sphi 0, %s30
      %s31 = sphi 0, %s28
      %s32 = sphi 0, %s31
      %s48 = sphi 0, %s32
      %s52 = sphi 0, %s52
      %s54 = sphi 0, %s52
      %s55 = sphi 0, %s54
      %s69 = sphi 0, %s55
      %s73 = sphi 0, %s73
      %s75 = sphi 0, %s73
      %s76 = sphi 0, %s75
      %s90 = sphi 0, %s76
      %s94 = sphi 0, %s94
      %s96 = sphi 0, %s94
      %s97 = sphi 0, %s96
      %s111 = sphi 0, %s97
      %s115 = sphi 0, %s115
      %s117 = sphi 0, %s115
      %s118 = sphi 0, %s117
      %s132 = sphi 0, %s118
      %s136 = sphi 0, %s136
      %s138 = sphi 0, %s136
      %s139 = sphi 0, %s138
      %s153 = sphi 0, %s139
      %s159 = sphi 0, %s161
      %s162 = sphi 0, %s159
      %s163 = sphi 0, %s162
      %s179 = sphi 0, %s163
    $region4: #{tpu_custom_call.1} parent=1 // loop_header_branch
      %21 = sbr.rel (%p19) target = $region8
    $region5: #{tpu_custom_call.1} parent=1 // loop_body
      %s23 = ssub.s32 %s18, 1
      %s24 = ssub.s32 %s18, 2
      %s25 = sadd.s32 %s18, 1
      %s26 = ssub.s32 %s18, %s25
      %p27 = scmp.eq.s32.totalorder %s26, 0
      %s29 = sadd.s32 %s28, 1
      %s30 = scalar_select %p27, %s28, %s29
      %p33 = pneg %p27
      %p34 = scmp.eq.s32.totalorder %s18, 1
      %p35 = por %p33, %p34
      %p36 = scmp.ne.s32.totalorder %s28, %s31
      %p37 = scmp.eq.s32.totalorder %s18, 0
      %p38 = por %p36, %p37
      %p39 = scmp.ne.s32.totalorder %s28, %s31
      %p40 = scmp.eq.s32.totalorder %s23, 1
      %p41 = por %p39, %p40
      %p42 = scmp.ne.s32.totalorder %s31, %s32
      %p43 = scmp.eq.s32.totalorder %s23, 0
      %p44 = por %p42, %p43
      %p45 = scmp.ne.s32.totalorder %s31, %s32
      %p46 = scmp.eq.s32.totalorder %s24, 1
      %p47 = por %p45, %p46
      %p49 = scmp.ne.s32.totalorder %s32, %s48
      %p50 = scmp.eq.s32.totalorder %s24, 0
      %p51 = por %p49, %p50
      %s53 = sadd.s32 %s52, 1
      %p56 = scmp.eq.s32.totalorder %s18, 1
      %p57 = scmp.ne.s32.totalorder %s52, %s54
      %p58 = scmp.eq.s32.totalorder %s18, 0
      %p59 = por %p57, %p58
      %p60 = scmp.ne.s32.totalorder %s52, %s54
      %p61 = scmp.eq.s32.totalorder %s23, 1
      %p62 = por %p60, %p61
      %p63 = scmp.ne.s32.totalorder %s54, %s55
      %p64 = scmp.eq.s32.totalorder %s23, 0
      %p65 = por %p63, %p64
      %p66 = scmp.ne.s32.totalorder %s54, %s55
      %p67 = scmp.eq.s32.totalorder %s24, 1
      %p68 = por %p66, %p67
      %p70 = scmp.ne.s32.totalorder %s55, %s69
      %p71 = scmp.eq.s32.totalorder %s24, 0
      %p72 = por %p70, %p71
      %s74 = sadd.s32 %s73, 1
      %p77 = scmp.eq.s32.totalorder %s18, 1
      %p78 = scmp.ne.s32.totalorder %s73, %s75
      %p79 = scmp.eq.s32.totalorder %s18, 0
      %p80 = por %p78, %p79
      %p81 = scmp.ne.s32.totalorder %s73, %s75
      %p82 = scmp.eq.s32.totalorder %s23, 1
      %p83 = por %p81, %p82
      %p84 = scmp.ne.s32.totalorder %s75, %s76
      %p85 = scmp.eq.s32.totalorder %s23, 0
      %p86 = por %p84, %p85
      %p87 = scmp.ne.s32.totalorder %s75, %s76
      %p88 = scmp.eq.s32.totalorder %s24, 1
      %p89 = por %p87, %p88
      %p91 = scmp.ne.s32.totalorder %s76, %s90
      %p92 = scmp.eq.s32.totalorder %s24, 0
      %p93 = por %p91, %p92
      %s95 = sadd.s32 %s94, 1
      %p98 = scmp.eq.s32.totalorder %s18, 1
      %p99 = scmp.ne.s32.totalorder %s94, %s96
      %p100 = scmp.eq.s32.totalorder %s18, 0
      %p101 = por %p99, %p100
      %p102 = scmp.ne.s32.totalorder %s94, %s96
      %p103 = scmp.eq.s32.totalorder %s23, 1
      %p104 = por %p102, %p103
      %p105 = scmp.ne.s32.totalorder %s96, %s97
      %p106 = scmp.eq.s32.totalorder %s23, 0
      %p107 = por %p105, %p106
      %p108 = scmp.ne.s32.totalorder %s96, %s97
      %p109 = scmp.eq.s32.totalorder %s24, 1
      %p110 = por %p108, %p109
      %p112 = scmp.ne.s32.totalorder %s97, %s111
      %p113 = scmp.eq.s32.totalorder %s24, 0
      %p114 = por %p112, %p113
      %s116 = sadd.s32 %s115, 1
      %p119 = scmp.eq.s32.totalorder %s18, 1
      %p120 = scmp.ne.s32.totalorder %s115, %s117
      %p121 = scmp.eq.s32.totalorder %s18, 0
      %p122 = por %p120, %p121
      %p123 = scmp.ne.s32.totalorder %s115, %s117
      %p124 = scmp.eq.s32.totalorder %s23, 1
      %p125 = por %p123, %p124
      %p126 = scmp.ne.s32.totalorder %s117, %s118
      %p127 = scmp.eq.s32.totalorder %s23, 0
      %p128 = por %p126, %p127
      %p129 = scmp.ne.s32.totalorder %s117, %s118
      %p130 = scmp.eq.s32.totalorder %s24, 1
      %p131 = por %p129, %p130
      %p133 = scmp.ne.s32.totalorder %s118, %s132
      %p134 = scmp.eq.s32.totalorder %s24, 0
      %p135 = por %p133, %p134
      %s137 = sadd.s32 %s136, 1
      %p140 = scmp.eq.s32.totalorder %s18, 1
      %p141 = scmp.ne.s32.totalorder %s136, %s138
      %p142 = scmp.eq.s32.totalorder %s18, 0
      %p143 = por %p141, %p142
      %p144 = scmp.ne.s32.totalorder %s136, %s138
      %p145 = scmp.eq.s32.totalorder %s23, 1
      %p146 = por %p144, %p145
      %p147 = scmp.ne.s32.totalorder %s138, %s139
      %p148 = scmp.eq.s32.totalorder %s23, 0
      %p149 = por %p147, %p148
      %p150 = scmp.ne.s32.totalorder %s138, %s139
      %p151 = scmp.eq.s32.totalorder %s24, 1
      %p152 = por %p150, %p151
      %p154 = scmp.ne.s32.totalorder %s139, %s153
      %p155 = scmp.eq.s32.totalorder %s24, 0
      %p156 = por %p154, %p155
      %s157 = ssub.s32 %s18, %s25
      %p158 = scmp.eq.s32.totalorder %s157, 0
      %s160 = sadd.s32 %s159, 1
      %s161 = scalar_select %p158, %s159, %s160
      %p164 = pneg %p158
      %p165 = scmp.eq.s32.totalorder %s18, 1
      %p166 = por %p164, %p165
      %p167 = scmp.ne.s32.totalorder %s159, %s162
      %p168 = scmp.eq.s32.totalorder %s18, 0
      %p169 = por %p167, %p168
      %p170 = scmp.ne.s32.totalorder %s159, %s162
      %p171 = scmp.eq.s32.totalorder %s23, 1
      %p172 = por %p170, %p171
      %p173 = scmp.ne.s32.totalorder %s162, %s163
      %p174 = scmp.eq.s32.totalorder %s23, 0
      %p175 = por %p173, %p174
      %p176 = scmp.ne.s32.totalorder %s162, %s163
      %p177 = scmp.eq.s32.totalorder %s24, 1
      %p178 = por %p176, %p177
      %p180 = scmp.ne.s32.totalorder %s163, %s179
      %p181 = scmp.eq.s32.totalorder %s24, 0
      %p182 = por %p180, %p181
      %p183 = scmp.le.s32.totalorder 1, %s18
      %p184 = scmp.lt.s32.totalorder %s18, 3
      %p185 = pnand %p183, %p184
      %p186 = pneg %p185
      // Predicated region
      $region9: #{tpu_custom_call.1} parent=5 // pred_check
        _
      $region10: #{tpu_custom_call.1} parent=5 // pred_check_branch
        %188 = sbr.rel (%p185) target = $region12
      $region11: #{tpu_custom_call.1} parent=5 // pred_region
        %s189 = ssub.s32 %s18, 1
        // Predicated region
        $region13: #{tpu_custom_call.1} parent=11 // pred_check
          %p190 = pneg %p65
        $region14: #{tpu_custom_call.1} parent=11 // pred_check_branch
          %192 = sbr.rel (%p190) target = $region16
        $region15: #{tpu_custom_call.1} parent=11 // pred_region
          _
        $region16: #{tpu_custom_call.1} parent=11 // pred_fallthru
          _
        // Predicated region
        $region17: #{tpu_custom_call.1} parent=11 // pred_check
          %p193 = pneg %p86
        $region18: #{tpu_custom_call.1} parent=11 // pred_check_branch
          %195 = sbr.rel (%p193) target = $region20
        $region19: #{tpu_custom_call.1} parent=11 // pred_region
          %197 = vsyncadd [#allocation5], 0
          %s199 = sshll.u32 %s2, 4
          %s200 = int_to_ptr.vmem [resolvable:$true] %s199
          %202 = dma.vmem_to_smem %s200, 32, [#allocation2], [#allocation5]
        $region20: #{tpu_custom_call.1} parent=11 // pred_fallthru
          _
        // Predicated region
        $region21: #{tpu_custom_call.1} parent=11 // pred_check
          %p203 = pneg %p107
        $region22: #{tpu_custom_call.1} parent=11 // pred_check_branch
          %205 = sbr.rel (%p203) target = $region24
        $region23: #{tpu_custom_call.1} parent=11 // pred_region
          %207 = vsyncadd [#allocation7], 0
          %s209 = sshll.u32 %s3, 4
          %s210 = int_to_ptr.vmem [resolvable:$true] %s209
          %212 = dma.vmem_to_smem %s210, 16, [#allocation6], [#allocation7]
        $region24: #{tpu_custom_call.1} parent=11 // pred_fallthru
          _
        // Predicated region
        $region25: #{tpu_custom_call.1} parent=11 // pred_check
          %p213 = pneg %p128
        $region26: #{tpu_custom_call.1} parent=11 // pred_check_branch
          %215 = sbr.rel (%p213) target = $region28
        $region27: #{tpu_custom_call.1} parent=11 // pred_region
          %217 = vsyncadd [#allocation3], 0
          %s218 = sshll.u32 %s4, 4
          %s219 = int_to_ptr.hbm [resolvable:$true] %s218
          %s220 = sshll.u32 [#allocation8], 4
          %s221 = int_to_ptr.vmem [resolvable:$true] %s220
          %226 = dma.hbm_to_vmem [thread:$0]  %s219, 2304, %s221, [#allocation3], 128, 128, 8
        $region28: #{tpu_custom_call.1} parent=11 // pred_fallthru
          _
        // Predicated region
        $region29: #{tpu_custom_call.1} parent=11 // pred_check
          %p227 = pneg %p149
        $region30: #{tpu_custom_call.1} parent=11 // pred_check_branch
          %229 = sbr.rel (%p227) target = $region32
        $region31: #{tpu_custom_call.1} parent=11 // pred_region
          _
        $region32: #{tpu_custom_call.1} parent=11 // pred_fallthru
          _
      $region12: #{tpu_custom_call.1} parent=5 // pred_fallthru
        _
      %p230 = scmp.lt.s32.totalorder %s18, 2
      // Predicated region
      $region33: #{tpu_custom_call.1} parent=5 // pred_check
        %p231 = pneg %p230
      $region34: #{tpu_custom_call.1} parent=5 // pred_check_branch
        %233 = sbr.rel (%p231) target = $region36
      $region35: #{tpu_custom_call.1} parent=5 // pred_region
        // Predicated region
        $region37: #{tpu_custom_call.1} parent=35 // pred_check
          %p234 = pneg %p38
        $region38: #{tpu_custom_call.1} parent=35 // pred_check_branch
          %236 = sbr.rel (%p234) target = $region40
        $region39: #{tpu_custom_call.1} parent=35 // pred_region
          %p237 = scmp.lt.s32.totalorder %s18, 1
          %s238 = scalar_select %p237, %s18, 1
          %s239 = smul.addr %s238, 3
          %s240 = smul.addr %s239, 8
          %s241 = scalar_lea.vmem %s0, %s240
        $region40: #{tpu_custom_call.1} parent=35 // pred_fallthru
          _
      $region36: #{tpu_custom_call.1} parent=5 // pred_fallthru
        _
      %p242 = scmp.le.s32.totalorder 1, %s18
      %p243 = scmp.lt.s32.totalorder %s18, 3
      %p244 = pnand %p242, %p243
      %p245 = pneg %p244
      // Predicated region
      $region41: #{tpu_custom_call.1} parent=5 // pred_check
        _
      $region42: #{tpu_custom_call.1} parent=5 // pred_check_branch
        %247 = sbr.rel (%p244) target = $region44
      $region43: #{tpu_custom_call.1} parent=5 // pred_region
        %s248 = ssub.s32 %s18, 1
        // Predicated region
        $region45: #{tpu_custom_call.1} parent=43 // pred_check
          %p249 = pneg %p86
        $region46: #{tpu_custom_call.1} parent=43 // pred_check_branch
          %251 = sbr.rel (%p249) target = $region48
        $region47: #{tpu_custom_call.1} parent=43 // pred_region
          %253 = dma.done [#allocation5], 32
        $region48: #{tpu_custom_call.1} parent=43 // pred_fallthru
          _
        // Predicated region
        $region49: #{tpu_custom_call.1} parent=43 // pred_check
          %p254 = pneg %p107
        $region50: #{tpu_custom_call.1} parent=43 // pred_check_branch
          %256 = sbr.rel (%p254) target = $region52
        $region51: #{tpu_custom_call.1} parent=43 // pred_region
          %258 = dma.done [#allocation7], 16
        $region52: #{tpu_custom_call.1} parent=43 // pred_fallthru
          _
        // Predicated region
        $region53: #{tpu_custom_call.1} parent=43 // pred_check
          %p259 = pneg %p128
        $region54: #{tpu_custom_call.1} parent=43 // pred_check_branch
          %261 = sbr.rel (%p259) target = $region56
        $region55: #{tpu_custom_call.1} parent=43 // pred_region
          %263 = dma.done [#allocation3], 2304
        $region56: #{tpu_custom_call.1} parent=43 // pred_fallthru
          _
        %264 = sfence
        %p265 = scmp.lt.s32.totalorder %s23, 1
        %s266 = scalar_select %p265, %s23, 1
        %s267 = smul.addr %s266, 3
        %s268 = smul.addr %s267, 8
        %s269 = scalar_lea.vmem %s0, %s268
        %p270 = pneg %p44
        %p271 = pneg %p41
        %p272 = pneg %p65
        %p273 = pneg %p62
        %p274 = pneg %p86
        %p275 = pneg %p83
        %p276 = pneg %p107
        %p277 = pneg %p104
        %p278 = pneg %p128
        %p279 = pneg %p125
        %p280 = pneg %p149
        %p281 = pneg %p146
        %p282 = pneg %p175
        %p283 = pneg %p172
        %s284 = sand.u32 %s162, 1
        %s285 = scalar_lea.sflag [#allocation4], %s284
        %s286 = sand.u32 %s162, 1
        %s287 = smul.addr %s286, 2
        %s288 = scalar_lea.vmem [#allocation9], %s287
        %p289 = scmp.lt.s32.totalorder %s23, 1
        %s290 = scalar_select %p289, %s23, 1
        %s291 = smul.addr %s290, 3
        %s292 = smul.addr %s291, 8
        %s293 = scalar_lea.vmem %s0, %s292
        %v294 = vld [vmem:[%s1] sm:$0xff]
        %v295 = vld [vmem:[%s1 + $0x8] sm:$0xff]
        %v296 = vld [vmem:[%s293] sm:$0xff]
        %v297 = vld [vmem:[%s293 + $0x8] sm:$0xff]
        %v298 = vld [vmem:[%s293 + $0x10] sm:$0x3]
        %s299 = sld [smem:[#allocation2]]
        %v300 = vstv %s299
        %v301 = vmul.f32 %v300, %v296
        %s302 = sld [smem:[#allocation2 + $0x1]]
        %v303 = vstv %s302
        %v304 = vmul.f32 %v303, %v296
        %v306 = vrot.slane %v304, 2
        %v308 = vadd.f32 %v301, %v306
        %s309 = sld [smem:[#allocation2 + $0x2]]
        %v310 = vstv %s309
        %v311 = vmul.f32 %v310, %v296
        %v313 = vrot.slane %v311, 4
        %v315 = vadd.f32 %v308, %v313
        %s316 = sld [smem:[#allocation2 + $0x3]]
        %v317 = vstv %s316
        %v318 = vmul.f32 %v317, %v296
        %v320 = vrot.slane %v318, 6
        %v322 = vadd.f32 %v315, %v320
        %s323 = sld [smem:[#allocation2 + $0x4]]
        %v324 = vstv %s323
        %v325 = vmul.f32 %v324, %v297
        %v326 = vadd.f32 %v322, %v325
        %s327 = sld [smem:[#allocation2 + $0x5]]
        %v328 = vstv %s327
        %v329 = vmul.f32 %v328, %v297
        %v331 = vrot.slane %v329, 2
        %v333 = vadd.f32 %v326, %v331
        %s334 = sld [smem:[#allocation2 + $0x6]]
        %v335 = vstv %s334
        %v336 = vmul.f32 %v335, %v297
        %v338 = vrot.slane %v336, 4
        %v340 = vadd.f32 %v333, %v338
        %s341 = sld [smem:[#allocation2 + $0x7]]
        %v342 = vstv %s341
        %v343 = vmul.f32 %v342, %v297
        %v345 = vrot.slane %v343, 6
        %v347 = vadd.f32 %v340, %v345
        %s348 = sld [smem:[#allocation2 + $0x8]]
        %v349 = vstv %s348
        %v350 = vmul.f32 %v349, %v298
        %v351 = vadd.f32 %v347, %v350
        %s352 = sld [smem:[#allocation2 + $0x9]]
        %v353 = vstv %s352
        %v354 = vmul.f32 %v353, %v296
        %s355 = sld [smem:[#allocation2 + $0xa]]
        %v356 = vstv %s355
        %v357 = vmul.f32 %v356, %v296
        %v359 = vrot.slane %v357, 2
        %v361 = vadd.f32 %v354, %v359
        %s362 = sld [smem:[#allocation2 + $0xb]]
        %v363 = vstv %s362
        %v364 = vmul.f32 %v363, %v296
        %v366 = vrot.slane %v364, 4
        %v368 = vadd.f32 %v361, %v366
        %s369 = sld [smem:[#allocation2 + $0xc]]
        %v370 = vstv %s369
        %v371 = vmul.f32 %v370, %v296
        %v373 = vrot.slane %v371, 6
        %v375 = vadd.f32 %v368, %v373
        %s376 = sld [smem:[#allocation2 + $0xd]]
        %v377 = vstv %s376
        %v378 = vmul.f32 %v377, %v297
        %v379 = vadd.f32 %v375, %v378
        %s380 = sld [smem:[#allocation2 + $0xe]]
        %v381 = vstv %s380
        %v382 = vmul.f32 %v381, %v297
        %v384 = vrot.slane %v382, 2
        %v386 = vadd.f32 %v379, %v384
        %s387 = sld [smem:[#allocation2 + $0xf]]
        %v388 = vstv %s387
        %v389 = vmul.f32 %v388, %v297
        %v391 = vrot.slane %v389, 4
        %v393 = vadd.f32 %v386, %v391
        %s394 = sld [smem:[#allocation2 + $0x10]]
        %v395 = vstv %s394
        %v396 = vmul.f32 %v395, %v297
        %v398 = vrot.slane %v396, 6
        %v400 = vadd.f32 %v393, %v398
        %s401 = sld [smem:[#allocation2 + $0x11]]
        %v402 = vstv %s401
        %v403 = vmul.f32 %v402, %v298
        %v404 = vadd.f32 %v400, %v403
        %s405 = sld [smem:[#allocation2 + $0x12]]
        %v406 = vstv %s405
        %v407 = vmul.f32 %v406, %v296
        %s408 = sld [smem:[#allocation2 + $0x13]]
        %v409 = vstv %s408
        %v410 = vmul.f32 %v409, %v296
        %v412 = vrot.slane %v410, 2
        %v414 = vadd.f32 %v407, %v412
        %s415 = sld [smem:[#allocation2 + $0x14]]
        %v416 = vstv %s415
        %v417 = vmul.f32 %v416, %v296
        %v419 = vrot.slane %v417, 4
        %v421 = vadd.f32 %v414, %v419
        %s422 = sld [smem:[#allocation2 + $0x15]]
        %v423 = vstv %s422
        %v424 = vmul.f32 %v423, %v296
        %v426 = vrot.slane %v424, 6
        %v428 = vadd.f32 %v421, %v426
        %s429 = sld [smem:[#allocation2 + $0x16]]
        %v430 = vstv %s429
        %v431 = vmul.f32 %v430, %v297
        %v432 = vadd.f32 %v428, %v431
        %s433 = sld [smem:[#allocation2 + $0x17]]
        %v434 = vstv %s433
        %v435 = vmul.f32 %v434, %v297
        %v437 = vrot.slane %v435, 2
        %v439 = vadd.f32 %v432, %v437
        %s440 = sld [smem:[#allocation2 + $0x18]]
        %v441 = vstv %s440
        %v442 = vmul.f32 %v441, %v297
        %v444 = vrot.slane %v442, 4
        %v446 = vadd.f32 %v439, %v444
        %s447 = sld [smem:[#allocation2 + $0x19]]
        %v448 = vstv %s447
        %v449 = vmul.f32 %v448, %v297
        %v451 = vrot.slane %v449, 6
        %v453 = vadd.f32 %v446, %v451
        %s454 = sld [smem:[#allocation2 + $0x1a]]
        %v455 = vstv %s454
        %v456 = vmul.f32 %v455, %v298
        %v457 = vadd.f32 %v453, %v456
        %s458 = sld [smem:[#allocation2 + $0x1b]]
        %v459 = vstv %s458
        %v460 = vmul.f32 %v459, %v296
        %s461 = sld [smem:[#allocation2 + $0x1c]]
        %v462 = vstv %s461
        %v463 = vmul.f32 %v462, %v296
        %v465 = vrot.slane %v463, 2
        %v467 = vadd.f32 %v460, %v465
        %s468 = sld [smem:[#allocation2 + $0x1d]]
        %v469 = vstv %s468
        %v470 = vmul.f32 %v469, %v296
        %v472 = vrot.slane %v470, 4
        %v474 = vadd.f32 %v467, %v472
        %s475 = sld [smem:[#allocation2 + $0x1e]]
        %v476 = vstv %s475
        %v477 = vmul.f32 %v476, %v296
        %v479 = vrot.slane %v477, 6
        %v481 = vadd.f32 %v474, %v479
        %s482 = sld [smem:[#allocation2 + $0x1f]]
        %v483 = vstv %s482
        %v484 = vmul.f32 %v483, %v297
        %v485 = vadd.f32 %v481, %v484
        %s486 = sld [smem:[#allocation2 + $0x20]]
        %v487 = vstv %s486
        %v488 = vmul.f32 %v487, %v297
        %v490 = vrot.slane %v488, 2
        %v492 = vadd.f32 %v485, %v490
        %s493 = sld [smem:[#allocation2 + $0x21]]
        %v494 = vstv %s493
        %v495 = vmul.f32 %v494, %v297
        %v497 = vrot.slane %v495, 4
        %v499 = vadd.f32 %v492, %v497
        %s500 = sld [smem:[#allocation2 + $0x22]]
        %v501 = vstv %s500
        %v502 = vmul.f32 %v501, %v297
        %v504 = vrot.slane %v502, 6
        %v506 = vadd.f32 %v499, %v504
        %s507 = sld [smem:[#allocation2 + $0x23]]
        %v508 = vstv %s507
        %v509 = vmul.f32 %v508, %v298
        %v510 = vadd.f32 %v506, %v509
        %s511 = sld [smem:[#allocation2 + $0x24]]
        %v512 = vstv %s511
        %v513 = vmul.f32 %v512, %v296
        %s514 = sld [smem:[#allocation2 + $0x25]]
        %v515 = vstv %s514
        %v516 = vmul.f32 %v515, %v296
        %v518 = vrot.slane %v516, 2
        %v520 = vadd.f32 %v513, %v518
        %s521 = sld [smem:[#allocation2 + $0x26]]
        %v522 = vstv %s521
        %v523 = vmul.f32 %v522, %v296
        %v525 = vrot.slane %v523, 4
        %v527 = vadd.f32 %v520, %v525
        %s528 = sld [smem:[#allocation2 + $0x27]]
        %v529 = vstv %s528
        %v530 = vmul.f32 %v529, %v296
        %v532 = vrot.slane %v530, 6
        %v534 = vadd.f32 %v527, %v532
        %s535 = sld [smem:[#allocation2 + $0x28]]
        %v536 = vstv %s535
        %v537 = vmul.f32 %v536, %v297
        %v538 = vadd.f32 %v534, %v537
        %s539 = sld [smem:[#allocation2 + $0x29]]
        %v540 = vstv %s539
        %v541 = vmul.f32 %v540, %v297
        %v543 = vrot.slane %v541, 2
        %v545 = vadd.f32 %v538, %v543
        %s546 = sld [smem:[#allocation2 + $0x2a]]
        %v547 = vstv %s546
        %v548 = vmul.f32 %v547, %v297
        %v550 = vrot.slane %v548, 4
        %v552 = vadd.f32 %v545, %v550
        %s553 = sld [smem:[#allocation2 + $0x2b]]
        %v554 = vstv %s553
        %v555 = vmul.f32 %v554, %v297
        %v557 = vrot.slane %v555, 6
        %v559 = vadd.f32 %v552, %v557
        %s560 = sld [smem:[#allocation2 + $0x2c]]
        %v561 = vstv %s560
        %v562 = vmul.f32 %v561, %v298
        %v563 = vadd.f32 %v559, %v562
        %s564 = sld [smem:[#allocation2 + $0x2d]]
        %v565 = vstv %s564
        %v566 = vmul.f32 %v565, %v296
        %s567 = sld [smem:[#allocation2 + $0x2e]]
        %v568 = vstv %s567
        %v569 = vmul.f32 %v568, %v296
        %v571 = vrot.slane %v569, 2
        %v573 = vadd.f32 %v566, %v571
        %s574 = sld [smem:[#allocation2 + $0x2f]]
        %v575 = vstv %s574
        %v576 = vmul.f32 %v575, %v296
        %v578 = vrot.slane %v576, 4
        %v580 = vadd.f32 %v573, %v578
        %s581 = sld [smem:[#allocation2 + $0x30]]
        %v582 = vstv %s581
        %v583 = vmul.f32 %v582, %v296
        %v585 = vrot.slane %v583, 6
        %v587 = vadd.f32 %v580, %v585
        %s588 = sld [smem:[#allocation2 + $0x31]]
        %v589 = vstv %s588
        %v590 = vmul.f32 %v589, %v297
        %v591 = vadd.f32 %v587, %v590
        %s592 = sld [smem:[#allocation2 + $0x32]]
        %v593 = vstv %s592
        %v594 = vmul.f32 %v593, %v297
        %v596 = vrot.slane %v594, 2
        %v598 = vadd.f32 %v591, %v596
        %s599 = sld [smem:[#allocation2 + $0x33]]
        %v600 = vstv %s599
        %v601 = vmul.f32 %v600, %v297
        %v603 = vrot.slane %v601, 4
        %v605 = vadd.f32 %v598, %v603
        %s606 = sld [smem:[#allocation2 + $0x34]]
        %v607 = vstv %s606
        %v608 = vmul.f32 %v607, %v297
        %v610 = vrot.slane %v608, 6
        %v612 = vadd.f32 %v605, %v610
        %s613 = sld [smem:[#allocation2 + $0x35]]
        %v614 = vstv %s613
        %v615 = vmul.f32 %v614, %v298
        %v616 = vadd.f32 %v612, %v615
        %s617 = sld [smem:[#allocation2 + $0x36]]
        %v618 = vstv %s617
        %v619 = vmul.f32 %v618, %v296
        %s620 = sld [smem:[#allocation2 + $0x37]]
        %v621 = vstv %s620
        %v622 = vmul.f32 %v621, %v296
        %v624 = vrot.slane %v622, 2
        %v626 = vadd.f32 %v619, %v624
        %s627 = sld [smem:[#allocation2 + $0x38]]
        %v628 = vstv %s627
        %v629 = vmul.f32 %v628, %v296
        %v631 = vrot.slane %v629, 4
        %v633 = vadd.f32 %v626, %v631
        %s634 = sld [smem:[#allocation2 + $0x39]]
        %v635 = vstv %s634
        %v636 = vmul.f32 %v635, %v296
        %v638 = vrot.slane %v636, 6
        %v640 = vadd.f32 %v633, %v638
        %s641 = sld [smem:[#allocation2 + $0x3a]]
        %v642 = vstv %s641
        %v643 = vmul.f32 %v642, %v297
        %v644 = vadd.f32 %v640, %v643
        %s645 = sld [smem:[#allocation2 + $0x3b]]
        %v646 = vstv %s645
        %v647 = vmul.f32 %v646, %v297
        %v649 = vrot.slane %v647, 2
        %v651 = vadd.f32 %v644, %v649
        %s652 = sld [smem:[#allocation2 + $0x3c]]
        %v653 = vstv %s652
        %v654 = vmul.f32 %v653, %v297
        %v656 = vrot.slane %v654, 4
        %v658 = vadd.f32 %v651, %v656
        %s659 = sld [smem:[#allocation2 + $0x3d]]
        %v660 = vstv %s659
        %v661 = vmul.f32 %v660, %v297
        %v663 = vrot.slane %v661, 6
        %v665 = vadd.f32 %v658, %v663
        %s666 = sld [smem:[#allocation2 + $0x3e]]
        %v667 = vstv %s666
        %v668 = vmul.f32 %v667, %v298
        %v669 = vadd.f32 %v665, %v668
        %s670 = sld [smem:[#allocation2 + $0x3f]]
        %v671 = vstv %s670
        %v672 = vmul.f32 %v671, %v296
        %s673 = sld [smem:[#allocation2 + $0x40]]
        %v674 = vstv %s673
        %v675 = vmul.f32 %v674, %v296
        %v677 = vrot.slane %v675, 2
        %v679 = vadd.f32 %v672, %v677
        %s680 = sld [smem:[#allocation2 + $0x41]]
        %v681 = vstv %s680
        %v682 = vmul.f32 %v681, %v296
        %v684 = vrot.slane %v682, 4
        %v686 = vadd.f32 %v679, %v684
        %s687 = sld [smem:[#allocation2 + $0x42]]
        %v688 = vstv %s687
        %v689 = vmul.f32 %v688, %v296
        %v691 = vrot.slane %v689, 6
        %v693 = vadd.f32 %v686, %v691
        %s694 = sld [smem:[#allocation2 + $0x43]]
        %v695 = vstv %s694
        %v696 = vmul.f32 %v695, %v297
        %v697 = vadd.f32 %v693, %v696
        %s698 = sld [smem:[#allocation2 + $0x44]]
        %v699 = vstv %s698
        %v700 = vmul.f32 %v699, %v297
        %v702 = vrot.slane %v700, 2
        %v704 = vadd.f32 %v697, %v702
        %s705 = sld [smem:[#allocation2 + $0x45]]
        %v706 = vstv %s705
        %v707 = vmul.f32 %v706, %v297
        %v709 = vrot.slane %v707, 4
        %v711 = vadd.f32 %v704, %v709
        %s712 = sld [smem:[#allocation2 + $0x46]]
        %v713 = vstv %s712
        %v714 = vmul.f32 %v713, %v297
        %v716 = vrot.slane %v714, 6
        %v718 = vadd.f32 %v711, %v716
        %s719 = sld [smem:[#allocation2 + $0x47]]
        %v720 = vstv %s719
        %v721 = vmul.f32 %v720, %v298
        %v722 = vadd.f32 %v718, %v721
        %s723 = sld [smem:[#allocation2 + $0x48]]
        %v724 = vstv %s723
        %v725 = vmul.f32 %v724, %v296
        %s726 = sld [smem:[#allocation2 + $0x49]]
        %v727 = vstv %s726
        %v728 = vmul.f32 %v727, %v296
        %v730 = vrot.slane %v728, 2
        %v732 = vadd.f32 %v725, %v730
        %s733 = sld [smem:[#allocation2 + $0x4a]]
        %v734 = vstv %s733
        %v735 = vmul.f32 %v734, %v296
        %v737 = vrot.slane %v735, 4
        %v739 = vadd.f32 %v732, %v737
        %s740 = sld [smem:[#allocation2 + $0x4b]]
        %v741 = vstv %s740
        %v742 = vmul.f32 %v741, %v296
        %v744 = vrot.slane %v742, 6
        %v746 = vadd.f32 %v739, %v744
        %s747 = sld [smem:[#allocation2 + $0x4c]]
        %v748 = vstv %s747
        %v749 = vmul.f32 %v748, %v297
        %v750 = vadd.f32 %v746, %v749
        %s751 = sld [smem:[#allocation2 + $0x4d]]
        %v752 = vstv %s751
        %v753 = vmul.f32 %v752, %v297
        %v755 = vrot.slane %v753, 2
        %v757 = vadd.f32 %v750, %v755
        %s758 = sld [smem:[#allocation2 + $0x4e]]
        %v759 = vstv %s758
        %v760 = vmul.f32 %v759, %v297
        %v762 = vrot.slane %v760, 4
        %v764 = vadd.f32 %v757, %v762
        %s765 = sld [smem:[#allocation2 + $0x4f]]
        %v766 = vstv %s765
        %v767 = vmul.f32 %v766, %v297
        %v769 = vrot.slane %v767, 6
        %v771 = vadd.f32 %v764, %v769
        %s772 = sld [smem:[#allocation2 + $0x50]]
        %v773 = vstv %s772
        %v774 = vmul.f32 %v773, %v298
        %v775 = vadd.f32 %v771, %v774
        %v777 = vrot.slane %v404, 6
        %v780 = vrot.slane %v457, 4
        %v783 = vrot.slane %v510, 2
        %v786 = vrot.slane %v616, 6
        %v789 = vrot.slane %v669, 4
        %v792 = vrot.slane %v722, 2
        %vm794 = vcmask 1041408
        %v795 = vsel %vm794, %v351, %v777
        %vm796 = vcmask 1043456
        %v797 = vsel %vm796, %v795, %v780
        %vm798 = vcmask 1045504
        %v799 = vsel %vm798, %v797, %v783
        %v800 = vsel %vm794, %v563, %v786
        %v801 = vsel %vm796, %v800, %v789
        %v802 = vsel %vm798, %v801, %v792
        %vm803 = vcmask 130048
        %v805 = vsel %vm803, %v799, 0
        %v808 = vsel %vm803, %v802, 0
        %v811 = vsel %vm803, %v775, 0
        %813 = vmatpush.msra.mxu0 0.0
        %814 = vmatpush.msra.mxu0 0.0
        %815 = vmatpush.msra.mxu0 0.0
        %816 = vmatpush.msra.mxu0 0.0
        %817 = vmatpush.msra.mxu0 0.0
        %818 = vmatpush.msra.mxu0 0.0
        %819 = vmatpush.msra.mxu0 0.0
        %820 = vmatpush.msra.mxu0 0.0
        %821 = vmatpush.msra.mxu0 0.0
        %822 = vmatpush.msra.mxu0 0.0
        %823 = vmatpush.msra.mxu0 0.0
        %824 = vmatpush.msra.mxu0 0.0
        %825 = vmatpush.msra.mxu0 0.0
        %826 = vmatpush.msra.mxu0 0.0
        %827 = vmatpush.msra.mxu0 %v295
        %828 = vmatpush.msra.mxu0 %v294
        %829 = vmatmul.f32.gmra.mxu0 %v805
        %v830 = vpop.f32.mrf.mxu0
        %v831 = vadd.f32 0.0, %v830
        %832 = vmatmul.f32.gmra.mxu0 %v808
        %v833 = vpop.f32.mrf.mxu0
        %v834 = vadd.f32 0.0, %v833
        %835 = vmatmul.f32.gmra.mxu0 %v811
        %v836 = vpop.f32.mrf.mxu0
        %v837 = vadd.f32 0.0, %v836
        %838 = vdwg.mxu0
        %s839 = sld [smem:[#allocation6]]
        %v840 = vstv %s839
        %v841 = vadd.f32 %v831, %v840
        %s842 = sld [smem:[#allocation6 + $0x1]]
        %v843 = vstv %s842
        %v844 = vadd.f32 %v831, %v843
        %s845 = sld [smem:[#allocation6 + $0x2]]
        %v846 = vstv %s845
        %v847 = vadd.f32 %v831, %v846
        %s848 = sld [smem:[#allocation6 + $0x3]]
        %v849 = vstv %s848
        %v850 = vadd.f32 %v831, %v849
        %s851 = sld [smem:[#allocation6 + $0x4]]
        %v852 = vstv %s851
        %v853 = vadd.f32 %v834, %v852
        %s854 = sld [smem:[#allocation6 + $0x5]]
        %v855 = vstv %s854
        %v856 = vadd.f32 %v834, %v855
        %s857 = sld [smem:[#allocation6 + $0x6]]
        %v858 = vstv %s857
        %v859 = vadd.f32 %v834, %v858
        %s860 = sld [smem:[#allocation6 + $0x7]]
        %v861 = vstv %s860
        %v862 = vadd.f32 %v834, %v861
        %s863 = sld [smem:[#allocation6 + $0x8]]
        %v864 = vstv %s863
        %v865 = vadd.f32 %v837, %v864
        %v867 = vrot.slane %v844, 2
        %v869 = vadd.f32 %v841, %v867
        %v871 = vrot.slane %v847, 4
        %v873 = vadd.f32 %v869, %v871
        %v875 = vrot.slane %v850, 6
        %v877 = vadd.f32 %v873, %v875
        %v878 = vadd.f32 %v877, %v853
        %v880 = vrot.slane %v856, 2
        %v882 = vadd.f32 %v878, %v880
        %v884 = vrot.slane %v859, 4
        %v886 = vadd.f32 %v882, %v884
        %v888 = vrot.slane %v862, 6
        %v890 = vadd.f32 %v886, %v888
        %v891 = vadd.f32 %v890, %v865
        %v892 = vmul.f32 %v891, 0.11111111
        %v893 = vsub.f32 %v841, %v892
        %v895 = vrot.slane %v892, 6
        %v897 = vsub.f32 %v844, %v895
        %v898 = vrot.slane %v892, 4
        %v900 = vsub.f32 %v847, %v898
        %v901 = vrot.slane %v892, 2
        %v903 = vsub.f32 %v850, %v901
        %v904 = vsub.f32 %v853, %v892
        %v905 = vsub.f32 %v856, %v895
        %v906 = vsub.f32 %v859, %v898
        %v907 = vsub.f32 %v862, %v901
        %v908 = vsub.f32 %v865, %v892
        %v909 = vmul.f32 %v893, %v893
        %v910 = vmul.f32 %v897, %v897
        %v912 = vrot.slane %v910, 2
        %v914 = vadd.f32 %v909, %v912
        %v915 = vmul.f32 %v900, %v900
        %v917 = vrot.slane %v915, 4
        %v919 = vadd.f32 %v914, %v917
        %v920 = vmul.f32 %v903, %v903
        %v922 = vrot.slane %v920, 6
        %v924 = vadd.f32 %v919, %v922
        %v925 = vmul.f32 %v904, %v904
        %v926 = vadd.f32 %v924, %v925
        %v927 = vmul.f32 %v905, %v905
        %v929 = vrot.slane %v927, 2
        %v931 = vadd.f32 %v926, %v929
        %v932 = vmul.f32 %v906, %v906
        %v934 = vrot.slane %v932, 4
        %v936 = vadd.f32 %v931, %v934
        %v937 = vmul.f32 %v907, %v907
        %v939 = vrot.slane %v937, 6
        %v941 = vadd.f32 %v936, %v939
        %v942 = vmul.f32 %v908, %v908
        %v943 = vadd.f32 %v941, %v942
        %v944 = vmul.f32 %v943, 0.11111111
        %v945 = vadd.f32 %v944, 1e-05
        %v946 = vrsqrt.pop %v945
        %v947 = vmul.f32 %v946, %v945
        %v948 = vmul.f32 %v947, %v946
        %v949 = vmul.f32 0.5, %v948
        %v950 = vsub.f32 1.5, %v949
        %v951 = vmul.f32 %v946, %v950
        %vm952 = vweird.f32 %v945
        %vm953 = vweird.f32 %v946
        %vm954 = vmor %vm952, %vm953
        %v955 = vsel %vm954, %v946, %v951
        %v956 = vmul.f32 %v893, %v955
        %v957 = vmax.f32 %v956, 0.0
        %v959 = vrot.slane %v955, 6
        %v961 = vmul.f32 %v897, %v959
        %v962 = vmax.f32 %v961, 0.0
        %v963 = vrot.slane %v955, 4
        %v965 = vmul.f32 %v900, %v963
        %v966 = vmax.f32 %v965, 0.0
        %v967 = vrot.slane %v955, 2
        %v969 = vmul.f32 %v903, %v967
        %v970 = vmax.f32 %v969, 0.0
        %v971 = vmul.f32 %v904, %v955
        %v972 = vmax.f32 %v971, 0.0
        %v973 = vmul.f32 %v905, %v959
        %v974 = vmax.f32 %v973, 0.0
        %v975 = vmul.f32 %v906, %v963
        %v976 = vmax.f32 %v975, 0.0
        %v977 = vmul.f32 %v907, %v967
        %v978 = vmax.f32 %v977, 0.0
        %v979 = vmul.f32 %v908, %v955
        %v980 = vmax.f32 %v979, 0.0
        %s981 = sld [smem:[#allocation2 + $0x51]]
        %v982 = vstv %s981
        %v983 = vmul.f32 %v982, %v957
        %s984 = sld [smem:[#allocation2 + $0x52]]
        %v985 = vstv %s984
        %v986 = vmul.f32 %v985, %v962
        %v988 = vrot.slane %v986, 2
        %v990 = vadd.f32 %v983, %v988
        %s991 = sld [smem:[#allocation2 + $0x53]]
        %v992 = vstv %s991
        %v993 = vmul.f32 %v992, %v966
        %v995 = vrot.slane %v993, 4
        %v997 = vadd.f32 %v990, %v995
        %s998 = sld [smem:[#allocation2 + $0x54]]
        %v999 = vstv %s998
        %v1000 = vmul.f32 %v999, %v970
        %v1002 = vrot.slane %v1000, 6
        %v1004 = vadd.f32 %v997, %v1002
        %s1005 = sld [smem:[#allocation2 + $0x55]]
        %v1006 = vstv %s1005
        %v1007 = vmul.f32 %v1006, %v972
        %v1008 = vadd.f32 %v1004, %v1007
        %s1009 = sld [smem:[#allocation2 + $0x56]]
        %v1010 = vstv %s1009
        %v1011 = vmul.f32 %v1010, %v974
        %v1013 = vrot.slane %v1011, 2
        %v1015 = vadd.f32 %v1008, %v1013
        %s1016 = sld [smem:[#allocation2 + $0x57]]
        %v1017 = vstv %s1016
        %v1018 = vmul.f32 %v1017, %v976
        %v1020 = vrot.slane %v1018, 4
        %v1022 = vadd.f32 %v1015, %v1020
        %s1023 = sld [smem:[#allocation2 + $0x58]]
        %v1024 = vstv %s1023
        %v1025 = vmul.f32 %v1024, %v978
        %v1027 = vrot.slane %v1025, 6
        %v1029 = vadd.f32 %v1022, %v1027
        %s1030 = sld [smem:[#allocation2 + $0x59]]
        %v1031 = vstv %s1030
        %v1032 = vmul.f32 %v1031, %v980
        %v1033 = vadd.f32 %v1029, %v1032
        %s1034 = sld [smem:[#allocation2 + $0x5a]]
        %v1035 = vstv %s1034
        %v1036 = vmul.f32 %v1035, %v957
        %s1037 = sld [smem:[#allocation2 + $0x5b]]
        %v1038 = vstv %s1037
        %v1039 = vmul.f32 %v1038, %v962
        %v1041 = vrot.slane %v1039, 2
        %v1043 = vadd.f32 %v1036, %v1041
        %s1044 = sld [smem:[#allocation2 + $0x5c]]
        %v1045 = vstv %s1044
        %v1046 = vmul.f32 %v1045, %v966
        %v1048 = vrot.slane %v1046, 4
        %v1050 = vadd.f32 %v1043, %v1048
        %s1051 = sld [smem:[#allocation2 + $0x5d]]
        %v1052 = vstv %s1051
        %v1053 = vmul.f32 %v1052, %v970
        %v1055 = vrot.slane %v1053, 6
        %v1057 = vadd.f32 %v1050, %v1055
        %s1058 = sld [smem:[#allocation2 + $0x5e]]
        %v1059 = vstv %s1058
        %v1060 = vmul.f32 %v1059, %v972
        %v1061 = vadd.f32 %v1057, %v1060
        %s1062 = sld [smem:[#allocation2 + $0x5f]]
        %v1063 = vstv %s1062
        %v1064 = vmul.f32 %v1063, %v974
        %v1066 = vrot.slane %v1064, 2
        %v1068 = vadd.f32 %v1061, %v1066
        %s1069 = sld [smem:[#allocation2 + $0x60]]
        %v1070 = vstv %s1069
        %v1071 = vmul.f32 %v1070, %v976
        %v1073 = vrot.slane %v1071, 4
        %v1075 = vadd.f32 %v1068, %v1073
        %s1076 = sld [smem:[#allocation2 + $0x61]]
        %v1077 = vstv %s1076
        %v1078 = vmul.f32 %v1077, %v978
        %v1080 = vrot.slane %v1078, 6
        %v1082 = vadd.f32 %v1075, %v1080
        %s1083 = sld [smem:[#allocation2 + $0x62]]
        %v1084 = vstv %s1083
        %v1085 = vmul.f32 %v1084, %v980
        %v1086 = vadd.f32 %v1082, %v1085
        %s1087 = sld [smem:[#allocation2 + $0x63]]
        %v1088 = vstv %s1087
        %v1089 = vmul.f32 %v1088, %v957
        %s1090 = sld [smem:[#allocation2 + $0x64]]
        %v1091 = vstv %s1090
        %v1092 = vmul.f32 %v1091, %v962
        %v1094 = vrot.slane %v1092, 2
        %v1096 = vadd.f32 %v1089, %v1094
        %s1097 = sld [smem:[#allocation2 + $0x65]]
        %v1098 = vstv %s1097
        %v1099 = vmul.f32 %v1098, %v966
        %v1101 = vrot.slane %v1099, 4
        %v1103 = vadd.f32 %v1096, %v1101
        %s1104 = sld [smem:[#allocation2 + $0x66]]
        %v1105 = vstv %s1104
        %v1106 = vmul.f32 %v1105, %v970
        %v1108 = vrot.slane %v1106, 6
        %v1110 = vadd.f32 %v1103, %v1108
        %s1111 = sld [smem:[#allocation2 + $0x67]]
        %v1112 = vstv %s1111
        %v1113 = vmul.f32 %v1112, %v972
        %v1114 = vadd.f32 %v1110, %v1113
        %s1115 = sld [smem:[#allocation2 + $0x68]]
        %v1116 = vstv %s1115
        %v1117 = vmul.f32 %v1116, %v974
        %v1119 = vrot.slane %v1117, 2
        %v1121 = vadd.f32 %v1114, %v1119
        %s1122 = sld [smem:[#allocation2 + $0x69]]
        %v1123 = vstv %s1122
        %v1124 = vmul.f32 %v1123, %v976
        %v1126 = vrot.slane %v1124, 4
        %v1128 = vadd.f32 %v1121, %v1126
        %s1129 = sld [smem:[#allocation2 + $0x6a]]
        %v1130 = vstv %s1129
        %v1131 = vmul.f32 %v1130, %v978
        %v1133 = vrot.slane %v1131, 6
        %v1135 = vadd.f32 %v1128, %v1133
        %s1136 = sld [smem:[#allocation2 + $0x6b]]
        %v1137 = vstv %s1136
        %v1138 = vmul.f32 %v1137, %v980
        %v1139 = vadd.f32 %v1135, %v1138
        %s1140 = sld [smem:[#allocation2 + $0x6c]]
        %v1141 = vstv %s1140
        %v1142 = vmul.f32 %v1141, %v957
        %s1143 = sld [smem:[#allocation2 + $0x6d]]
        %v1144 = vstv %s1143
        %v1145 = vmul.f32 %v1144, %v962
        %v1147 = vrot.slane %v1145, 2
        %v1149 = vadd.f32 %v1142, %v1147
        %s1150 = sld [smem:[#allocation2 + $0x6e]]
        %v1151 = vstv %s1150
        %v1152 = vmul.f32 %v1151, %v966
        %v1154 = vrot.slane %v1152, 4
        %v1156 = vadd.f32 %v1149, %v1154
        %s1157 = sld [smem:[#allocation2 + $0x6f]]
        %v1158 = vstv %s1157
        %v1159 = vmul.f32 %v1158, %v970
        %v1161 = vrot.slane %v1159, 6
        %v1163 = vadd.f32 %v1156, %v1161
        %s1164 = sld [smem:[#allocation2 + $0x70]]
        %v1165 = vstv %s1164
        %v1166 = vmul.f32 %v1165, %v972
        %v1167 = vadd.f32 %v1163, %v1166
        %s1168 = sld [smem:[#allocation2 + $0x71]]
        %v1169 = vstv %s1168
        %v1170 = vmul.f32 %v1169, %v974
        %v1172 = vrot.slane %v1170, 2
        %v1174 = vadd.f32 %v1167, %v1172
        %s1175 = sld [smem:[#allocation2 + $0x72]]
        %v1176 = vstv %s1175
        %v1177 = vmul.f32 %v1176, %v976
        %v1179 = vrot.slane %v1177, 4
        %v1181 = vadd.f32 %v1174, %v1179
        %s1182 = sld [smem:[#allocation2 + $0x73]]
        %v1183 = vstv %s1182
        %v1184 = vmul.f32 %v1183, %v978
        %v1186 = vrot.slane %v1184, 6
        %v1188 = vadd.f32 %v1181, %v1186
        %s1189 = sld [smem:[#allocation2 + $0x74]]
        %v1190 = vstv %s1189
        %v1191 = vmul.f32 %v1190, %v980
        %v1192 = vadd.f32 %v1188, %v1191
        %s1193 = sld [smem:[#allocation2 + $0x75]]
        %v1194 = vstv %s1193
        %v1195 = vmul.f32 %v1194, %v957
        %s1196 = sld [smem:[#allocation2 + $0x76]]
        %v1197 = vstv %s1196
        %v1198 = vmul.f32 %v1197, %v962
        %v1200 = vrot.slane %v1198, 2
        %v1202 = vadd.f32 %v1195, %v1200
        %s1203 = sld [smem:[#allocation2 + $0x77]]
        %v1204 = vstv %s1203
        %v1205 = vmul.f32 %v1204, %v966
        %v1207 = vrot.slane %v1205, 4
        %v1209 = vadd.f32 %v1202, %v1207
        %s1210 = sld [smem:[#allocation2 + $0x78]]
        %v1211 = vstv %s1210
        %v1212 = vmul.f32 %v1211, %v970
        %v1214 = vrot.slane %v1212, 6
        %v1216 = vadd.f32 %v1209, %v1214
        %s1217 = sld [smem:[#allocation2 + $0x79]]
        %v1218 = vstv %s1217
        %v1219 = vmul.f32 %v1218, %v972
        %v1220 = vadd.f32 %v1216, %v1219
        %s1221 = sld [smem:[#allocation2 + $0x7a]]
        %v1222 = vstv %s1221
        %v1223 = vmul.f32 %v1222, %v974
        %v1225 = vrot.slane %v1223, 2
        %v1227 = vadd.f32 %v1220, %v1225
        %s1228 = sld [smem:[#allocation2 + $0x7b]]
        %v1229 = vstv %s1228
        %v1230 = vmul.f32 %v1229, %v976
        %v1232 = vrot.slane %v1230, 4
        %v1234 = vadd.f32 %v1227, %v1232
        %s1235 = sld [smem:[#allocation2 + $0x7c]]
        %v1236 = vstv %s1235
        %v1237 = vmul.f32 %v1236, %v978
        %v1239 = vrot.slane %v1237, 6
        %v1241 = vadd.f32 %v1234, %v1239
        %s1242 = sld [smem:[#allocation2 + $0x7d]]
        %v1243 = vstv %s1242
        %v1244 = vmul.f32 %v1243, %v980
        %v1245 = vadd.f32 %v1241, %v1244
        %s1246 = sld [smem:[#allocation2 + $0x7e]]
        %v1247 = vstv %s1246
        %v1248 = vmul.f32 %v1247, %v957
        %s1249 = sld [smem:[#allocation2 + $0x7f]]
        %v1250 = vstv %s1249
        %v1251 = vmul.f32 %v1250, %v962
        %v1253 = vrot.slane %v1251, 2
        %v1255 = vadd.f32 %v1248, %v1253
        %s1256 = sld [smem:[#allocation2 + $0x80]]
        %v1257 = vstv %s1256
        %v1258 = vmul.f32 %v1257, %v966
        %v1260 = vrot.slane %v1258, 4
        %v1262 = vadd.f32 %v1255, %v1260
        %s1263 = sld [smem:[#allocation2 + $0x81]]
        %v1264 = vstv %s1263
        %v1265 = vmul.f32 %v1264, %v970
        %v1267 = vrot.slane %v1265, 6
        %v1269 = vadd.f32 %v1262, %v1267
        %s1270 = sld [smem:[#allocation2 + $0x82]]
        %v1271 = vstv %s1270
        %v1272 = vmul.f32 %v1271, %v972
        %v1273 = vadd.f32 %v1269, %v1272
        %s1274 = sld [smem:[#allocation2 + $0x83]]
        %v1275 = vstv %s1274
        %v1276 = vmul.f32 %v1275, %v974
        %v1278 = vrot.slane %v1276, 2
        %v1280 = vadd.f32 %v1273, %v1278
        %s1281 = sld [smem:[#allocation2 + $0x84]]
        %v1282 = vstv %s1281
        %v1283 = vmul.f32 %v1282, %v976
        %v1285 = vrot.slane %v1283, 4
        %v1287 = vadd.f32 %v1280, %v1285
        %s1288 = sld [smem:[#allocation2 + $0x85]]
        %v1289 = vstv %s1288
        %v1290 = vmul.f32 %v1289, %v978
        %v1292 = vrot.slane %v1290, 6
        %v1294 = vadd.f32 %v1287, %v1292
        %s1295 = sld [smem:[#allocation2 + $0x86]]
        %v1296 = vstv %s1295
        %v1297 = vmul.f32 %v1296, %v980
        %v1298 = vadd.f32 %v1294, %v1297
        %s1299 = sld [smem:[#allocation2 + $0x87]]
        %v1300 = vstv %s1299
        %v1301 = vmul.f32 %v1300, %v957
        %s1302 = sld [smem:[#allocation2 + $0x88]]
        %v1303 = vstv %s1302
        %v1304 = vmul.f32 %v1303, %v962
        %v1306 = vrot.slane %v1304, 2
        %v1308 = vadd.f32 %v1301, %v1306
        %s1309 = sld [smem:[#allocation2 + $0x89]]
        %v1310 = vstv %s1309
        %v1311 = vmul.f32 %v1310, %v966
        %v1313 = vrot.slane %v1311, 4
        %v1315 = vadd.f32 %v1308, %v1313
        %s1316 = sld [smem:[#allocation2 + $0x8a]]
        %v1317 = vstv %s1316
        %v1318 = vmul.f32 %v1317, %v970
        %v1320 = vrot.slane %v1318, 6
        %v1322 = vadd.f32 %v1315, %v1320
        %s1323 = sld [smem:[#allocation2 + $0x8b]]
        %v1324 = vstv %s1323
        %v1325 = vmul.f32 %v1324, %v972
        %v1326 = vadd.f32 %v1322, %v1325
        %s1327 = sld [smem:[#allocation2 + $0x8c]]
        %v1328 = vstv %s1327
        %v1329 = vmul.f32 %v1328, %v974
        %v1331 = vrot.slane %v1329, 2
        %v1333 = vadd.f32 %v1326, %v1331
        %s1334 = sld [smem:[#allocation2 + $0x8d]]
        %v1335 = vstv %s1334
        %v1336 = vmul.f32 %v1335, %v976
        %v1338 = vrot.slane %v1336, 4
        %v1340 = vadd.f32 %v1333, %v1338
        %s1341 = sld [smem:[#allocation2 + $0x8e]]
        %v1342 = vstv %s1341
        %v1343 = vmul.f32 %v1342, %v978
        %v1345 = vrot.slane %v1343, 6
        %v1347 = vadd.f32 %v1340, %v1345
        %s1348 = sld [smem:[#allocation2 + $0x8f]]
        %v1349 = vstv %s1348
        %v1350 = vmul.f32 %v1349, %v980
        %v1351 = vadd.f32 %v1347, %v1350
        %s1352 = sld [smem:[#allocation2 + $0x90]]
        %v1353 = vstv %s1352
        %v1354 = vmul.f32 %v1353, %v957
        %s1355 = sld [smem:[#allocation2 + $0x91]]
        %v1356 = vstv %s1355
        %v1357 = vmul.f32 %v1356, %v962
        %v1359 = vrot.slane %v1357, 2
        %v1361 = vadd.f32 %v1354, %v1359
        %s1362 = sld [smem:[#allocation2 + $0x92]]
        %v1363 = vstv %s1362
        %v1364 = vmul.f32 %v1363, %v966
        %v1366 = vrot.slane %v1364, 4
        %v1368 = vadd.f32 %v1361, %v1366
        %s1369 = sld [smem:[#allocation2 + $0x93]]
        %v1370 = vstv %s1369
        %v1371 = vmul.f32 %v1370, %v970
        %v1373 = vrot.slane %v1371, 6
        %v1375 = vadd.f32 %v1368, %v1373
        %s1376 = sld [smem:[#allocation2 + $0x94]]
        %v1377 = vstv %s1376
        %v1378 = vmul.f32 %v1377, %v972
        %v1379 = vadd.f32 %v1375, %v1378
        %s1380 = sld [smem:[#allocation2 + $0x95]]
        %v1381 = vstv %s1380
        %v1382 = vmul.f32 %v1381, %v974
        %v1384 = vrot.slane %v1382, 2
        %v1386 = vadd.f32 %v1379, %v1384
        %s1387 = sld [smem:[#allocation2 + $0x96]]
        %v1388 = vstv %s1387
        %v1389 = vmul.f32 %v1388, %v976
        %v1391 = vrot.slane %v1389, 4
        %v1393 = vadd.f32 %v1386, %v1391
        %s1394 = sld [smem:[#allocation2 + $0x97]]
        %v1395 = vstv %s1394
        %v1396 = vmul.f32 %v1395, %v978
        %v1398 = vrot.slane %v1396, 6
        %v1400 = vadd.f32 %v1393, %v1398
        %s1401 = sld [smem:[#allocation2 + $0x98]]
        %v1402 = vstv %s1401
        %v1403 = vmul.f32 %v1402, %v980
        %v1404 = vadd.f32 %v1400, %v1403
        %s1405 = sld [smem:[#allocation2 + $0x99]]
        %v1406 = vstv %s1405
        %v1407 = vmul.f32 %v1406, %v957
        %s1408 = sld [smem:[#allocation2 + $0x9a]]
        %v1409 = vstv %s1408
        %v1410 = vmul.f32 %v1409, %v962
        %v1412 = vrot.slane %v1410, 2
        %v1414 = vadd.f32 %v1407, %v1412
        %s1415 = sld [smem:[#allocation2 + $0x9b]]
        %v1416 = vstv %s1415
        %v1417 = vmul.f32 %v1416, %v966
        %v1419 = vrot.slane %v1417, 4
        %v1421 = vadd.f32 %v1414, %v1419
        %s1422 = sld [smem:[#allocation2 + $0x9c]]
        %v1423 = vstv %s1422
        %v1424 = vmul.f32 %v1423, %v970
        %v1426 = vrot.slane %v1424, 6
        %v1428 = vadd.f32 %v1421, %v1426
        %s1429 = sld [smem:[#allocation2 + $0x9d]]
        %v1430 = vstv %s1429
        %v1431 = vmul.f32 %v1430, %v972
        %v1432 = vadd.f32 %v1428, %v1431
        %s1433 = sld [smem:[#allocation2 + $0x9e]]
        %v1434 = vstv %s1433
        %v1435 = vmul.f32 %v1434, %v974
        %v1437 = vrot.slane %v1435, 2
        %v1439 = vadd.f32 %v1432, %v1437
        %s1440 = sld [smem:[#allocation2 + $0x9f]]
        %v1441 = vstv %s1440
        %v1442 = vmul.f32 %v1441, %v976
        %v1444 = vrot.slane %v1442, 4
        %v1446 = vadd.f32 %v1439, %v1444
        %s1447 = sld [smem:[#allocation2 + $0xa0]]
        %v1448 = vstv %s1447
        %v1449 = vmul.f32 %v1448, %v978
        %v1451 = vrot.slane %v1449, 6
        %v1453 = vadd.f32 %v1446, %v1451
        %s1454 = sld [smem:[#allocation2 + $0xa1]]
        %v1455 = vstv %s1454
        %v1456 = vmul.f32 %v1455, %v980
        %v1457 = vadd.f32 %v1453, %v1456
        %v1459 = vrot.slane %v1086, 6
        %v1462 = vrot.slane %v1139, 4
        %v1465 = vrot.slane %v1192, 2
        %v1468 = vrot.slane %v1298, 6
        %v1471 = vrot.slane %v1351, 4
        %v1474 = vrot.slane %v1404, 2
        %v1476 = vsel %vm794, %v1033, %v1459
        %v1477 = vsel %vm796, %v1476, %v1462
        %v1478 = vsel %vm798, %v1477, %v1465
        %v1479 = vsel %vm794, %v1245, %v1468
        %v1480 = vsel %vm796, %v1479, %v1471
        %v1481 = vsel %vm798, %v1480, %v1474
        %v1483 = vsel %vm803, %v1478, 0
        %v1486 = vsel %vm803, %v1481, 0
        %v1489 = vsel %vm803, %v1457, 0
        %1491 = vmatpush.msra.mxu0 0.0
        %1492 = vmatpush.msra.mxu0 0.0
        %1493 = vmatpush.msra.mxu0 0.0
        %1494 = vmatpush.msra.mxu0 0.0
        %1495 = vmatpush.msra.mxu0 0.0
        %1496 = vmatpush.msra.mxu0 0.0
        %1497 = vmatpush.msra.mxu0 0.0
        %1498 = vmatpush.msra.mxu0 0.0
        %1499 = vmatpush.msra.mxu0 0.0
        %1500 = vmatpush.msra.mxu0 0.0
        %1501 = vmatpush.msra.mxu0 0.0
        %1502 = vmatpush.msra.mxu0 0.0
        %1503 = vmatpush.msra.mxu0 0.0
        %1504 = vmatpush.msra.mxu0 0.0
        %1505 = vmatpush.msra.mxu0 %v295
        %1506 = vmatpush.msra.mxu0 %v294
        %1507 = vmatmul.f32.gmra.mxu0 %v1483
        %v1508 = vpop.f32.mrf.mxu0
        %v1509 = vadd.f32 0.0, %v1508
        %1510 = vmatmul.f32.gmra.mxu0 %v1486
        %v1511 = vpop.f32.mrf.mxu0
        %v1512 = vadd.f32 0.0, %v1511
        %1513 = vmatmul.f32.gmra.mxu0 %v1489
        %v1514 = vpop.f32.mrf.mxu0
        %v1515 = vadd.f32 0.0, %v1514
        %1516 = vdwg.mxu0
        %s1517 = sld [smem:[#allocation6 + $0x9]]
        %v1518 = vstv %s1517
        %v1519 = vadd.f32 %v1509, %v1518
        %s1520 = sld [smem:[#allocation6 + $0xa]]
        %v1521 = vstv %s1520
        %v1522 = vadd.f32 %v1509, %v1521
        %s1523 = sld [smem:[#allocation6 + $0xb]]
        %v1524 = vstv %s1523
        %v1525 = vadd.f32 %v1509, %v1524
        %s1526 = sld [smem:[#allocation6 + $0xc]]
        %v1527 = vstv %s1526
        %v1528 = vadd.f32 %v1509, %v1527
        %s1529 = sld [smem:[#allocation6 + $0xd]]
        %v1530 = vstv %s1529
        %v1531 = vadd.f32 %v1512, %v1530
        %s1532 = sld [smem:[#allocation6 + $0xe]]
        %v1533 = vstv %s1532
        %v1534 = vadd.f32 %v1512, %v1533
        %s1535 = sld [smem:[#allocation6 + $0xf]]
        %v1536 = vstv %s1535
        %v1537 = vadd.f32 %v1512, %v1536
        %s1538 = sld [smem:[#allocation6 + $0x10]]
        %v1539 = vstv %s1538
        %v1540 = vadd.f32 %v1512, %v1539
        %s1541 = sld [smem:[#allocation6 + $0x11]]
        %v1542 = vstv %s1541
        %v1543 = vadd.f32 %v1515, %v1542
        %v1545 = vrot.slane %v1522, 2
        %v1547 = vadd.f32 %v1519, %v1545
        %v1549 = vrot.slane %v1525, 4
        %v1551 = vadd.f32 %v1547, %v1549
        %v1553 = vrot.slane %v1528, 6
        %v1555 = vadd.f32 %v1551, %v1553
        %v1556 = vadd.f32 %v1555, %v1531
        %v1558 = vrot.slane %v1534, 2
        %v1560 = vadd.f32 %v1556, %v1558
        %v1562 = vrot.slane %v1537, 4
        %v1564 = vadd.f32 %v1560, %v1562
        %v1566 = vrot.slane %v1540, 6
        %v1568 = vadd.f32 %v1564, %v1566
        %v1569 = vadd.f32 %v1568, %v1543
        %v1570 = vmul.f32 %v1569, 0.11111111
        %v1571 = vsub.f32 %v1519, %v1570
        %v1573 = vrot.slane %v1570, 6
        %v1575 = vsub.f32 %v1522, %v1573
        %v1576 = vrot.slane %v1570, 4
        %v1578 = vsub.f32 %v1525, %v1576
        %v1579 = vrot.slane %v1570, 2
        %v1581 = vsub.f32 %v1528, %v1579
        %v1582 = vsub.f32 %v1531, %v1570
        %v1583 = vsub.f32 %v1534, %v1573
        %v1584 = vsub.f32 %v1537, %v1576
        %v1585 = vsub.f32 %v1540, %v1579
        %v1586 = vsub.f32 %v1543, %v1570
        %v1587 = vmul.f32 %v1571, %v1571
        %v1588 = vmul.f32 %v1575, %v1575
        %v1590 = vrot.slane %v1588, 2
        %v1592 = vadd.f32 %v1587, %v1590
        %v1593 = vmul.f32 %v1578, %v1578
        %v1595 = vrot.slane %v1593, 4
        %v1597 = vadd.f32 %v1592, %v1595
        %v1598 = vmul.f32 %v1581, %v1581
        %v1600 = vrot.slane %v1598, 6
        %v1602 = vadd.f32 %v1597, %v1600
        %v1603 = vmul.f32 %v1582, %v1582
        %v1604 = vadd.f32 %v1602, %v1603
        %v1605 = vmul.f32 %v1583, %v1583
        %v1607 = vrot.slane %v1605, 2
        %v1609 = vadd.f32 %v1604, %v1607
        %v1610 = vmul.f32 %v1584, %v1584
        %v1612 = vrot.slane %v1610, 4
        %v1614 = vadd.f32 %v1609, %v1612
        %v1615 = vmul.f32 %v1585, %v1585
        %v1617 = vrot.slane %v1615, 6
        %v1619 = vadd.f32 %v1614, %v1617
        %v1620 = vmul.f32 %v1586, %v1586
        %v1621 = vadd.f32 %v1619, %v1620
        %v1622 = vmul.f32 %v1621, 0.11111111
        %v1623 = vadd.f32 %v1622, 1e-05
        %v1624 = vrsqrt.pop %v1623
        %v1625 = vmul.f32 %v1624, %v1623
        %v1626 = vmul.f32 %v1625, %v1624
        %v1627 = vmul.f32 0.5, %v1626
        %v1628 = vsub.f32 1.5, %v1627
        %v1629 = vmul.f32 %v1624, %v1628
        %vm1630 = vweird.f32 %v1623
        %vm1631 = vweird.f32 %v1624
        %vm1632 = vmor %vm1630, %vm1631
        %v1633 = vsel %vm1632, %v1624, %v1629
        %v1634 = vmul.f32 %v1571, %v1633
        %v1635 = vmax.f32 %v1634, 0.0
        %v1637 = vrot.slane %v1633, 6
        %v1639 = vmul.f32 %v1575, %v1637
        %v1640 = vmax.f32 %v1639, 0.0
        %v1641 = vrot.slane %v1633, 4
        %v1643 = vmul.f32 %v1578, %v1641
        %v1644 = vmax.f32 %v1643, 0.0
        %v1645 = vrot.slane %v1633, 2
        %v1647 = vmul.f32 %v1581, %v1645
        %v1648 = vmax.f32 %v1647, 0.0
        %v1649 = vmul.f32 %v1582, %v1633
        %v1650 = vmax.f32 %v1649, 0.0
        %v1651 = vmul.f32 %v1583, %v1637
        %v1652 = vmax.f32 %v1651, 0.0
        %v1653 = vmul.f32 %v1584, %v1641
        %v1654 = vmax.f32 %v1653, 0.0
        %v1655 = vmul.f32 %v1585, %v1645
        %v1656 = vmax.f32 %v1655, 0.0
        %v1657 = vmul.f32 %v1586, %v1633
        %v1658 = vmax.f32 %v1657, 0.0
        %s1659 = sld [smem:[#allocation2 + $0xa2]]
        %v1660 = vstv %s1659
        %v1661 = vmul.f32 %v1660, %v1635
        %s1662 = sld [smem:[#allocation2 + $0xa3]]
        %v1663 = vstv %s1662
        %v1664 = vmul.f32 %v1663, %v1640
        %v1666 = vrot.slane %v1664, 2
        %v1668 = vadd.f32 %v1661, %v1666
        %s1669 = sld [smem:[#allocation2 + $0xa4]]
        %v1670 = vstv %s1669
        %v1671 = vmul.f32 %v1670, %v1644
        %v1673 = vrot.slane %v1671, 4
        %v1675 = vadd.f32 %v1668, %v1673
        %s1676 = sld [smem:[#allocation2 + $0xa5]]
        %v1677 = vstv %s1676
        %v1678 = vmul.f32 %v1677, %v1648
        %v1680 = vrot.slane %v1678, 6
        %v1682 = vadd.f32 %v1675, %v1680
        %s1683 = sld [smem:[#allocation2 + $0xa6]]
        %v1684 = vstv %s1683
        %v1685 = vmul.f32 %v1684, %v1650
        %v1686 = vadd.f32 %v1682, %v1685
        %s1687 = sld [smem:[#allocation2 + $0xa7]]
        %v1688 = vstv %s1687
        %v1689 = vmul.f32 %v1688, %v1652
        %v1691 = vrot.slane %v1689, 2
        %v1693 = vadd.f32 %v1686, %v1691
        %s1694 = sld [smem:[#allocation2 + $0xa8]]
        %v1695 = vstv %s1694
        %v1696 = vmul.f32 %v1695, %v1654
        %v1698 = vrot.slane %v1696, 4
        %v1700 = vadd.f32 %v1693, %v1698
        %s1701 = sld [smem:[#allocation2 + $0xa9]]
        %v1702 = vstv %s1701
        %v1703 = vmul.f32 %v1702, %v1656
        %v1705 = vrot.slane %v1703, 6
        %v1707 = vadd.f32 %v1700, %v1705
        %s1708 = sld [smem:[#allocation2 + $0xaa]]
        %v1709 = vstv %s1708
        %v1710 = vmul.f32 %v1709, %v1658
        %v1711 = vadd.f32 %v1707, %v1710
        %s1712 = sld [smem:[#allocation2 + $0xab]]
        %v1713 = vstv %s1712
        %v1714 = vmul.f32 %v1713, %v1635
        %s1715 = sld [smem:[#allocation2 + $0xac]]
        %v1716 = vstv %s1715
        %v1717 = vmul.f32 %v1716, %v1640
        %v1719 = vrot.slane %v1717, 2
        %v1721 = vadd.f32 %v1714, %v1719
        %s1722 = sld [smem:[#allocation2 + $0xad]]
        %v1723 = vstv %s1722
        %v1724 = vmul.f32 %v1723, %v1644
        %v1726 = vrot.slane %v1724, 4
        %v1728 = vadd.f32 %v1721, %v1726
        %s1729 = sld [smem:[#allocation2 + $0xae]]
        %v1730 = vstv %s1729
        %v1731 = vmul.f32 %v1730, %v1648
        %v1733 = vrot.slane %v1731, 6
        %v1735 = vadd.f32 %v1728, %v1733
        %s1736 = sld [smem:[#allocation2 + $0xaf]]
        %v1737 = vstv %s1736
        %v1738 = vmul.f32 %v1737, %v1650
        %v1739 = vadd.f32 %v1735, %v1738
        %s1740 = sld [smem:[#allocation2 + $0xb0]]
        %v1741 = vstv %s1740
        %v1742 = vmul.f32 %v1741, %v1652
        %v1744 = vrot.slane %v1742, 2
        %v1746 = vadd.f32 %v1739, %v1744
        %s1747 = sld [smem:[#allocation2 + $0xb1]]
        %v1748 = vstv %s1747
        %v1749 = vmul.f32 %v1748, %v1654
        %v1751 = vrot.slane %v1749, 4
        %v1753 = vadd.f32 %v1746, %v1751
        %s1754 = sld [smem:[#allocation2 + $0xb2]]
        %v1755 = vstv %s1754
        %v1756 = vmul.f32 %v1755, %v1656
        %v1758 = vrot.slane %v1756, 6
        %v1760 = vadd.f32 %v1753, %v1758
        %s1761 = sld [smem:[#allocation2 + $0xb3]]
        %v1762 = vstv %s1761
        %v1763 = vmul.f32 %v1762, %v1658
        %v1764 = vadd.f32 %v1760, %v1763
        %s1765 = sld [smem:[#allocation2 + $0xb4]]
        %v1766 = vstv %s1765
        %v1767 = vmul.f32 %v1766, %v1635
        %s1768 = sld [smem:[#allocation2 + $0xb5]]
        %v1769 = vstv %s1768
        %v1770 = vmul.f32 %v1769, %v1640
        %v1772 = vrot.slane %v1770, 2
        %v1774 = vadd.f32 %v1767, %v1772
        %s1775 = sld [smem:[#allocation2 + $0xb6]]
        %v1776 = vstv %s1775
        %v1777 = vmul.f32 %v1776, %v1644
        %v1779 = vrot.slane %v1777, 4
        %v1781 = vadd.f32 %v1774, %v1779
        %s1782 = sld [smem:[#allocation2 + $0xb7]]
        %v1783 = vstv %s1782
        %v1784 = vmul.f32 %v1783, %v1648
        %v1786 = vrot.slane %v1784, 6
        %v1788 = vadd.f32 %v1781, %v1786
        %s1789 = sld [smem:[#allocation2 + $0xb8]]
        %v1790 = vstv %s1789
        %v1791 = vmul.f32 %v1790, %v1650
        %v1792 = vadd.f32 %v1788, %v1791
        %s1793 = sld [smem:[#allocation2 + $0xb9]]
        %v1794 = vstv %s1793
        %v1795 = vmul.f32 %v1794, %v1652
        %v1797 = vrot.slane %v1795, 2
        %v1799 = vadd.f32 %v1792, %v1797
        %s1800 = sld [smem:[#allocation2 + $0xba]]
        %v1801 = vstv %s1800
        %v1802 = vmul.f32 %v1801, %v1654
        %v1804 = vrot.slane %v1802, 4
        %v1806 = vadd.f32 %v1799, %v1804
        %s1807 = sld [smem:[#allocation2 + $0xbb]]
        %v1808 = vstv %s1807
        %v1809 = vmul.f32 %v1808, %v1656
        %v1811 = vrot.slane %v1809, 6
        %v1813 = vadd.f32 %v1806, %v1811
        %s1814 = sld [smem:[#allocation2 + $0xbc]]
        %v1815 = vstv %s1814
        %v1816 = vmul.f32 %v1815, %v1658
        %v1817 = vadd.f32 %v1813, %v1816
        %s1818 = sld [smem:[#allocation2 + $0xbd]]
        %v1819 = vstv %s1818
        %v1820 = vmul.f32 %v1819, %v1635
        %s1821 = sld [smem:[#allocation2 + $0xbe]]
        %v1822 = vstv %s1821
        %v1823 = vmul.f32 %v1822, %v1640
        %v1825 = vrot.slane %v1823, 2
        %v1827 = vadd.f32 %v1820, %v1825
        %s1828 = sld [smem:[#allocation2 + $0xbf]]
        %v1829 = vstv %s1828
        %v1830 = vmul.f32 %v1829, %v1644
        %v1832 = vrot.slane %v1830, 4
        %v1834 = vadd.f32 %v1827, %v1832
        %s1835 = sld [smem:[#allocation2 + $0xc0]]
        %v1836 = vstv %s1835
        %v1837 = vmul.f32 %v1836, %v1648
        %v1839 = vrot.slane %v1837, 6
        %v1841 = vadd.f32 %v1834, %v1839
        %s1842 = sld [smem:[#allocation2 + $0xc1]]
        %v1843 = vstv %s1842
        %v1844 = vmul.f32 %v1843, %v1650
        %v1845 = vadd.f32 %v1841, %v1844
        %s1846 = sld [smem:[#allocation2 + $0xc2]]
        %v1847 = vstv %s1846
        %v1848 = vmul.f32 %v1847, %v1652
        %v1850 = vrot.slane %v1848, 2
        %v1852 = vadd.f32 %v1845, %v1850
        %s1853 = sld [smem:[#allocation2 + $0xc3]]
        %v1854 = vstv %s1853
        %v1855 = vmul.f32 %v1854, %v1654
        %v1857 = vrot.slane %v1855, 4
        %v1859 = vadd.f32 %v1852, %v1857
        %s1860 = sld [smem:[#allocation2 + $0xc4]]
        %v1861 = vstv %s1860
        %v1862 = vmul.f32 %v1861, %v1656
        %v1864 = vrot.slane %v1862, 6
        %v1866 = vadd.f32 %v1859, %v1864
        %s1867 = sld [smem:[#allocation2 + $0xc5]]
        %v1868 = vstv %s1867
        %v1869 = vmul.f32 %v1868, %v1658
        %v1870 = vadd.f32 %v1866, %v1869
        %s1871 = sld [smem:[#allocation2 + $0xc6]]
        %v1872 = vstv %s1871
        %v1873 = vmul.f32 %v1872, %v1635
        %s1874 = sld [smem:[#allocation2 + $0xc7]]
        %v1875 = vstv %s1874
        %v1876 = vmul.f32 %v1875, %v1640
        %v1878 = vrot.slane %v1876, 2
        %v1880 = vadd.f32 %v1873, %v1878
        %s1881 = sld [smem:[#allocation2 + $0xc8]]
        %v1882 = vstv %s1881
        %v1883 = vmul.f32 %v1882, %v1644
        %v1885 = vrot.slane %v1883, 4
        %v1887 = vadd.f32 %v1880, %v1885
        %s1888 = sld [smem:[#allocation2 + $0xc9]]
        %v1889 = vstv %s1888
        %v1890 = vmul.f32 %v1889, %v1648
        %v1892 = vrot.slane %v1890, 6
        %v1894 = vadd.f32 %v1887, %v1892
        %s1895 = sld [smem:[#allocation2 + $0xca]]
        %v1896 = vstv %s1895
        %v1897 = vmul.f32 %v1896, %v1650
        %v1898 = vadd.f32 %v1894, %v1897
        %s1899 = sld [smem:[#allocation2 + $0xcb]]
        %v1900 = vstv %s1899
        %v1901 = vmul.f32 %v1900, %v1652
        %v1903 = vrot.slane %v1901, 2
        %v1905 = vadd.f32 %v1898, %v1903
        %s1906 = sld [smem:[#allocation2 + $0xcc]]
        %v1907 = vstv %s1906
        %v1908 = vmul.f32 %v1907, %v1654
        %v1910 = vrot.slane %v1908, 4
        %v1912 = vadd.f32 %v1905, %v1910
        %s1913 = sld [smem:[#allocation2 + $0xcd]]
        %v1914 = vstv %s1913
        %v1915 = vmul.f32 %v1914, %v1656
        %v1917 = vrot.slane %v1915, 6
        %v1919 = vadd.f32 %v1912, %v1917
        %s1920 = sld [smem:[#allocation2 + $0xce]]
        %v1921 = vstv %s1920
        %v1922 = vmul.f32 %v1921, %v1658
        %v1923 = vadd.f32 %v1919, %v1922
        %s1924 = sld [smem:[#allocation2 + $0xcf]]
        %v1925 = vstv %s1924
        %v1926 = vmul.f32 %v1925, %v1635
        %s1927 = sld [smem:[#allocation2 + $0xd0]]
        %v1928 = vstv %s1927
        %v1929 = vmul.f32 %v1928, %v1640
        %v1931 = vrot.slane %v1929, 2
        %v1933 = vadd.f32 %v1926, %v1931
        %s1934 = sld [smem:[#allocation2 + $0xd1]]
        %v1935 = vstv %s1934
        %v1936 = vmul.f32 %v1935, %v1644
        %v1938 = vrot.slane %v1936, 4
        %v1940 = vadd.f32 %v1933, %v1938
        %s1941 = sld [smem:[#allocation2 + $0xd2]]
        %v1942 = vstv %s1941
        %v1943 = vmul.f32 %v1942, %v1648
        %v1945 = vrot.slane %v1943, 6
        %v1947 = vadd.f32 %v1940, %v1945
        %s1948 = sld [smem:[#allocation2 + $0xd3]]
        %v1949 = vstv %s1948
        %v1950 = vmul.f32 %v1949, %v1650
        %v1951 = vadd.f32 %v1947, %v1950
        %s1952 = sld [smem:[#allocation2 + $0xd4]]
        %v1953 = vstv %s1952
        %v1954 = vmul.f32 %v1953, %v1652
        %v1956 = vrot.slane %v1954, 2
        %v1958 = vadd.f32 %v1951, %v1956
        %s1959 = sld [smem:[#allocation2 + $0xd5]]
        %v1960 = vstv %s1959
        %v1961 = vmul.f32 %v1960, %v1654
        %v1963 = vrot.slane %v1961, 4
        %v1965 = vadd.f32 %v1958, %v1963
        %s1966 = sld [smem:[#allocation2 + $0xd6]]
        %v1967 = vstv %s1966
        %v1968 = vmul.f32 %v1967, %v1656
        %v1970 = vrot.slane %v1968, 6
        %v1972 = vadd.f32 %v1965, %v1970
        %s1973 = sld [smem:[#allocation2 + $0xd7]]
        %v1974 = vstv %s1973
        %v1975 = vmul.f32 %v1974, %v1658
        %v1976 = vadd.f32 %v1972, %v1975
        %s1977 = sld [smem:[#allocation2 + $0xd8]]
        %v1978 = vstv %s1977
        %v1979 = vmul.f32 %v1978, %v1635
        %s1980 = sld [smem:[#allocation2 + $0xd9]]
        %v1981 = vstv %s1980
        %v1982 = vmul.f32 %v1981, %v1640
        %v1984 = vrot.slane %v1982, 2
        %v1986 = vadd.f32 %v1979, %v1984
        %s1987 = sld [smem:[#allocation2 + $0xda]]
        %v1988 = vstv %s1987
        %v1989 = vmul.f32 %v1988, %v1644
        %v1991 = vrot.slane %v1989, 4
        %v1993 = vadd.f32 %v1986, %v1991
        %s1994 = sld [smem:[#allocation2 + $0xdb]]
        %v1995 = vstv %s1994
        %v1996 = vmul.f32 %v1995, %v1648
        %v1998 = vrot.slane %v1996, 6
        %v2000 = vadd.f32 %v1993, %v1998
        %s2001 = sld [smem:[#allocation2 + $0xdc]]
        %v2002 = vstv %s2001
        %v2003 = vmul.f32 %v2002, %v1650
        %v2004 = vadd.f32 %v2000, %v2003
        %s2005 = sld [smem:[#allocation2 + $0xdd]]
        %v2006 = vstv %s2005
        %v2007 = vmul.f32 %v2006, %v1652
        %v2009 = vrot.slane %v2007, 2
        %v2011 = vadd.f32 %v2004, %v2009
        %s2012 = sld [smem:[#allocation2 + $0xde]]
        %v2013 = vstv %s2012
        %v2014 = vmul.f32 %v2013, %v1654
        %v2016 = vrot.slane %v2014, 4
        %v2018 = vadd.f32 %v2011, %v2016
        %s2019 = sld [smem:[#allocation2 + $0xdf]]
        %v2020 = vstv %s2019
        %v2021 = vmul.f32 %v2020, %v1656
        %v2023 = vrot.slane %v2021, 6
        %v2025 = vadd.f32 %v2018, %v2023
        %s2026 = sld [smem:[#allocation2 + $0xe0]]
        %v2027 = vstv %s2026
        %v2028 = vmul.f32 %v2027, %v1658
        %v2029 = vadd.f32 %v2025, %v2028
        %s2030 = sld [smem:[#allocation2 + $0xe1]]
        %v2031 = vstv %s2030
        %v2032 = vmul.f32 %v2031, %v1635
        %s2033 = sld [smem:[#allocation2 + $0xe2]]
        %v2034 = vstv %s2033
        %v2035 = vmul.f32 %v2034, %v1640
        %v2037 = vrot.slane %v2035, 2
        %v2039 = vadd.f32 %v2032, %v2037
        %s2040 = sld [smem:[#allocation2 + $0xe3]]
        %v2041 = vstv %s2040
        %v2042 = vmul.f32 %v2041, %v1644
        %v2044 = vrot.slane %v2042, 4
        %v2046 = vadd.f32 %v2039, %v2044
        %s2047 = sld [smem:[#allocation2 + $0xe4]]
        %v2048 = vstv %s2047
        %v2049 = vmul.f32 %v2048, %v1648
        %v2051 = vrot.slane %v2049, 6
        %v2053 = vadd.f32 %v2046, %v2051
        %s2054 = sld [smem:[#allocation2 + $0xe5]]
        %v2055 = vstv %s2054
        %v2056 = vmul.f32 %v2055, %v1650
        %v2057 = vadd.f32 %v2053, %v2056
        %s2058 = sld [smem:[#allocation2 + $0xe6]]
        %v2059 = vstv %s2058
        %v2060 = vmul.f32 %v2059, %v1652
        %v2062 = vrot.slane %v2060, 2
        %v2064 = vadd.f32 %v2057, %v2062
        %s2065 = sld [smem:[#allocation2 + $0xe7]]
        %v2066 = vstv %s2065
        %v2067 = vmul.f32 %v2066, %v1654
        %v2069 = vrot.slane %v2067, 4
        %v2071 = vadd.f32 %v2064, %v2069
        %s2072 = sld [smem:[#allocation2 + $0xe8]]
        %v2073 = vstv %s2072
        %v2074 = vmul.f32 %v2073, %v1656
        %v2076 = vrot.slane %v2074, 6
        %v2078 = vadd.f32 %v2071, %v2076
        %s2079 = sld [smem:[#allocation2 + $0xe9]]
        %v2080 = vstv %s2079
        %v2081 = vmul.f32 %v2080, %v1658
        %v2082 = vadd.f32 %v2078, %v2081
        %s2083 = sld [smem:[#allocation2 + $0xea]]
        %v2084 = vstv %s2083
        %v2085 = vmul.f32 %v2084, %v1635
        %s2086 = sld [smem:[#allocation2 + $0xeb]]
        %v2087 = vstv %s2086
        %v2088 = vmul.f32 %v2087, %v1640
        %v2090 = vrot.slane %v2088, 2
        %v2092 = vadd.f32 %v2085, %v2090
        %s2093 = sld [smem:[#allocation2 + $0xec]]
        %v2094 = vstv %s2093
        %v2095 = vmul.f32 %v2094, %v1644
        %v2097 = vrot.slane %v2095, 4
        %v2099 = vadd.f32 %v2092, %v2097
        %s2100 = sld [smem:[#allocation2 + $0xed]]
        %v2101 = vstv %s2100
        %v2102 = vmul.f32 %v2101, %v1648
        %v2104 = vrot.slane %v2102, 6
        %v2106 = vadd.f32 %v2099, %v2104
        %s2107 = sld [smem:[#allocation2 + $0xee]]
        %v2108 = vstv %s2107
        %v2109 = vmul.f32 %v2108, %v1650
        %v2110 = vadd.f32 %v2106, %v2109
        %s2111 = sld [smem:[#allocation2 + $0xef]]
        %v2112 = vstv %s2111
        %v2113 = vmul.f32 %v2112, %v1652
        %v2115 = vrot.slane %v2113, 2
        %v2117 = vadd.f32 %v2110, %v2115
        %s2118 = sld [smem:[#allocation2 + $0xf0]]
        %v2119 = vstv %s2118
        %v2120 = vmul.f32 %v2119, %v1654
        %v2122 = vrot.slane %v2120, 4
        %v2124 = vadd.f32 %v2117, %v2122
        %s2125 = sld [smem:[#allocation2 + $0xf1]]
        %v2126 = vstv %s2125
        %v2127 = vmul.f32 %v2126, %v1656
        %v2129 = vrot.slane %v2127, 6
        %v2131 = vadd.f32 %v2124, %v2129
        %s2132 = sld [smem:[#allocation2 + $0xf2]]
        %v2133 = vstv %s2132
        %v2134 = vmul.f32 %v2133, %v1658
        %v2135 = vadd.f32 %v2131, %v2134
        %v2137 = vrot.slane %v1764, 6
        %v2140 = vrot.slane %v1817, 4
        %v2143 = vrot.slane %v1870, 2
        %v2146 = vrot.slane %v1976, 6
        %v2149 = vrot.slane %v2029, 4
        %v2152 = vrot.slane %v2082, 2
        %v2154 = vsel %vm794, %v1711, %v2137
        %v2155 = vsel %vm796, %v2154, %v2140
        %v2156 = vsel %vm798, %v2155, %v2143
        %v2157 = vsel %vm794, %v1923, %v2146
        %v2158 = vsel %vm796, %v2157, %v2149
        %v2159 = vsel %vm798, %v2158, %v2152
        %v2161 = vsel %vm803, %v2156, 0
        %v2164 = vsel %vm803, %v2159, 0
        %v2167 = vsel %vm803, %v2135, 0
        %2169 = vmatpush.msra.mxu0 0.0
        %2170 = vmatpush.msra.mxu0 0.0
        %2171 = vmatpush.msra.mxu0 0.0
        %2172 = vmatpush.msra.mxu0 0.0
        %2173 = vmatpush.msra.mxu0 0.0
        %2174 = vmatpush.msra.mxu0 0.0
        %2175 = vmatpush.msra.mxu0 0.0
        %2176 = vmatpush.msra.mxu0 0.0
        %2177 = vmatpush.msra.mxu0 0.0
        %2178 = vmatpush.msra.mxu0 0.0
        %2179 = vmatpush.msra.mxu0 0.0
        %2180 = vmatpush.msra.mxu0 0.0
        %2181 = vmatpush.msra.mxu0 0.0
        %2182 = vmatpush.msra.mxu0 0.0
        %2183 = vmatpush.msra.mxu0 %v295
        %2184 = vmatpush.msra.mxu0 %v294
        %2185 = vmatmul.f32.gmra.mxu0 %v2161
        %v2186 = vpop.f32.mrf.mxu0
        %v2187 = vadd.f32 0.0, %v2186
        %2188 = vmatmul.f32.gmra.mxu0 %v2164
        %v2189 = vpop.f32.mrf.mxu0
        %v2190 = vadd.f32 0.0, %v2189
        %2191 = vmatmul.f32.gmra.mxu0 %v2167
        %v2192 = vpop.f32.mrf.mxu0
        %v2193 = vadd.f32 0.0, %v2192
        %2194 = vdwg.mxu0
        %s2195 = sld [smem:[#allocation6 + $0x12]]
        %v2196 = vstv %s2195
        %v2197 = vadd.f32 %v2187, %v2196
        %s2198 = sld [smem:[#allocation6 + $0x13]]
        %v2199 = vstv %s2198
        %v2200 = vadd.f32 %v2187, %v2199
        %s2201 = sld [smem:[#allocation6 + $0x14]]
        %v2202 = vstv %s2201
        %v2203 = vadd.f32 %v2187, %v2202
        %s2204 = sld [smem:[#allocation6 + $0x15]]
        %v2205 = vstv %s2204
        %v2206 = vadd.f32 %v2187, %v2205
        %s2207 = sld [smem:[#allocation6 + $0x16]]
        %v2208 = vstv %s2207
        %v2209 = vadd.f32 %v2190, %v2208
        %s2210 = sld [smem:[#allocation6 + $0x17]]
        %v2211 = vstv %s2210
        %v2212 = vadd.f32 %v2190, %v2211
        %s2213 = sld [smem:[#allocation6 + $0x18]]
        %v2214 = vstv %s2213
        %v2215 = vadd.f32 %v2190, %v2214
        %s2216 = sld [smem:[#allocation6 + $0x19]]
        %v2217 = vstv %s2216
        %v2218 = vadd.f32 %v2190, %v2217
        %s2219 = sld [smem:[#allocation6 + $0x1a]]
        %v2220 = vstv %s2219
        %v2221 = vadd.f32 %v2193, %v2220
        %v2223 = vrot.slane %v2200, 2
        %v2225 = vadd.f32 %v2197, %v2223
        %v2227 = vrot.slane %v2203, 4
        %v2229 = vadd.f32 %v2225, %v2227
        %v2231 = vrot.slane %v2206, 6
        %v2233 = vadd.f32 %v2229, %v2231
        %v2234 = vadd.f32 %v2233, %v2209
        %v2236 = vrot.slane %v2212, 2
        %v2238 = vadd.f32 %v2234, %v2236
        %v2240 = vrot.slane %v2215, 4
        %v2242 = vadd.f32 %v2238, %v2240
        %v2244 = vrot.slane %v2218, 6
        %v2246 = vadd.f32 %v2242, %v2244
        %v2247 = vadd.f32 %v2246, %v2221
        %v2248 = vmul.f32 %v2247, 0.11111111
        %v2249 = vsub.f32 %v2197, %v2248
        %v2251 = vrot.slane %v2248, 6
        %v2253 = vsub.f32 %v2200, %v2251
        %v2254 = vrot.slane %v2248, 4
        %v2256 = vsub.f32 %v2203, %v2254
        %v2257 = vrot.slane %v2248, 2
        %v2259 = vsub.f32 %v2206, %v2257
        %v2260 = vsub.f32 %v2209, %v2248
        %v2261 = vsub.f32 %v2212, %v2251
        %v2262 = vsub.f32 %v2215, %v2254
        %v2263 = vsub.f32 %v2218, %v2257
        %v2264 = vsub.f32 %v2221, %v2248
        %v2265 = vmul.f32 %v2249, %v2249
        %v2266 = vmul.f32 %v2253, %v2253
        %v2268 = vrot.slane %v2266, 2
        %v2270 = vadd.f32 %v2265, %v2268
        %v2271 = vmul.f32 %v2256, %v2256
        %v2273 = vrot.slane %v2271, 4
        %v2275 = vadd.f32 %v2270, %v2273
        %v2276 = vmul.f32 %v2259, %v2259
        %v2278 = vrot.slane %v2276, 6
        %v2280 = vadd.f32 %v2275, %v2278
        %v2281 = vmul.f32 %v2260, %v2260
        %v2282 = vadd.f32 %v2280, %v2281
        %v2283 = vmul.f32 %v2261, %v2261
        %v2285 = vrot.slane %v2283, 2
        %v2287 = vadd.f32 %v2282, %v2285
        %v2288 = vmul.f32 %v2262, %v2262
        %v2290 = vrot.slane %v2288, 4
        %v2292 = vadd.f32 %v2287, %v2290
        %v2293 = vmul.f32 %v2263, %v2263
        %v2295 = vrot.slane %v2293, 6
        %v2297 = vadd.f32 %v2292, %v2295
        %v2298 = vmul.f32 %v2264, %v2264
        %v2299 = vadd.f32 %v2297, %v2298
        %v2300 = vmul.f32 %v2299, 0.11111111
        %v2301 = vadd.f32 %v2300, 1e-05
        %v2302 = vrsqrt.pop %v2301
        %v2303 = vmul.f32 %v2302, %v2301
        %v2304 = vmul.f32 %v2303, %v2302
        %v2305 = vmul.f32 0.5, %v2304
        %v2306 = vsub.f32 1.5, %v2305
        %v2307 = vmul.f32 %v2302, %v2306
        %vm2308 = vweird.f32 %v2301
        %vm2309 = vweird.f32 %v2302
        %vm2310 = vmor %vm2308, %vm2309
        %v2311 = vsel %vm2310, %v2302, %v2307
        %v2312 = vmul.f32 %v2249, %v2311
        %v2313 = vmax.f32 %v2312, 0.0
        %v2315 = vrot.slane %v2311, 6
        %v2317 = vmul.f32 %v2253, %v2315
        %v2318 = vmax.f32 %v2317, 0.0
        %v2319 = vrot.slane %v2311, 4
        %v2321 = vmul.f32 %v2256, %v2319
        %v2322 = vmax.f32 %v2321, 0.0
        %v2323 = vrot.slane %v2311, 2
        %v2325 = vmul.f32 %v2259, %v2323
        %v2326 = vmax.f32 %v2325, 0.0
        %v2327 = vmul.f32 %v2260, %v2311
        %v2328 = vmax.f32 %v2327, 0.0
        %v2329 = vmul.f32 %v2261, %v2315
        %v2330 = vmax.f32 %v2329, 0.0
        %v2331 = vmul.f32 %v2262, %v2319
        %v2332 = vmax.f32 %v2331, 0.0
        %v2333 = vmul.f32 %v2263, %v2323
        %v2334 = vmax.f32 %v2333, 0.0
        %v2335 = vmul.f32 %v2264, %v2311
        %v2336 = vmax.f32 %v2335, 0.0
        %v2337 = vld [vmem:[#allocation8] sm:$0xff]
        %v2338 = vld [vmem:[#allocation8 + $0x8] sm:$0xff]
        %s2339 = scalar_lea.vmem [#allocation8], 16
        %v2340 = vld [vmem:[%s2339] sm:$0xff]
        %v2341 = vld [vmem:[%s2339 + $0x8] sm:$0xff]
        %v2343 = vrot.slane %v2318, 2
        %v2344 = vsel %vm803, %v2343, 0
        %2346 = vmatpush.msra.mxu0 0.0
        %2347 = vmatpush.msra.mxu0 0.0
        %2348 = vmatpush.msra.mxu0 0.0
        %2349 = vmatpush.msra.mxu0 0.0
        %2350 = vmatpush.msra.mxu0 0.0
        %2351 = vmatpush.msra.mxu0 0.0
        %2352 = vmatpush.msra.mxu0 0.0
        %2353 = vmatpush.msra.mxu0 0.0
        %2354 = vmatpush.msra.mxu0 0.0
        %2355 = vmatpush.msra.mxu0 0.0
        %2356 = vmatpush.msra.mxu0 0.0
        %2357 = vmatpush.msra.mxu0 0.0
        %2358 = vmatpush.msra.mxu0 0.0
        %2359 = vmatpush.msra.mxu0 0.0
        %2360 = vmatpush.msra.mxu0 %v2341
        %2361 = vmatpush.msra.mxu0 %v2340
        %2362 = vmatmul.f32.gmra.mxu0 %v2344
        %v2363 = vpop.f32.mrf.mxu0
        %v2364 = vadd.f32 0.0, %v2363
        %2365 = vdwg.mxu0
        %v2367 = vsel %vm803, %v2313, 0
        %2369 = vmatpush.msra.mxu0 0.0
        %2370 = vmatpush.msra.mxu0 0.0
        %2371 = vmatpush.msra.mxu0 0.0
        %2372 = vmatpush.msra.mxu0 0.0
        %2373 = vmatpush.msra.mxu0 0.0
        %2374 = vmatpush.msra.mxu0 0.0
        %2375 = vmatpush.msra.mxu0 0.0
        %2376 = vmatpush.msra.mxu0 0.0
        %2377 = vmatpush.msra.mxu0 0.0
        %2378 = vmatpush.msra.mxu0 0.0
        %2379 = vmatpush.msra.mxu0 0.0
        %2380 = vmatpush.msra.mxu0 0.0
        %2381 = vmatpush.msra.mxu0 0.0
        %2382 = vmatpush.msra.mxu0 0.0
        %2383 = vmatpush.msra.mxu0 %v2338
        %2384 = vmatpush.msra.mxu0 %v2337
        %2385 = vmatmul.f32.gmra.mxu0 %v2367
        %v2386 = vpop.f32.mrf.mxu0
        %v2387 = vadd.f32 %v2364, %v2386
        %2388 = vdwg.mxu0
        %s2389 = scalar_lea.vmem [#allocation8], 32
        %v2390 = vld [vmem:[%s2389] sm:$0xff]
        %v2391 = vld [vmem:[%s2389 + $0x8] sm:$0xff]
        %v2393 = vrot.slane %v2322, 4
        %v2394 = vsel %vm803, %v2393, 0
        %2396 = vmatpush.msra.mxu0 0.0
        %2397 = vmatpush.msra.mxu0 0.0
        %2398 = vmatpush.msra.mxu0 0.0
        %2399 = vmatpush.msra.mxu0 0.0
        %2400 = vmatpush.msra.mxu0 0.0
        %2401 = vmatpush.msra.mxu0 0.0
        %2402 = vmatpush.msra.mxu0 0.0
        %2403 = vmatpush.msra.mxu0 0.0
        %2404 = vmatpush.msra.mxu0 0.0
        %2405 = vmatpush.msra.mxu0 0.0
        %2406 = vmatpush.msra.mxu0 0.0
        %2407 = vmatpush.msra.mxu0 0.0
        %2408 = vmatpush.msra.mxu0 0.0
        %2409 = vmatpush.msra.mxu0 0.0
        %2410 = vmatpush.msra.mxu0 %v2391
        %2411 = vmatpush.msra.mxu0 %v2390
        %2412 = vmatmul.f32.gmra.mxu0 %v2394
        %v2413 = vpop.f32.mrf.mxu0
        %v2414 = vadd.f32 0.0, %v2413
        %2415 = vdwg.mxu0
        %v2416 = vadd.f32 %v2387, %v2414
        %s2417 = scalar_lea.vmem [#allocation8], 48
        %v2418 = vld [vmem:[%s2417] sm:$0xff]
        %v2419 = vld [vmem:[%s2417 + $0x8] sm:$0xff]
        %v2421 = vrot.slane %v2326, 6
        %v2422 = vsel %vm803, %v2421, 0
        %2424 = vmatpush.msra.mxu0 0.0
        %2425 = vmatpush.msra.mxu0 0.0
        %2426 = vmatpush.msra.mxu0 0.0
        %2427 = vmatpush.msra.mxu0 0.0
        %2428 = vmatpush.msra.mxu0 0.0
        %2429 = vmatpush.msra.mxu0 0.0
        %2430 = vmatpush.msra.mxu0 0.0
        %2431 = vmatpush.msra.mxu0 0.0
        %2432 = vmatpush.msra.mxu0 0.0
        %2433 = vmatpush.msra.mxu0 0.0
        %2434 = vmatpush.msra.mxu0 0.0
        %2435 = vmatpush.msra.mxu0 0.0
        %2436 = vmatpush.msra.mxu0 0.0
        %2437 = vmatpush.msra.mxu0 0.0
        %2438 = vmatpush.msra.mxu0 %v2419
        %2439 = vmatpush.msra.mxu0 %v2418
        %2440 = vmatmul.f32.gmra.mxu0 %v2422
        %v2441 = vpop.f32.mrf.mxu0
        %v2442 = vadd.f32 0.0, %v2441
        %2443 = vdwg.mxu0
        %v2444 = vadd.f32 %v2416, %v2442
        %s2445 = scalar_lea.vmem [#allocation8], 64
        %v2446 = vld [vmem:[%s2445] sm:$0xff]
        %v2447 = vld [vmem:[%s2445 + $0x8] sm:$0xff]
        %v2449 = vsel %vm803, %v2328, 0
        %2451 = vmatpush.msra.mxu0 0.0
        %2452 = vmatpush.msra.mxu0 0.0
        %2453 = vmatpush.msra.mxu0 0.0
        %2454 = vmatpush.msra.mxu0 0.0
        %2455 = vmatpush.msra.mxu0 0.0
        %2456 = vmatpush.msra.mxu0 0.0
        %2457 = vmatpush.msra.mxu0 0.0
        %2458 = vmatpush.msra.mxu0 0.0
        %2459 = vmatpush.msra.mxu0 0.0
        %2460 = vmatpush.msra.mxu0 0.0
        %2461 = vmatpush.msra.mxu0 0.0
        %2462 = vmatpush.msra.mxu0 0.0
        %2463 = vmatpush.msra.mxu0 0.0
        %2464 = vmatpush.msra.mxu0 0.0
        %2465 = vmatpush.msra.mxu0 %v2447
        %2466 = vmatpush.msra.mxu0 %v2446
        %2467 = vmatmul.f32.gmra.mxu0 %v2449
        %v2468 = vpop.f32.mrf.mxu0
        %v2469 = vadd.f32 0.0, %v2468
        %2470 = vdwg.mxu0
        %v2471 = vadd.f32 %v2444, %v2469
        %s2472 = scalar_lea.vmem [#allocation8], 80
        %v2473 = vld [vmem:[%s2472] sm:$0xff]
        %v2474 = vld [vmem:[%s2472 + $0x8] sm:$0xff]
        %v2476 = vrot.slane %v2330, 2
        %v2477 = vsel %vm803, %v2476, 0
        %2479 = vmatpush.msra.mxu0 0.0
        %2480 = vmatpush.msra.mxu0 0.0
        %2481 = vmatpush.msra.mxu0 0.0
        %2482 = vmatpush.msra.mxu0 0.0
        %2483 = vmatpush.msra.mxu0 0.0
        %2484 = vmatpush.msra.mxu0 0.0
        %2485 = vmatpush.msra.mxu0 0.0
        %2486 = vmatpush.msra.mxu0 0.0
        %2487 = vmatpush.msra.mxu0 0.0
        %2488 = vmatpush.msra.mxu0 0.0
        %2489 = vmatpush.msra.mxu0 0.0
        %2490 = vmatpush.msra.mxu0 0.0
        %2491 = vmatpush.msra.mxu0 0.0
        %2492 = vmatpush.msra.mxu0 0.0
        %2493 = vmatpush.msra.mxu0 %v2474
        %2494 = vmatpush.msra.mxu0 %v2473
        %2495 = vmatmul.f32.gmra.mxu0 %v2477
        %v2496 = vpop.f32.mrf.mxu0
        %v2497 = vadd.f32 0.0, %v2496
        %2498 = vdwg.mxu0
        %v2499 = vadd.f32 %v2471, %v2497
        %s2500 = scalar_lea.vmem [#allocation8], 96
        %v2501 = vld [vmem:[%s2500] sm:$0xff]
        %v2502 = vld [vmem:[%s2500 + $0x8] sm:$0xff]
        %v2504 = vrot.slane %v2332, 4
        %v2505 = vsel %vm803, %v2504, 0
        %2507 = vmatpush.msra.mxu0 0.0
        %2508 = vmatpush.msra.mxu0 0.0
        %2509 = vmatpush.msra.mxu0 0.0
        %2510 = vmatpush.msra.mxu0 0.0
        %2511 = vmatpush.msra.mxu0 0.0
        %2512 = vmatpush.msra.mxu0 0.0
        %2513 = vmatpush.msra.mxu0 0.0
        %2514 = vmatpush.msra.mxu0 0.0
        %2515 = vmatpush.msra.mxu0 0.0
        %2516 = vmatpush.msra.mxu0 0.0
        %2517 = vmatpush.msra.mxu0 0.0
        %2518 = vmatpush.msra.mxu0 0.0
        %2519 = vmatpush.msra.mxu0 0.0
        %2520 = vmatpush.msra.mxu0 0.0
        %2521 = vmatpush.msra.mxu0 %v2502
        %2522 = vmatpush.msra.mxu0 %v2501
        %2523 = vmatmul.f32.gmra.mxu0 %v2505
        %v2524 = vpop.f32.mrf.mxu0
        %v2525 = vadd.f32 0.0, %v2524
        %2526 = vdwg.mxu0
        %v2527 = vadd.f32 %v2499, %v2525
        %s2528 = scalar_lea.vmem [#allocation8], 112
        %v2529 = vld [vmem:[%s2528] sm:$0xff]
        %v2530 = vld [vmem:[%s2528 + $0x8] sm:$0xff]
        %v2532 = vrot.slane %v2334, 6
        %v2533 = vsel %vm803, %v2532, 0
        %2535 = vmatpush.msra.mxu0 0.0
        %2536 = vmatpush.msra.mxu0 0.0
        %2537 = vmatpush.msra.mxu0 0.0
        %2538 = vmatpush.msra.mxu0 0.0
        %2539 = vmatpush.msra.mxu0 0.0
        %2540 = vmatpush.msra.mxu0 0.0
        %2541 = vmatpush.msra.mxu0 0.0
        %2542 = vmatpush.msra.mxu0 0.0
        %2543 = vmatpush.msra.mxu0 0.0
        %2544 = vmatpush.msra.mxu0 0.0
        %2545 = vmatpush.msra.mxu0 0.0
        %2546 = vmatpush.msra.mxu0 0.0
        %2547 = vmatpush.msra.mxu0 0.0
        %2548 = vmatpush.msra.mxu0 0.0
        %2549 = vmatpush.msra.mxu0 %v2530
        %2550 = vmatpush.msra.mxu0 %v2529
        %2551 = vmatmul.f32.gmra.mxu0 %v2533
        %v2552 = vpop.f32.mrf.mxu0
        %v2553 = vadd.f32 0.0, %v2552
        %2554 = vdwg.mxu0
        %v2555 = vadd.f32 %v2527, %v2553
        %s2556 = scalar_lea.vmem [#allocation8], 128
        %v2557 = vld [vmem:[%s2556] sm:$0xff]
        %v2558 = vld [vmem:[%s2556 + $0x8] sm:$0xff]
        %v2560 = vsel %vm803, %v2336, 0
        %2562 = vmatpush.msra.mxu0 0.0
        %2563 = vmatpush.msra.mxu0 0.0
        %2564 = vmatpush.msra.mxu0 0.0
        %2565 = vmatpush.msra.mxu0 0.0
        %2566 = vmatpush.msra.mxu0 0.0
        %2567 = vmatpush.msra.mxu0 0.0
        %2568 = vmatpush.msra.mxu0 0.0
        %2569 = vmatpush.msra.mxu0 0.0
        %2570 = vmatpush.msra.mxu0 0.0
        %2571 = vmatpush.msra.mxu0 0.0
        %2572 = vmatpush.msra.mxu0 0.0
        %2573 = vmatpush.msra.mxu0 0.0
        %2574 = vmatpush.msra.mxu0 0.0
        %2575 = vmatpush.msra.mxu0 0.0
        %2576 = vmatpush.msra.mxu0 %v2558
        %2577 = vmatpush.msra.mxu0 %v2557
        %2578 = vmatmul.f32.gmra.mxu0 %v2560
        %v2579 = vpop.f32.mrf.mxu0
        %v2580 = vadd.f32 0.0, %v2579
        %2581 = vdwg.mxu0
        %v2582 = vadd.f32 %v2555, %v2580
        %v2583 = vld [vmem:[%s5] sm:$0x1]
        %v2585 = vperm.slane %v2583, 0
        %v2587 = vadd.f32 %v2582, %v2585
        %2588 = vst [vmem:[%s288] sm:$0x3] %v2587
        %s2589 = sand.u32 %s162, 1
        %s2590 = scalar_lea.sflag [#allocation4], %s2589
        %s2591 = sand.u32 %s162, 1
        %s2592 = smul.addr %s2591, 2
        %s2593 = scalar_lea.vmem [#allocation9], %s2592
        // Predicated region
        $region57: #{tpu_custom_call.1} parent=43 // pred_check
          %p2594 = pneg %p172
        $region58: #{tpu_custom_call.1} parent=43 // pred_check_branch
          %2596 = sbr.rel (%p2594) target = $region60
        $region59: #{tpu_custom_call.1} parent=43 // pred_region
          %2598 = vsyncadd %s2590, 0
          %s2599 = smul.addr %s23, 2
          %s2600 = scalar_lea.hbm %s6, %s2599
          %s2602 = sshll.u32 %s2593, 4
          %s2603 = int_to_ptr.vmem [resolvable:$true] %s2602
          %s2604 = sshll.u32 %s2600, 4
          %s2605 = int_to_ptr.hbm [resolvable:$true] %s2604
          %2607 = dma.vmem_to_hbm [thread:$0]  %s2603, 32, %s2605, %s2590
        $region60: #{tpu_custom_call.1} parent=43 // pred_fallthru
          _
      $region44: #{tpu_custom_call.1} parent=5 // pred_fallthru
        _
      %p2608 = scmp.le.s32.totalorder 2, %s18
      // Predicated region
      $region61: #{tpu_custom_call.1} parent=5 // pred_check
        %p2609 = pneg %p2608
      $region62: #{tpu_custom_call.1} parent=5 // pred_check_branch
        %2611 = sbr.rel (%p2609) target = $region64
      $region63: #{tpu_custom_call.1} parent=5 // pred_region
        %s2612 = ssub.s32 %s18, 2
        // Predicated region
        $region65: #{tpu_custom_call.1} parent=63 // pred_check
          %p2613 = pneg %p178
        $region66: #{tpu_custom_call.1} parent=63 // pred_check_branch
          %2615 = sbr.rel (%p2613) target = $region68
        $region67: #{tpu_custom_call.1} parent=63 // pred_region
          %s2616 = sand.u32 %s163, 1
          %s2617 = scalar_lea.sflag [#allocation4], %s2616
          %s2618 = sand.u32 %s163, 1
          %s2619 = smul.addr %s2618, 2
          %s2620 = scalar_lea.vmem [#allocation9], %s2619
          %2622 = dma.done %s2617, 32
        $region68: #{tpu_custom_call.1} parent=63 // pred_fallthru
          _
      $region64: #{tpu_custom_call.1} parent=5 // pred_fallthru
        _
    $region6: #{tpu_custom_call.1} parent=1 // loop_footer
      %s22 = sadd.s32 1, %s18
    $region7: #{tpu_custom_call.1} parent=1 // loop_footer_branch
      %17 = sbr.rel target = $region3
    $region8: #{tpu_custom_call.1} parent=1 // loop_exit
      _
    %2623 = vsyncpa [#allocation3], 1
    %s2624 = scalar_lea.sflag [#allocation3], 1
    %2625 = vsyncpa %s2624, 1
    %2626 = vsyncpa [#allocation4], 1
    %s2627 = scalar_lea.sflag [#allocation4], 1
    %2628 = vsyncpa %s2627, 1
    %2629 = vsyncpa [#allocation5], 1
    %s2630 = scalar_lea.sflag [#allocation5], 1
    %2631 = vsyncpa %s2630, 1
    %2632 = vsyncpa [#allocation7], 1

</llo_original>
